<compile_context>
chip_gen: v7x
topology: tpu7x:2x2x1
jax: 0.10.0
libtpu: 0.0.40
codegen_flags: <defaults>
</compile_context>

<pallas_src>
import functools

import jax
import jax.numpy as jnp
from jax.experimental import pallas as pl
from jax.experimental.pallas import tpu as pltpu


def _quantize(v):
    # 8-bit quantization round-trip: round(x*255), clip like PIL 'L', /255.
    # TODO(synk): jnp.round is round-half-to-even; PIL's float->uint8 path can
    # differ by 1/255 at exact .5 boundaries (on top of the missing DCT loss).
    return jnp.clip(jnp.round(v * 255.0), 0.0, 255.0) * (1.0 / 255.0)


# ----------------------------------------------------------------------------
# In-kernel conv block: conv3x3(pad=1) + bias + ReLU [+q] [+ maxpool2 [+q]]
# ----------------------------------------------------------------------------
def _conv_block(x, w_ref, b_ref, pad_ref, col_ref, *, H, W, Cin, Cout,
                pool, quant_after_relu, quant_after_pool):
    """x: (H, W, Cin) value. Returns (H', W', Cout) value (VMEM resident)."""
    f32 = jnp.float32

    # Zero only the four halo strips; interior is fully overwritten below.
    zr = jnp.zeros((1, W + 2, Cin), f32)
    pad_ref[0:1, :, :] = zr
    pad_ref[H + 1:H + 2, :, :] = zr
    zc = jnp.zeros((H + 2, 1, Cin), f32)
    pad_ref[:, 0:1, :] = zc
    pad_ref[:, W + 1:W + 2, :] = zc
    pad_ref[1:H + 1, 1:W + 1, :] = x

    # im2col in VMEM: 9 tap writes, then ONE MXU contraction with the
    # host-flattened (9*Cin, Cout) weight (replaces 9 tiny K=Cin dots).
    for kh in range(3):
        for kw in range(3):
            t = kh * 3 + kw
            col_ref[:, t * Cin:(t + 1) * Cin] = (
                pad_ref[kh:kh + H, kw:kw + W, :].reshape(H * W, Cin))
    acc = jnp.dot(col_ref[...], w_ref[...], preferred_element_type=f32)

    # Fused VPU epilogue: bias + ReLU (+ optional 8-bit quantization).
    acc = jnp.maximum(acc + b_ref[...], 0.0)
    if quant_after_relu:
        acc = _quantize(acc)

    y = acc.reshape(H, W, Cout)
    if pool:
        # 2x2 max-pool, stride 2, on the VMEM-resident accumulator.
        y = y.reshape(H // 2, 2, W, Cout)
        y = jnp.maximum(y[:, 0], y[:, 1])
        y = y.reshape(H // 2, W // 2, 2, Cout)
        y = jnp.maximum(y[:, :, 0], y[:, :, 1])
        if quant_after_pool:
            y = _quantize(y)
    return y


# ----------------------------------------------------------------------------
# Single fused kernel: all conv blocks + flatten + classifier, one image/step
# ----------------------------------------------------------------------------
def _fused_forward_kernel(*refs, block_meta):
    nb = len(block_meta)
    pos = 0
    x_ref = refs[pos]; pos += 1
    conv_wb = []
    for _ in range(nb):
        conv_wb.append((refs[pos], refs[pos + 1])); pos += 2
    fw1_ref, fb1_ref, fw2_ref, fb2_ref = refs[pos:pos + 4]; pos += 4
    o_ref = refs[pos]; pos += 1
    blk_scr = []
    for _ in range(nb):
        blk_scr.append((refs[pos], refs[pos + 1])); pos += 2
    feat_ref = refs[pos]

    y = x_ref[0]                                    # (H, W, Cin) NHWC
    for bi, meta in enumerate(block_meta):
        w_ref, b_ref = conv_wb[bi]
        pad_ref, col_ref = blk_scr[bi]
        y = _conv_block(y, w_ref, b_ref, pad_ref, col_ref, **meta)

    # Flatten NHWC activation into a lane-dense (1, F) row vector with
    # lane-offset stores (no cross-tile reshape relayout); order matches the
    # NHWC-permuted classifier W1 rows.
    Hf, Wf, Cf = y.shape
    y2d = y.reshape(Hf * Wf, Cf)                    # leading-dim merge only
    for s in range(Hf * Wf):
        feat_ref[0:1, s * Cf:(s + 1) * Cf] = y2d[s:s + 1, :]

    # Classifier: Linear -> ReLU -> Linear, fully in VMEM.
    h = jnp.dot(feat_ref[...], fw1_ref[...], preferred_element_type=jnp.float32)
    h = jnp.maximum(h + fb1_ref[...], 0.0)
    out = jnp.dot(h, fw2_ref[...], preferred_element_type=jnp.float32)
    o_ref[0] = out + fb2_ref[...]


# ----------------------------------------------------------------------------
# VGG_encode forward (wrapper): one pallas_call for the whole network
# ----------------------------------------------------------------------------
def vgg_encode_forward(x_nchw, params, partition_index, QF):
    """params must be in kernel layout (see prepare_params)."""
    N = x_nchw.shape[0]
    # Single tiny layout transpose at the input; everything downstream is NHWC.
    x = jnp.transpose(x_nchw, (0, 2, 3, 1)).astype(jnp.float32)

    feats = params["features"]
    fw1, fb1, fw2, fb2 = params["classifier"]
    num_classes = fw2.shape[-1]

    raw_data_size = 0
    encoded_data_size = 0
    index = 0
    H, W, Cin = x.shape[1], x.shape[2], x.shape[3]

    block_meta = []
    conv_args = []
    i = 0
    while i < len(feats):
        assert feats[i][0] == "conv", "feature segments must start with a conv"
        _, w_col, b_row = feats[i]
        assert i + 1 < len(feats) and feats[i + 1][0] == "relu"
        Cout = w_col.shape[-1]
        has_pool = (i + 2 < len(feats)) and feats[i + 2][0] == "maxpool"

        quant_after_relu = False
        quant_after_pool = False

        def _partition(h, w, cout=Cout):
            nonlocal raw_data_size, encoded_data_size
            raw_data_size = N * cout * h * w * 4
            if QF != 100:
                # TODO(synk): real JPEG file size unavailable; 1 byte/pixel.
                encoded_data_size = N * cout * h * w
                return True
            # TODO(synk): lossless compress/decompress treated as identity.
            encoded_data_size = N * cout * h * w * 4
            return False

        if index == partition_index:              # partition right after ReLU
            quant_after_relu = _partition(H, W)
        index += 1
        if has_pool:
            if index == partition_index:          # partition right after MaxPool
                quant_after_pool = _partition(H // 2, W // 2)
            index += 1

        block_meta.append(dict(H=H, W=W, Cin=Cin, Cout=Cout, pool=has_pool,
                               quant_after_relu=quant_after_relu,
                               quant_after_pool=quant_after_pool))
        conv_args.extend([w_col, b_row])
        Cin = Cout
        if has_pool:
            H, W = H // 2, W // 2
        i += 3 if has_pool else 2

    # --- one fused pallas_call for the whole forward pass ---
    H0, W0, C0 = x.shape[1], x.shape[2], x.shape[3]
    in_specs = [pl.BlockSpec((1, H0, W0, C0), lambda n: (n, 0, 0, 0))]
    for a in conv_args + [fw1, fb1, fw2, fb2]:    # all weights/biases are 2-D
        in_specs.append(pl.BlockSpec(a.shape, lambda n: (0, 0)))

    scratch_shapes = []
    for meta in block_meta:
        h, w, cin = meta["H"], meta["W"], meta["Cin"]
        scratch_shapes.append(pltpu.VMEM((h + 2, w + 2, cin), jnp.float32))
        scratch_shapes.append(pltpu.VMEM((h * w, 9 * cin), jnp.float32))
    scratch_shapes.append(pltpu.VMEM((1, fw1.shape[0]), jnp.float32))

    kern = functools.partial(_fused_forward_kernel, block_meta=tuple(block_meta))

    out3 = pl.pallas_call(
        kern,
        out_shape=jax.ShapeDtypeStruct((N, 1, num_classes), jnp.float32),
        grid=(N,),
        in_specs=in_specs,
        out_specs=pl.BlockSpec((1, 1, num_classes), lambda n: (n, 0, 0)),
        scratch_shapes=scratch_shapes,
        compiler_params=pltpu.CompilerParams(
            dimension_semantics=("parallel",)),   # v7x: 2 TCs split the batch
    )(x, *conv_args, fw1, fb1, fw2, fb2)

    out = out3.reshape(N, num_classes)
    return out, raw_data_size, encoded_data_size


# ----------------------------------------------------------------------------
# Deterministic synthetic VGG parameters (PyTorch-equivalent layout) + prep
# ----------------------------------------------------------------------------
def init_params(key, cin=4, c1=8, c2=16, spatial=16, hidden=32, num_classes=10):
    """Conv weights HWIO, linear weights (in, out); classifier W1 rows are in
    NCHW-flatten order, exactly like torch's x.view(N, -1)."""
    k = jax.random.split(key, 8)

    def conv_init(kw, kb, ci, co):
        w = jax.random.normal(kw, (3, 3, ci, co), jnp.float32) * (2.0 / (9 * ci)) ** 0.5
        b = 0.01 * jax.random.normal(kb, (co,), jnp.float32)
        return w, b

    w1, b1 = conv_init(k[0], k[1], cin, c1)
    w2, b2 = conv_init(k[2], k[3], c1, c2)
    feat_hw = spatial // 4
    feat_dim = c2 * feat_hw * feat_hw

    def lin_init(kw, kb, fi, fo):
        w = jax.random.normal(kw, (fi, fo), jnp.float32) * (1.0 / fi) ** 0.5
        b = 0.01 * jax.random.normal(kb, (fo,), jnp.float32)
        return w, b

    lw1, lb1 = lin_init(k[4], k[5], feat_dim, hidden)
    lw2, lb2 = lin_init(k[6], k[7], hidden, num_classes)

    features = [
        ("conv", w1, b1), ("relu",), ("maxpool",),
        ("conv", w2, b2), ("relu",), ("maxpool",),
    ]
    classifier = (lw1, lb1, lw2, lb2)
    return {"features": features, "classifier": classifier,
            "feature_shape": (c2, feat_hw, feat_hw)}   # (C, H, W) after features


def prepare_params(params):
    """One-time host-side conversion to kernel layouts:
      * conv HWIO (3,3,Cin,Cout) -> im2col (9*Cin, Cout), bias -> (1, Cout)
      * classifier W1 rows permuted NCHW-flatten -> NHWC-flatten order,
        biases -> (1, ...)."""
    feats = []
    for layer in params["features"]:
        if layer[0] == "conv":
            w, b = layer[1], layer[2]
            cin, cout = w.shape[2], w.shape[3]
            feats.append(("conv", w.reshape(9 * cin, cout), b.reshape(1, cout)))
        else:
            feats.append(layer)
    lw1, lb1, lw2, lb2 = params["classifier"]
    C, Hf, Wf = params["feature_shape"]
    hidden = lw1.shape[1]
    lw1_nhwc = (lw1.reshape(C, Hf, Wf, hidden)
                   .transpose(1, 2, 0, 3)
                   .reshape(Hf * Wf * C, hidden))
    classifier = (lw1_nhwc, lb1.reshape(1, -1), lw2, lb2.reshape(1, -1))
    return {"features": feats, "classifier": classifier}


# ----------------------------------------------------------------------------
# Pure-JAX reference (uses the RAW PyTorch-layout params) for validation
# ----------------------------------------------------------------------------
def reference_forward(x_nchw, raw_params, partition_index, QF):
    x = jnp.transpose(x_nchw, (0, 2, 3, 1)).astype(jnp.float32)
    index = 0
    for layer in raw_params["features"]:
        if layer[0] == "conv":
            w, b = layer[1], layer[2]
            x = jax.lax.conv_general_dilated(
                x, w, window_strides=(1, 1), padding="SAME",
                dimension_numbers=("NHWC", "HWIO", "NHWC")) + b
        elif layer[0] == "relu":
            x = jnp.maximum(x, 0.0)
            if index == partition_index and QF != 100:
                x = _quantize(x)
            index += 1
        elif layer[0] == "maxpool":
            n, h, w_, c = x.shape
            x = x.reshape(n, h // 2, 2, w_ // 2, 2, c).max(axis=(2, 4))
            if index == partition_index and QF != 100:
                x = _quantize(x)
            index += 1
    feat = jnp.transpose(x, (0, 3, 1, 2)).reshape(x.shape[0], -1)  # NCHW flatten
    lw1, lb1, lw2, lb2 = raw_params["classifier"]
    h = jnp.maximum(feat @ lw1 + lb1, 0.0)
    return h @ lw2 + lb2


if __name__ == "__main__":
    key = jax.random.PRNGKey(0)
    kp, kx = jax.random.split(key)
    raw_params = init_params(kp)
    params = prepare_params(raw_params)

    # NCHW input, same convention as the PyTorch module.
    x = jax.random.normal(kx, (2, 4, 16, 16), jnp.float32)

    # partition after the first MaxPool (index==1), QF != 100 -> quantize path.
    out, raw_size, enc_size = vgg_encode_forward(x, params,
                                                 partition_index=1, QF=80)
    out = jax.block_until_ready(out)

    assert out.shape == (2, 10)
    assert raw_size == 2 * 8 * 8 * 8 * 4

    ref = jax.block_until_ready(reference_forward(x, raw_params,
                                                  partition_index=1, QF=80))
    assert jnp.allclose(out, ref, atol=2e-2, rtol=2e-2), (
        "kernel output mismatch vs pure-JAX reference")

    print("KERNEL_OK")
</pallas_src>

<mosaic_0001>
module attributes {stable_mosaic.version = 11 : i64} {
  func.func @_fused_forward_kernel(%arg0: i32, %arg1: memref<1x16x16x4xf32, #tpu.memory_space<vmem>>, %arg2: memref<36x8xf32, #tpu.memory_space<vmem>>, %arg3: memref<1x8xf32, #tpu.memory_space<vmem>>, %arg4: memref<72x16xf32, #tpu.memory_space<vmem>>, %arg5: memref<1x16xf32, #tpu.memory_space<vmem>>, %arg6: memref<256x32xf32, #tpu.memory_space<vmem>>, %arg7: memref<1x32xf32, #tpu.memory_space<vmem>>, %arg8: memref<32x10xf32, #tpu.memory_space<vmem>>, %arg9: memref<1x10xf32, #tpu.memory_space<vmem>>, %arg10: memref<1x1x10xf32, #tpu.memory_space<vmem>>, %arg11: memref<18x18x4xf32, #tpu.memory_space<vmem>>, %arg12: memref<256x36xf32, #tpu.memory_space<vmem>>, %arg13: memref<10x10x8xf32, #tpu.memory_space<vmem>>, %arg14: memref<64x72xf32, #tpu.memory_space<vmem>>, %arg15: memref<1x256xf32, #tpu.memory_space<vmem>>) attributes {dimension_semantics = [#tpu.dimension_semantics<parallel>], iteration_bounds = array<i64: 2>, scalar_prefetch = 0 : i64, scratch_operands = 5 : i64, tpu.core_type = #tpu.core_type<tc>, window_params = [{transform_indices = @transform_0, window_bounds = array<i64: 1, 16, 16, 4>}, {pipeline_mode = #tpu.pipeline_mode<synchronous>, transform_indices = @transform_1, window_bounds = array<i64: 36, 8>}, {pipeline_mode = #tpu.pipeline_mode<synchronous>, transform_indices = @transform_2, window_bounds = array<i64: 1, 8>}, {pipeline_mode = #tpu.pipeline_mode<synchronous>, transform_indices = @transform_3, window_bounds = array<i64: 72, 16>}, {pipeline_mode = #tpu.pipeline_mode<synchronous>, transform_indices = @transform_4, window_bounds = array<i64: 1, 16>}, {pipeline_mode = #tpu.pipeline_mode<synchronous>, transform_indices = @transform_5, window_bounds = array<i64: 256, 32>}, {pipeline_mode = #tpu.pipeline_mode<synchronous>, transform_indices = @transform_6, window_bounds = array<i64: 1, 32>}, {pipeline_mode = #tpu.pipeline_mode<synchronous>, transform_indices = @transform_7, window_bounds = array<i64: 32, 10>}, {pipeline_mode = #tpu.pipeline_mode<synchronous>, transform_indices = @transform_8, window_bounds = array<i64: 1, 10>}, {transform_indices = @transform_9, window_bounds = array<i64: 1, 1, 10>}]} {
    %c0 = arith.constant 0 : index
    %c0_0 = arith.constant 0 : index
    %c0_1 = arith.constant 0 : index
    %c0_2 = arith.constant 0 : index
    %0 = vector.load %arg1[%c0, %c0_0, %c0_1, %c0_2] : memref<1x16x16x4xf32, #tpu.memory_space<vmem>>, vector<1x16x16x4xf32>
    %1 = vector.shape_cast %0 : vector<1x16x16x4xf32> to vector<16x16x4xf32>
    %cst = arith.constant 0.000000e+00 : f32
    %2 = vector.broadcast %cst : f32 to vector<1x18x4xf32>
    %c0_3 = arith.constant 0 : index
    %c0_4 = arith.constant 0 : index
    %c0_5 = arith.constant 0 : index
    %3 = vector.load %arg11[%c0_3, %c0_4, %c0_5] : memref<18x18x4xf32, #tpu.memory_space<vmem>>, vector<1x18x4xf32>
    tpu.vector_store %arg11[%c0_3, %c0_4, %c0_5], %2 {strides = array<i32>} : memref<18x18x4xf32, #tpu.memory_space<vmem>>, vector<1x18x4xf32>,
    %c17 = arith.constant 17 : index
    %c0_6 = arith.constant 0 : index
    %c0_7 = arith.constant 0 : index
    %4 = vector.load %arg11[%c17, %c0_6, %c0_7] : memref<18x18x4xf32, #tpu.memory_space<vmem>>, vector<1x18x4xf32>
    tpu.vector_store %arg11[%c17, %c0_6, %c0_7], %2 {strides = array<i32>} : memref<18x18x4xf32, #tpu.memory_space<vmem>>, vector<1x18x4xf32>,
    %cst_8 = arith.constant 0.000000e+00 : f32
    %5 = vector.broadcast %cst_8 : f32 to vector<18x1x4xf32>
    %c0_9 = arith.constant 0 : index
    %c0_10 = arith.constant 0 : index
    %c0_11 = arith.constant 0 : index
    %6 = vector.load %arg11[%c0_9, %c0_10, %c0_11] : memref<18x18x4xf32, #tpu.memory_space<vmem>>, vector<18x1x4xf32>
    tpu.vector_store %arg11[%c0_9, %c0_10, %c0_11], %5 {strides = array<i32>} : memref<18x18x4xf32, #tpu.memory_space<vmem>>, vector<18x1x4xf32>,
    %c0_12 = arith.constant 0 : index
    %c17_13 = arith.constant 17 : index
    %c0_14 = arith.constant 0 : index
    %7 = vector.load %arg11[%c0_12, %c17_13, %c0_14] : memref<18x18x4xf32, #tpu.memory_space<vmem>>, vector<18x1x4xf32>
    tpu.vector_store %arg11[%c0_12, %c17_13, %c0_14], %5 {strides = array<i32>} : memref<18x18x4xf32, #tpu.memory_space<vmem>>, vector<18x1x4xf32>,
    %c1 = arith.constant 1 : index
    %c1_15 = arith.constant 1 : index
    %c0_16 = arith.constant 0 : index
    %8 = vector.load %arg11[%c1, %c1_15, %c0_16] : memref<18x18x4xf32, #tpu.memory_space<vmem>>, vector<16x16x4xf32>
    tpu.vector_store %arg11[%c1, %c1_15, %c0_16], %1 {strides = array<i32>} : memref<18x18x4xf32, #tpu.memory_space<vmem>>, vector<16x16x4xf32>,
    %c0_17 = arith.constant 0 : index
    %c0_18 = arith.constant 0 : index
    %c0_19 = arith.constant 0 : index
    %9 = vector.load %arg11[%c0_17, %c0_18, %c0_19] : memref<18x18x4xf32, #tpu.memory_space<vmem>>, vector<16x16x4xf32>
    %10 = vector.shape_cast %9 : vector<16x16x4xf32> to vector<256x4xf32>
    %c0_20 = arith.constant 0 : index
    %c0_21 = arith.constant 0 : index
    %11 = vector.load %arg12[%c0_20, %c0_21] : memref<256x36xf32, #tpu.memory_space<vmem>>, vector<256x4xf32>
    tpu.vector_store %arg12[%c0_20, %c0_21], %10 {strides = array<i32>} : memref<256x36xf32, #tpu.memory_space<vmem>>, vector<256x4xf32>,
    %c0_22 = arith.constant 0 : index
    %c1_23 = arith.constant 1 : index
    %c0_24 = arith.constant 0 : index
    %12 = vector.load %arg11[%c0_22, %c1_23, %c0_24] : memref<18x18x4xf32, #tpu.memory_space<vmem>>, vector<16x16x4xf32>
    %13 = vector.shape_cast %12 : vector<16x16x4xf32> to vector<256x4xf32>
    %c0_25 = arith.constant 0 : index
    %c4 = arith.constant 4 : index
    %14 = vector.load %arg12[%c0_25, %c4] : memref<256x36xf32, #tpu.memory_space<vmem>>, vector<256x4xf32>
    tpu.vector_store %arg12[%c0_25, %c4], %13 {strides = array<i32>} : memref<256x36xf32, #tpu.memory_space<vmem>>, vector<256x4xf32>,
    %c0_26 = arith.constant 0 : index
    %c2 = arith.constant 2 : index
    %c0_27 = arith.constant 0 : index
    %15 = vector.load %arg11[%c0_26, %c2, %c0_27] : memref<18x18x4xf32, #tpu.memory_space<vmem>>, vector<16x16x4xf32>
    %16 = vector.shape_cast %15 : vector<16x16x4xf32> to vector<256x4xf32>
    %c0_28 = arith.constant 0 : index
    %c8 = arith.constant 8 : index
    %17 = vector.load %arg12[%c0_28, %c8] : memref<256x36xf32, #tpu.memory_space<vmem>>, vector<256x4xf32>
    tpu.vector_store %arg12[%c0_28, %c8], %16 {strides = array<i32>} : memref<256x36xf32, #tpu.memory_space<vmem>>, vector<256x4xf32>,
    %c1_29 = arith.constant 1 : index
    %c0_30 = arith.constant 0 : index
    %c0_31 = arith.constant 0 : index
    %18 = vector.load %arg11[%c1_29, %c0_30, %c0_31] : memref<18x18x4xf32, #tpu.memory_space<vmem>>, vector<16x16x4xf32>
    %19 = vector.shape_cast %18 : vector<16x16x4xf32> to vector<256x4xf32>
    %c0_32 = arith.constant 0 : index
    %c12 = arith.constant 12 : index
    %20 = vector.load %arg12[%c0_32, %c12] : memref<256x36xf32, #tpu.memory_space<vmem>>, vector<256x4xf32>
    tpu.vector_store %arg12[%c0_32, %c12], %19 {strides = array<i32>} : memref<256x36xf32, #tpu.memory_space<vmem>>, vector<256x4xf32>,
    %c1_33 = arith.constant 1 : index
    %c1_34 = arith.constant 1 : index
    %c0_35 = arith.constant 0 : index
    %21 = vector.load %arg11[%c1_33, %c1_34, %c0_35] : memref<18x18x4xf32, #tpu.memory_space<vmem>>, vector<16x16x4xf32>
    %22 = vector.shape_cast %21 : vector<16x16x4xf32> to vector<256x4xf32>
    %c0_36 = arith.constant 0 : index
    %c16 = arith.constant 16 : index
    %23 = vector.load %arg12[%c0_36, %c16] : memref<256x36xf32, #tpu.memory_space<vmem>>, vector<256x4xf32>
    tpu.vector_store %arg12[%c0_36, %c16], %22 {strides = array<i32>} : memref<256x36xf32, #tpu.memory_space<vmem>>, vector<256x4xf32>,
    %c1_37 = arith.constant 1 : index
    %c2_38 = arith.constant 2 : index
    %c0_39 = arith.constant 0 : index
    %24 = vector.load %arg11[%c1_37, %c2_38, %c0_39] : memref<18x18x4xf32, #tpu.memory_space<vmem>>, vector<16x16x4xf32>
    %25 = vector.shape_cast %24 : vector<16x16x4xf32> to vector<256x4xf32>
    %c0_40 = arith.constant 0 : index
    %c20 = arith.constant 20 : index
    %26 = vector.load %arg12[%c0_40, %c20] : memref<256x36xf32, #tpu.memory_space<vmem>>, vector<256x4xf32>
    tpu.vector_store %arg12[%c0_40, %c20], %25 {strides = array<i32>} : memref<256x36xf32, #tpu.memory_space<vmem>>, vector<256x4xf32>,
    %c2_41 = arith.constant 2 : index
    %c0_42 = arith.constant 0 : index
    %c0_43 = arith.constant 0 : index
    %27 = vector.load %arg11[%c2_41, %c0_42, %c0_43] : memref<18x18x4xf32, #tpu.memory_space<vmem>>, vector<16x16x4xf32>
    %28 = vector.shape_cast %27 : vector<16x16x4xf32> to vector<256x4xf32>
    %c0_44 = arith.constant 0 : index
    %c24 = arith.constant 24 : index
    %29 = vector.load %arg12[%c0_44, %c24] : memref<256x36xf32, #tpu.memory_space<vmem>>, vector<256x4xf32>
    tpu.vector_store %arg12[%c0_44, %c24], %28 {strides = array<i32>} : memref<256x36xf32, #tpu.memory_space<vmem>>, vector<256x4xf32>,
    %c2_45 = arith.constant 2 : index
    %c1_46 = arith.constant 1 : index
    %c0_47 = arith.constant 0 : index
    %30 = vector.load %arg11[%c2_45, %c1_46, %c0_47] : memref<18x18x4xf32, #tpu.memory_space<vmem>>, vector<16x16x4xf32>
    %31 = vector.shape_cast %30 : vector<16x16x4xf32> to vector<256x4xf32>
    %c0_48 = arith.constant 0 : index
    %c28 = arith.constant 28 : index
    %32 = vector.load %arg12[%c0_48, %c28] : memref<256x36xf32, #tpu.memory_space<vmem>>, vector<256x4xf32>
    tpu.vector_store %arg12[%c0_48, %c28], %31 {strides = array<i32>} : memref<256x36xf32, #tpu.memory_space<vmem>>, vector<256x4xf32>,
    %c2_49 = arith.constant 2 : index
    %c2_50 = arith.constant 2 : index
    %c0_51 = arith.constant 0 : index
    %33 = vector.load %arg11[%c2_49, %c2_50, %c0_51] : memref<18x18x4xf32, #tpu.memory_space<vmem>>, vector<16x16x4xf32>
    %34 = vector.shape_cast %33 : vector<16x16x4xf32> to vector<256x4xf32>
    %c0_52 = arith.constant 0 : index
    %c32 = arith.constant 32 : index
    %35 = vector.load %arg12[%c0_52, %c32] : memref<256x36xf32, #tpu.memory_space<vmem>>, vector<256x4xf32>
    tpu.vector_store %arg12[%c0_52, %c32], %34 {strides = array<i32>} : memref<256x36xf32, #tpu.memory_space<vmem>>, vector<256x4xf32>,
    %c0_53 = arith.constant 0 : index
    %c0_54 = arith.constant 0 : index
    %36 = vector.load %arg12[%c0_53, %c0_54] : memref<256x36xf32, #tpu.memory_space<vmem>>, vector<256x36xf32>
    %c0_55 = arith.constant 0 : index
    %c0_56 = arith.constant 0 : index
    %37 = vector.load %arg2[%c0_55, %c0_56] : memref<36x8xf32, #tpu.memory_space<vmem>>, vector<36x8xf32>
    %cst_57 = arith.constant dense<0.000000e+00> : vector<256x8xf32>
    %38 = tpu.matmul %36, %37, %cst_57 {dimension_numbers = #tpu.dot_dimension_numbers<[1], [0], [0], [1], [0, 0, 1, 1], [], []>} : vector<256x36xf32>, vector<36x8xf32>, vector<256x8xf32> -> vector<256x8xf32>
    %c0_58 = arith.constant 0 : index
    %c0_59 = arith.constant 0 : index
    %39 = vector.load %arg3[%c0_58, %c0_59] : memref<1x8xf32, #tpu.memory_space<vmem>>, vector<1x8xf32>
    %40 = vector.broadcast %39 : vector<1x8xf32> to vector<256x8xf32>
    %41 = arith.addf %38, %40 : vector<256x8xf32>
    %cst_60 = arith.constant 0.000000e+00 : f32
    %42 = vector.broadcast %cst_60 : f32 to vector<256x8xf32>
    %43 = arith.maximumf %41, %42 : vector<256x8xf32>
    %44 = vector.shape_cast %43 : vector<256x8xf32> to vector<16x16x8xf32>
    %45 = vector.shape_cast %44 : vector<16x16x8xf32> to vector<8x2x16x8xf32>
    %46 = vector.extract_strided_slice %45 {offsets = [0, 0, 0, 0], sizes = [8, 1, 16, 8], strides = [1, 1, 1, 1]} : vector<8x2x16x8xf32> to vector<8x1x16x8xf32>
    %47 = vector.shape_cast %46 : vector<8x1x16x8xf32> to vector<8x16x8xf32>
    %48 = vector.extract_strided_slice %45 {offsets = [0, 1, 0, 0], sizes = [8, 1, 16, 8], strides = [1, 1, 1, 1]} : vector<8x2x16x8xf32> to vector<8x1x16x8xf32>
    %49 = vector.shape_cast %48 : vector<8x1x16x8xf32> to vector<8x16x8xf32>
    %50 = arith.maximumf %47, %49 : vector<8x16x8xf32>
    %51 = vector.shape_cast %50 : vector<8x16x8xf32> to vector<8x8x2x8xf32>
    %52 = vector.extract_strided_slice %51 {offsets = [0, 0, 0, 0], sizes = [8, 8, 1, 8], strides = [1, 1, 1, 1]} : vector<8x8x2x8xf32> to vector<8x8x1x8xf32>
    %53 = vector.shape_cast %52 : vector<8x8x1x8xf32> to vector<8x8x8xf32>
    %54 = vector.extract_strided_slice %51 {offsets = [0, 0, 1, 0], sizes = [8, 8, 1, 8], strides = [1, 1, 1, 1]} : vector<8x8x2x8xf32> to vector<8x8x1x8xf32>
    %55 = vector.shape_cast %54 : vector<8x8x1x8xf32> to vector<8x8x8xf32>
    %56 = arith.maximumf %53, %55 : vector<8x8x8xf32>
    %cst_61 = arith.constant 2.550000e+02 : f32
    %57 = vector.broadcast %cst_61 : f32 to vector<8x8x8xf32>
    %58 = arith.mulf %56, %57 : vector<8x8x8xf32>
    %59 = math.roundeven %58 : vector<8x8x8xf32>
    %cst_62 = arith.constant 0.000000e+00 : f32
    %cst_63 = arith.constant 2.550000e+02 : f32
    %60 = vector.broadcast %cst_62 : f32 to vector<8x8x8xf32>
    %61 = arith.maximumf %60, %59 : vector<8x8x8xf32>
    %62 = vector.broadcast %cst_63 : f32 to vector<8x8x8xf32>
    %63 = arith.minimumf %62, %61 : vector<8x8x8xf32>
    %cst_64 = arith.constant 0.00392156886 : f32
    %64 = vector.broadcast %cst_64 : f32 to vector<8x8x8xf32>
    %65 = arith.mulf %63, %64 : vector<8x8x8xf32>
    %cst_65 = arith.constant 0.000000e+00 : f32
    %66 = vector.broadcast %cst_65 : f32 to vector<1x10x8xf32>
    %c0_66 = arith.constant 0 : index
    %c0_67 = arith.constant 0 : index
    %c0_68 = arith.constant 0 : index
    %67 = vector.load %arg13[%c0_66, %c0_67, %c0_68] : memref<10x10x8xf32, #tpu.memory_space<vmem>>, vector<1x10x8xf32>
    tpu.vector_store %arg13[%c0_66, %c0_67, %c0_68], %66 {strides = array<i32>} : memref<10x10x8xf32, #tpu.memory_space<vmem>>, vector<1x10x8xf32>,
    %c9 = arith.constant 9 : index
    %c0_69 = arith.constant 0 : index
    %c0_70 = arith.constant 0 : index
    %68 = vector.load %arg13[%c9, %c0_69, %c0_70] : memref<10x10x8xf32, #tpu.memory_space<vmem>>, vector<1x10x8xf32>
    tpu.vector_store %arg13[%c9, %c0_69, %c0_70], %66 {strides = array<i32>} : memref<10x10x8xf32, #tpu.memory_space<vmem>>, vector<1x10x8xf32>,
    %cst_71 = arith.constant 0.000000e+00 : f32
    %69 = vector.broadcast %cst_71 : f32 to vector<10x1x8xf32>
    %c0_72 = arith.constant 0 : index
    %c0_73 = arith.constant 0 : index
    %c0_74 = arith.constant 0 : index
    %70 = vector.load %arg13[%c0_72, %c0_73, %c0_74] : memref<10x10x8xf32, #tpu.memory_space<vmem>>, vector<10x1x8xf32>
    tpu.vector_store %arg13[%c0_72, %c0_73, %c0_74], %69 {strides = array<i32>} : memref<10x10x8xf32, #tpu.memory_space<vmem>>, vector<10x1x8xf32>,
    %c0_75 = arith.constant 0 : index
    %c9_76 = arith.constant 9 : index
    %c0_77 = arith.constant 0 : index
    %71 = vector.load %arg13[%c0_75, %c9_76, %c0_77] : memref<10x10x8xf32, #tpu.memory_space<vmem>>, vector<10x1x8xf32>
    tpu.vector_store %arg13[%c0_75, %c9_76, %c0_77], %69 {strides = array<i32>} : memref<10x10x8xf32, #tpu.memory_space<vmem>>, vector<10x1x8xf32>,
    %c1_78 = arith.constant 1 : index
    %c1_79 = arith.constant 1 : index
    %c0_80 = arith.constant 0 : index
    %72 = vector.load %arg13[%c1_78, %c1_79, %c0_80] : memref<10x10x8xf32, #tpu.memory_space<vmem>>, vector<8x8x8xf32>
    tpu.vector_store %arg13[%c1_78, %c1_79, %c0_80], %65 {strides = array<i32>} : memref<10x10x8xf32, #tpu.memory_space<vmem>>, vector<8x8x8xf32>,
    %c0_81 = arith.constant 0 : index
    %c0_82 = arith.constant 0 : index
    %c0_83 = arith.constant 0 : index
    %73 = vector.load %arg13[%c0_81, %c0_82, %c0_83] : memref<10x10x8xf32, #tpu.memory_space<vmem>>, vector<8x8x8xf32>
    %74 = vector.shape_cast %73 : vector<8x8x8xf32> to vector<64x8xf32>
    %c0_84 = arith.constant 0 : index
    %c0_85 = arith.constant 0 : index
    %75 = vector.load %arg14[%c0_84, %c0_85] : memref<64x72xf32, #tpu.memory_space<vmem>>, vector<64x8xf32>
    tpu.vector_store %arg14[%c0_84, %c0_85], %74 {strides = array<i32>} : memref<64x72xf32, #tpu.memory_space<vmem>>, vector<64x8xf32>,
    %c0_86 = arith.constant 0 : index
    %c1_87 = arith.constant 1 : index
    %c0_88 = arith.constant 0 : index
    %76 = vector.load %arg13[%c0_86, %c1_87, %c0_88] : memref<10x10x8xf32, #tpu.memory_space<vmem>>, vector<8x8x8xf32>
    %77 = vector.shape_cast %76 : vector<8x8x8xf32> to vector<64x8xf32>
    %c0_89 = arith.constant 0 : index
    %c8_90 = arith.constant 8 : index
    %78 = vector.load %arg14[%c0_89, %c8_90] : memref<64x72xf32, #tpu.memory_space<vmem>>, vector<64x8xf32>
    tpu.vector_store %arg14[%c0_89, %c8_90], %77 {strides = array<i32>} : memref<64x72xf32, #tpu.memory_space<vmem>>, vector<64x8xf32>,
    %c0_91 = arith.constant 0 : index
    %c2_92 = arith.constant 2 : index
    %c0_93 = arith.constant 0 : index
    %79 = vector.load %arg13[%c0_91, %c2_92, %c0_93] : memref<10x10x8xf32, #tpu.memory_space<vmem>>, vector<8x8x8xf32>
    %80 = vector.shape_cast %79 : vector<8x8x8xf32> to vector<64x8xf32>
    %c0_94 = arith.constant 0 : index
    %c16_95 = arith.constant 16 : index
    %81 = vector.load %arg14[%c0_94, %c16_95] : memref<64x72xf32, #tpu.memory_space<vmem>>, vector<64x8xf32>
    tpu.vector_store %arg14[%c0_94, %c16_95], %80 {strides = array<i32>} : memref<64x72xf32, #tpu.memory_space<vmem>>, vector<64x8xf32>,
    %c1_96 = arith.constant 1 : index
    %c0_97 = arith.constant 0 : index
    %c0_98 = arith.constant 0 : index
    %82 = vector.load %arg13[%c1_96, %c0_97, %c0_98] : memref<10x10x8xf32, #tpu.memory_space<vmem>>, vector<8x8x8xf32>
    %83 = vector.shape_cast %82 : vector<8x8x8xf32> to vector<64x8xf32>
    %c0_99 = arith.constant 0 : index
    %c24_100 = arith.constant 24 : index
    %84 = vector.load %arg14[%c0_99, %c24_100] : memref<64x72xf32, #tpu.memory_space<vmem>>, vector<64x8xf32>
    tpu.vector_store %arg14[%c0_99, %c24_100], %83 {strides = array<i32>} : memref<64x72xf32, #tpu.memory_space<vmem>>, vector<64x8xf32>,
    %c1_101 = arith.constant 1 : index
    %c1_102 = arith.constant 1 : index
    %c0_103 = arith.constant 0 : index
    %85 = vector.load %arg13[%c1_101, %c1_102, %c0_103] : memref<10x10x8xf32, #tpu.memory_space<vmem>>, vector<8x8x8xf32>
    %86 = vector.shape_cast %85 : vector<8x8x8xf32> to vector<64x8xf32>
    %c0_104 = arith.constant 0 : index
    %c32_105 = arith.constant 32 : index
    %87 = vector.load %arg14[%c0_104, %c32_105] : memref<64x72xf32, #tpu.memory_space<vmem>>, vector<64x8xf32>
    tpu.vector_store %arg14[%c0_104, %c32_105], %86 {strides = array<i32>} : memref<64x72xf32, #tpu.memory_space<vmem>>, vector<64x8xf32>,
    %c1_106 = arith.constant 1 : index
    %c2_107 = arith.constant 2 : index
    %c0_108 = arith.constant 0 : index
    %88 = vector.load %arg13[%c1_106, %c2_107, %c0_108] : memref<10x10x8xf32, #tpu.memory_space<vmem>>, vector<8x8x8xf32>
    %89 = vector.shape_cast %88 : vector<8x8x8xf32> to vector<64x8xf32>
    %c0_109 = arith.constant 0 : index
    %c40 = arith.constant 40 : index
    %90 = vector.load %arg14[%c0_109, %c40] : memref<64x72xf32, #tpu.memory_space<vmem>>, vector<64x8xf32>
    tpu.vector_store %arg14[%c0_109, %c40], %89 {strides = array<i32>} : memref<64x72xf32, #tpu.memory_space<vmem>>, vector<64x8xf32>,
    %c2_110 = arith.constant 2 : index
    %c0_111 = arith.constant 0 : index
    %c0_112 = arith.constant 0 : index
    %91 = vector.load %arg13[%c2_110, %c0_111, %c0_112] : memref<10x10x8xf32, #tpu.memory_space<vmem>>, vector<8x8x8xf32>
    %92 = vector.shape_cast %91 : vector<8x8x8xf32> to vector<64x8xf32>
    %c0_113 = arith.constant 0 : index
    %c48 = arith.constant 48 : index
    %93 = vector.load %arg14[%c0_113, %c48] : memref<64x72xf32, #tpu.memory_space<vmem>>, vector<64x8xf32>
    tpu.vector_store %arg14[%c0_113, %c48], %92 {strides = array<i32>} : memref<64x72xf32, #tpu.memory_space<vmem>>, vector<64x8xf32>,
    %c2_114 = arith.constant 2 : index
    %c1_115 = arith.constant 1 : index
    %c0_116 = arith.constant 0 : index
    %94 = vector.load %arg13[%c2_114, %c1_115, %c0_116] : memref<10x10x8xf32, #tpu.memory_space<vmem>>, vector<8x8x8xf32>
    %95 = vector.shape_cast %94 : vector<8x8x8xf32> to vector<64x8xf32>
    %c0_117 = arith.constant 0 : index
    %c56 = arith.constant 56 : index
    %96 = vector.load %arg14[%c0_117, %c56] : memref<64x72xf32, #tpu.memory_space<vmem>>, vector<64x8xf32>
    tpu.vector_store %arg14[%c0_117, %c56], %95 {strides = array<i32>} : memref<64x72xf32, #tpu.memory_space<vmem>>, vector<64x8xf32>,
    %c2_118 = arith.constant 2 : index
    %c2_119 = arith.constant 2 : index
    %c0_120 = arith.constant 0 : index
    %97 = vector.load %arg13[%c2_118, %c2_119, %c0_120] : memref<10x10x8xf32, #tpu.memory_space<vmem>>, vector<8x8x8xf32>
    %98 = vector.shape_cast %97 : vector<8x8x8xf32> to vector<64x8xf32>
    %c0_121 = arith.constant 0 : index
    %c64 = arith.constant 64 : index
    %99 = vector.load %arg14[%c0_121, %c64] : memref<64x72xf32, #tpu.memory_space<vmem>>, vector<64x8xf32>
    tpu.vector_store %arg14[%c0_121, %c64], %98 {strides = array<i32>} : memref<64x72xf32, #tpu.memory_space<vmem>>, vector<64x8xf32>,
    %c0_122 = arith.constant 0 : index
    %c0_123 = arith.constant 0 : index
    %100 = vector.load %arg14[%c0_122, %c0_123] : memref<64x72xf32, #tpu.memory_space<vmem>>, vector<64x72xf32>
    %c0_124 = arith.constant 0 : index
    %c0_125 = arith.constant 0 : index
    %101 = vector.load %arg4[%c0_124, %c0_125] : memref<72x16xf32, #tpu.memory_space<vmem>>, vector<72x16xf32>
    %cst_126 = arith.constant dense<0.000000e+00> : vector<64x16xf32>
    %102 = tpu.matmul %100, %101, %cst_126 {dimension_numbers = #tpu.dot_dimension_numbers<[1], [0], [0], [1], [0, 0, 1, 1], [], []>} : vector<64x72xf32>, vector<72x16xf32>, vector<64x16xf32> -> vector<64x16xf32>
    %c0_127 = arith.constant 0 : index
    %c0_128 = arith.constant 0 : index
    %103 = vector.load %arg5[%c0_127, %c0_128] : memref<1x16xf32, #tpu.memory_space<vmem>>, vector<1x16xf32>
    %104 = vector.broadcast %103 : vector<1x16xf32> to vector<64x16xf32>
    %105 = arith.addf %102, %104 : vector<64x16xf32>
    %cst_129 = arith.constant 0.000000e+00 : f32
    %106 = vector.broadcast %cst_129 : f32 to vector<64x16xf32>
    %107 = arith.maximumf %105, %106 : vector<64x16xf32>
    %108 = vector.shape_cast %107 : vector<64x16xf32> to vector<8x8x16xf32>
    %109 = vector.shape_cast %108 : vector<8x8x16xf32> to vector<4x2x8x16xf32>
    %110 = vector.extract_strided_slice %109 {offsets = [0, 0, 0, 0], sizes = [4, 1, 8, 16], strides = [1, 1, 1, 1]} : vector<4x2x8x16xf32> to vector<4x1x8x16xf32>
    %111 = vector.shape_cast %110 : vector<4x1x8x16xf32> to vector<4x8x16xf32>
    %112 = vector.extract_strided_slice %109 {offsets = [0, 1, 0, 0], sizes = [4, 1, 8, 16], strides = [1, 1, 1, 1]} : vector<4x2x8x16xf32> to vector<4x1x8x16xf32>
    %113 = vector.shape_cast %112 : vector<4x1x8x16xf32> to vector<4x8x16xf32>
    %114 = arith.maximumf %111, %113 : vector<4x8x16xf32>
    %115 = vector.shape_cast %114 : vector<4x8x16xf32> to vector<4x4x2x16xf32>
    %116 = vector.extract_strided_slice %115 {offsets = [0, 0, 0, 0], sizes = [4, 4, 1, 16], strides = [1, 1, 1, 1]} : vector<4x4x2x16xf32> to vector<4x4x1x16xf32>
    %117 = vector.shape_cast %116 : vector<4x4x1x16xf32> to vector<4x4x16xf32>
    %118 = vector.extract_strided_slice %115 {offsets = [0, 0, 1, 0], sizes = [4, 4, 1, 16], strides = [1, 1, 1, 1]} : vector<4x4x2x16xf32> to vector<4x4x1x16xf32>
    %119 = vector.shape_cast %118 : vector<4x4x1x16xf32> to vector<4x4x16xf32>
    %120 = arith.maximumf %117, %119 : vector<4x4x16xf32>
    %121 = vector.shape_cast %120 : vector<4x4x16xf32> to vector<16x16xf32>
    %122 = vector.extract_strided_slice %121 {offsets = [0, 0], sizes = [1, 16], strides = [1, 1]} : vector<16x16xf32> to vector<1x16xf32>
    %c0_130 = arith.constant 0 : index
    %c0_131 = arith.constant 0 : index
    %123 = vector.load %arg15[%c0_130, %c0_131] : memref<1x256xf32, #tpu.memory_space<vmem>>, vector<1x16xf32>
    tpu.vector_store %arg15[%c0_130, %c0_131], %122 {strides = array<i32>} : memref<1x256xf32, #tpu.memory_space<vmem>>, vector<1x16xf32>,
    %124 = vector.extract_strided_slice %121 {offsets = [1, 0], sizes = [1, 16], strides = [1, 1]} : vector<16x16xf32> to vector<1x16xf32>
    %c0_132 = arith.constant 0 : index
    %c16_133 = arith.constant 16 : index
    %125 = vector.load %arg15[%c0_132, %c16_133] : memref<1x256xf32, #tpu.memory_space<vmem>>, vector<1x16xf32>
    tpu.vector_store %arg15[%c0_132, %c16_133], %124 {strides = array<i32>} : memref<1x256xf32, #tpu.memory_space<vmem>>, vector<1x16xf32>,
    %126 = vector.extract_strided_slice %121 {offsets = [2, 0], sizes = [1, 16], strides = [1, 1]} : vector<16x16xf32> to vector<1x16xf32>
    %c0_134 = arith.constant 0 : index
    %c32_135 = arith.constant 32 : index
    %127 = vector.load %arg15[%c0_134, %c32_135] : memref<1x256xf32, #tpu.memory_space<vmem>>, vector<1x16xf32>
    tpu.vector_store %arg15[%c0_134, %c32_135], %126 {strides = array<i32>} : memref<1x256xf32, #tpu.memory_space<vmem>>, vector<1x16xf32>,
    %128 = vector.extract_strided_slice %121 {offsets = [3, 0], sizes = [1, 16], strides = [1, 1]} : vector<16x16xf32> to vector<1x16xf32>
    %c0_136 = arith.constant 0 : index
    %c48_137 = arith.constant 48 : index
    %129 = vector.load %arg15[%c0_136, %c48_137] : memref<1x256xf32, #tpu.memory_space<vmem>>, vector<1x16xf32>
    tpu.vector_store %arg15[%c0_136, %c48_137], %128 {strides = array<i32>} : memref<1x256xf32, #tpu.memory_space<vmem>>, vector<1x16xf32>,
    %130 = vector.extract_strided_slice %121 {offsets = [4, 0], sizes = [1, 16], strides = [1, 1]} : vector<16x16xf32> to vector<1x16xf32>
    %c0_138 = arith.constant 0 : index
    %c64_139 = arith.constant 64 : index
    %131 = vector.load %arg15[%c0_138, %c64_139] : memref<1x256xf32, #tpu.memory_space<vmem>>, vector<1x16xf32>
    tpu.vector_store %arg15[%c0_138, %c64_139], %130 {strides = array<i32>} : memref<1x256xf32, #tpu.memory_space<vmem>>, vector<1x16xf32>,
    %132 = vector.extract_strided_slice %121 {offsets = [5, 0], sizes = [1, 16], strides = [1, 1]} : vector<16x16xf32> to vector<1x16xf32>
    %c0_140 = arith.constant 0 : index
    %c80 = arith.constant 80 : index
    %133 = vector.load %arg15[%c0_140, %c80] : memref<1x256xf32, #tpu.memory_space<vmem>>, vector<1x16xf32>
    tpu.vector_store %arg15[%c0_140, %c80], %132 {strides = array<i32>} : memref<1x256xf32, #tpu.memory_space<vmem>>, vector<1x16xf32>,
    %134 = vector.extract_strided_slice %121 {offsets = [6, 0], sizes = [1, 16], strides = [1, 1]} : vector<16x16xf32> to vector<1x16xf32>
    %c0_141 = arith.constant 0 : index
    %c96 = arith.constant 96 : index
    %135 = vector.load %arg15[%c0_141, %c96] : memref<1x256xf32, #tpu.memory_space<vmem>>, vector<1x16xf32>
    tpu.vector_store %arg15[%c0_141, %c96], %134 {strides = array<i32>} : memref<1x256xf32, #tpu.memory_space<vmem>>, vector<1x16xf32>,
    %136 = vector.extract_strided_slice %121 {offsets = [7, 0], sizes = [1, 16], strides = [1, 1]} : vector<16x16xf32> to vector<1x16xf32>
    %c0_142 = arith.constant 0 : index
    %c112 = arith.constant 112 : index
    %137 = vector.load %arg15[%c0_142, %c112] : memref<1x256xf32, #tpu.memory_space<vmem>>, vector<1x16xf32>
    tpu.vector_store %arg15[%c0_142, %c112], %136 {strides = array<i32>} : memref<1x256xf32, #tpu.memory_space<vmem>>, vector<1x16xf32>,
    %138 = vector.extract_strided_slice %121 {offsets = [8, 0], sizes = [1, 16], strides = [1, 1]} : vector<16x16xf32> to vector<1x16xf32>
    %c0_143 = arith.constant 0 : index
    %c128 = arith.constant 128 : index
    %139 = vector.load %arg15[%c0_143, %c128] : memref<1x256xf32, #tpu.memory_space<vmem>>, vector<1x16xf32>
    tpu.vector_store %arg15[%c0_143, %c128], %138 {strides = array<i32>} : memref<1x256xf32, #tpu.memory_space<vmem>>, vector<1x16xf32>,
    %140 = vector.extract_strided_slice %121 {offsets = [9, 0], sizes = [1, 16], strides = [1, 1]} : vector<16x16xf32> to vector<1x16xf32>
    %c0_144 = arith.constant 0 : index
    %c144 = arith.constant 144 : index
    %141 = vector.load %arg15[%c0_144, %c144] : memref<1x256xf32, #tpu.memory_space<vmem>>, vector<1x16xf32>
    tpu.vector_store %arg15[%c0_144, %c144], %140 {strides = array<i32>} : memref<1x256xf32, #tpu.memory_space<vmem>>, vector<1x16xf32>,
    %142 = vector.extract_strided_slice %121 {offsets = [10, 0], sizes = [1, 16], strides = [1, 1]} : vector<16x16xf32> to vector<1x16xf32>
    %c0_145 = arith.constant 0 : index
    %c160 = arith.constant 160 : index
    %143 = vector.load %arg15[%c0_145, %c160] : memref<1x256xf32, #tpu.memory_space<vmem>>, vector<1x16xf32>
    tpu.vector_store %arg15[%c0_145, %c160], %142 {strides = array<i32>} : memref<1x256xf32, #tpu.memory_space<vmem>>, vector<1x16xf32>,
    %144 = vector.extract_strided_slice %121 {offsets = [11, 0], sizes = [1, 16], strides = [1, 1]} : vector<16x16xf32> to vector<1x16xf32>
    %c0_146 = arith.constant 0 : index
    %c176 = arith.constant 176 : index
    %145 = vector.load %arg15[%c0_146, %c176] : memref<1x256xf32, #tpu.memory_space<vmem>>, vector<1x16xf32>
    tpu.vector_store %arg15[%c0_146, %c176], %144 {strides = array<i32>} : memref<1x256xf32, #tpu.memory_space<vmem>>, vector<1x16xf32>,
    %146 = vector.extract_strided_slice %121 {offsets = [12, 0], sizes = [1, 16], strides = [1, 1]} : vector<16x16xf32> to vector<1x16xf32>
    %c0_147 = arith.constant 0 : index
    %c192 = arith.constant 192 : index
    %147 = vector.load %arg15[%c0_147, %c192] : memref<1x256xf32, #tpu.memory_space<vmem>>, vector<1x16xf32>
    tpu.vector_store %arg15[%c0_147, %c192], %146 {strides = array<i32>} : memref<1x256xf32, #tpu.memory_space<vmem>>, vector<1x16xf32>,
    %148 = vector.extract_strided_slice %121 {offsets = [13, 0], sizes = [1, 16], strides = [1, 1]} : vector<16x16xf32> to vector<1x16xf32>
    %c0_148 = arith.constant 0 : index
    %c208 = arith.constant 208 : index
    %149 = vector.load %arg15[%c0_148, %c208] : memref<1x256xf32, #tpu.memory_space<vmem>>, vector<1x16xf32>
    tpu.vector_store %arg15[%c0_148, %c208], %148 {strides = array<i32>} : memref<1x256xf32, #tpu.memory_space<vmem>>, vector<1x16xf32>,
    %150 = vector.extract_strided_slice %121 {offsets = [14, 0], sizes = [1, 16], strides = [1, 1]} : vector<16x16xf32> to vector<1x16xf32>
    %c0_149 = arith.constant 0 : index
    %c224 = arith.constant 224 : index
    %151 = vector.load %arg15[%c0_149, %c224] : memref<1x256xf32, #tpu.memory_space<vmem>>, vector<1x16xf32>
    tpu.vector_store %arg15[%c0_149, %c224], %150 {strides = array<i32>} : memref<1x256xf32, #tpu.memory_space<vmem>>, vector<1x16xf32>,
    %152 = vector.extract_strided_slice %121 {offsets = [15, 0], sizes = [1, 16], strides = [1, 1]} : vector<16x16xf32> to vector<1x16xf32>
    %c0_150 = arith.constant 0 : index
    %c240 = arith.constant 240 : index
    %153 = vector.load %arg15[%c0_150, %c240] : memref<1x256xf32, #tpu.memory_space<vmem>>, vector<1x16xf32>
    tpu.vector_store %arg15[%c0_150, %c240], %152 {strides = array<i32>} : memref<1x256xf32, #tpu.memory_space<vmem>>, vector<1x16xf32>,
    %c0_151 = arith.constant 0 : index
    %c0_152 = arith.constant 0 : index
    %154 = vector.load %arg15[%c0_151, %c0_152] : memref<1x256xf32, #tpu.memory_space<vmem>>, vector<1x256xf32>
    %c0_153 = arith.constant 0 : index
    %c0_154 = arith.constant 0 : index
    %155 = vector.load %arg6[%c0_153, %c0_154] : memref<256x32xf32, #tpu.memory_space<vmem>>, vector<256x32xf32>
    %cst_155 = arith.constant dense<0.000000e+00> : vector<1x32xf32>
    %156 = tpu.matmul %154, %155, %cst_155 {dimension_numbers = #tpu.dot_dimension_numbers<[1], [0], [0], [1], [0, 0, 1, 1], [], []>} : vector<1x256xf32>, vector<256x32xf32>, vector<1x32xf32> -> vector<1x32xf32>
    %c0_156 = arith.constant 0 : index
    %c0_157 = arith.constant 0 : index
    %157 = vector.load %arg7[%c0_156, %c0_157] : memref<1x32xf32, #tpu.memory_space<vmem>>, vector<1x32xf32>
    %158 = arith.addf %156, %157 : vector<1x32xf32>
    %cst_158 = arith.constant 0.000000e+00 : f32
    %159 = vector.broadcast %cst_158 : f32 to vector<1x32xf32>
    %160 = arith.maximumf %158, %159 : vector<1x32xf32>
    %c0_159 = arith.constant 0 : index
    %c0_160 = arith.constant 0 : index
    %161 = vector.load %arg8[%c0_159, %c0_160] : memref<32x10xf32, #tpu.memory_space<vmem>>, vector<32x10xf32>
    %cst_161 = arith.constant dense<0.000000e+00> : vector<1x10xf32>
    %162 = tpu.matmul %160, %161, %cst_161 {dimension_numbers = #tpu.dot_dimension_numbers<[1], [0], [0], [1], [0, 0, 1, 1], [], []>} : vector<1x32xf32>, vector<32x10xf32>, vector<1x10xf32> -> vector<1x10xf32>
    %c0_162 = arith.constant 0 : index
    %c0_163 = arith.constant 0 : index
    %163 = vector.load %arg9[%c0_162, %c0_163] : memref<1x10xf32, #tpu.memory_space<vmem>>, vector<1x10xf32>
    %164 = arith.addf %162, %163 : vector<1x10xf32>
    %c0_164 = arith.constant 0 : index
    %c0_165 = arith.constant 0 : index
    %c0_166 = arith.constant 0 : index
    %165 = vector.load %arg10[%c0_164, %c0_165, %c0_166] : memref<1x1x10xf32, #tpu.memory_space<vmem>>, vector<1x1x10xf32>
    %166 = vector.shape_cast %165 : vector<1x1x10xf32> to vector<1x10xf32>
    %167 = vector.shape_cast %164 : vector<1x10xf32> to vector<1x1x10xf32>
    tpu.vector_store %arg10[%c0_164, %c0_165, %c0_166], %167 {strides = array<i32>} : memref<1x1x10xf32, #tpu.memory_space<vmem>>, vector<1x1x10xf32>,
    return
  }
  func.func @transform_0(%arg0: i32) -> (i32, i32, i32, i32) {
    %c0_i32 = arith.constant 0 : i32
    %c0_i32_0 = arith.constant 0 : i32
    %c0_i32_1 = arith.constant 0 : i32
    %c0_i32_2 = arith.constant 0 : i32
    return %arg0, %c0_i32, %c0_i32_0, %c0_i32_1 : i32, i32, i32, i32
  }
  func.func @transform_1(%arg0: i32) -> (i32, i32) {
    %c0_i32 = arith.constant 0 : i32
    %c0_i32_0 = arith.constant 0 : i32
    %c0_i32_1 = arith.constant 0 : i32
    return %c0_i32, %c0_i32_0 : i32, i32
  }
  func.func @transform_2(%arg0: i32) -> (i32, i32) {
    %c0_i32 = arith.constant 0 : i32
    %c0_i32_0 = arith.constant 0 : i32
    %c0_i32_1 = arith.constant 0 : i32
    return %c0_i32, %c0_i32_0 : i32, i32
  }
  func.func @transform_3(%arg0: i32) -> (i32, i32) {
    %c0_i32 = arith.constant 0 : i32
    %c0_i32_0 = arith.constant 0 : i32
    %c0_i32_1 = arith.constant 0 : i32
    return %c0_i32, %c0_i32_0 : i32, i32
  }
  func.func @transform_4(%arg0: i32) -> (i32, i32) {
    %c0_i32 = arith.constant 0 : i32
    %c0_i32_0 = arith.constant 0 : i32
    %c0_i32_1 = arith.constant 0 : i32
    return %c0_i32, %c0_i32_0 : i32, i32
  }
  func.func @transform_5(%arg0: i32) -> (i32, i32) {
    %c0_i32 = arith.constant 0 : i32
    %c0_i32_0 = arith.constant 0 : i32
    %c0_i32_1 = arith.constant 0 : i32
    return %c0_i32, %c0_i32_0 : i32, i32
  }
  func.func @transform_6(%arg0: i32) -> (i32, i32) {
    %c0_i32 = arith.constant 0 : i32
    %c0_i32_0 = arith.constant 0 : i32
    %c0_i32_1 = arith.constant 0 : i32
    return %c0_i32, %c0_i32_0 : i32, i32
  }
  func.func @transform_7(%arg0: i32) -> (i32, i32) {
    %c0_i32 = arith.constant 0 : i32
    %c0_i32_0 = arith.constant 0 : i32
    %c0_i32_1 = arith.constant 0 : i32
    return %c0_i32, %c0_i32_0 : i32, i32
  }
  func.func @transform_8(%arg0: i32) -> (i32, i32) {
    %c0_i32 = arith.constant 0 : i32
    %c0_i32_0 = arith.constant 0 : i32
    %c0_i32_1 = arith.constant 0 : i32
    return %c0_i32, %c0_i32_0 : i32, i32
  }
  func.func @transform_9(%arg0: i32) -> (i32, i32, i32) {
    %c0_i32 = arith.constant 0 : i32
    %c0_i32_0 = arith.constant 0 : i32
    %c0_i32_1 = arith.constant 0 : i32
    return %arg0, %c0_i32, %c0_i32_0 : i32, i32, i32
  }
}

</mosaic_0001>

<llo_original>
// kernel: tpu_custom_call.1
$region0: #{tpu_custom_call.1}
  #allocation0 [shape = 'u32[]', space=smem, size = 0x4, offset = 0x4, fixed_abs, tag = 'smem constant byte address 0x4 - core index']
  #allocation1 [shape = 'u32[144,128]{1,0:T(1,128)}', space=vmem, size = 0x12000, scoped, tag = 'internal scratch']
  #allocation2 [shape = 'f32[18,18,4]{2,1,0:T(8,128)}', space=vmem, size = 0x36000, scoped, tag = 'scratch operand']
  #allocation3 [shape = 'f32[256,36]{1,0:T(8,128)}', space=vmem, size = 0x20000, scoped, tag = 'scratch operand']
  #allocation4 [shape = 'f32[10,10,8]{2,1,0:T(8,128)}', space=vmem, size = 0x14000, scoped, tag = 'scratch operand']
  #allocation5 [shape = 'f32[64,72]{1,0:T(8,128)}', space=vmem, size = 0x8000, scoped, tag = 'scratch operand']
  #allocation6 [shape = 'f32[1,256]{1,0:T(1,128)}', space=vmem, size = 0x400, scoped, tag = 'scratch operand']
  %s0 = inlined_call_operand.vmem [shape: f32[2,16,16,4], index: 0, kind: input, shape index: {}]
  %s1 = inlined_call_operand.vmem [shape: f32[36,8], index: 1, kind: input, shape index: {}]
  %s2 = inlined_call_operand.vmem [shape: f32[1,8], index: 2, kind: input, shape index: {}]
  %s3 = inlined_call_operand.vmem [shape: f32[72,16], index: 3, kind: input, shape index: {}]
  %s4 = inlined_call_operand.vmem [shape: f32[1,16], index: 4, kind: input, shape index: {}]
  %s5 = inlined_call_operand.vmem [shape: f32[256,32], index: 5, kind: input, shape index: {}]
  %s6 = inlined_call_operand.vmem [shape: f32[1,32], index: 6, kind: input, shape index: {}]
  %s7 = inlined_call_operand.vmem [shape: f32[32,10], index: 7, kind: input, shape index: {}]
  %s8 = inlined_call_operand.vmem [shape: f32[1,10], index: 8, kind: input, shape index: {}]
  %s9 = inlined_call_operand.hbm [shape: f32[2,1,10], index: 9, kind: output, shape index: {}]
  %s10 = sld [smem:[#allocation0]]
  $region69: #{tpu_custom_call.1} parent=0
    _
  %s12 = ssub.s32 1, %s10
  %s13 = scalar_select 0, %s12, %s10
  $region1: #{tpu_custom_call.1} parent=0
    #allocation7 [shape = 'u8[1024]{0}', space=vmem, size = 0x400, scoped, tag = 'output window, operand 0']
    #allocation8 [shape = 's32[2]{0}', space=sflag, size = 0x8, scoped, tag = 'scoped memory for tpu_custom_call.1']
    %14 = vsyncpa [#allocation8], 0
    %s15 = scalar_lea.sflag [#allocation8], 1
    %16 = vsyncpa %s15, 0
    loop: start=0, step=1, limit=4
    $region2: #{tpu_custom_call.1} parent=1 // loop_pre_header
      _
    $region3: #{tpu_custom_call.1} parent=1 // loop_header
      %s18 = sphi 0, %s22
      %p19 = scmp.ge.s32.totalorder %s18, 4
      %s28 = sphi 0, %s30
      %s31 = sphi 0, %s28
      %s32 = sphi 0, %s31
      %s48 = sphi 0, %s32
      %s52 = sphi 0, %s52
      %s54 = sphi 0, %s52
      %s55 = sphi 0, %s54
      %s69 = sphi 0, %s55
      %s73 = sphi 0, %s73
      %s75 = sphi 0, %s73
      %s76 = sphi 0, %s75
      %s90 = sphi 0, %s76
      %s94 = sphi 0, %s94
      %s96 = sphi 0, %s94
      %s97 = sphi 0, %s96
      %s111 = sphi 0, %s97
      %s115 = sphi 0, %s115
      %s117 = sphi 0, %s115
      %s118 = sphi 0, %s117
      %s132 = sphi 0, %s118
      %s136 = sphi 0, %s136
      %s138 = sphi 0, %s136
      %s139 = sphi 0, %s138
      %s153 = sphi 0, %s139
      %s157 = sphi 0, %s157
      %s159 = sphi 0, %s157
      %s160 = sphi 0, %s159
      %s174 = sphi 0, %s160
      %s178 = sphi 0, %s178
      %s180 = sphi 0, %s178
      %s181 = sphi 0, %s180
      %s195 = sphi 0, %s181
      %s199 = sphi 0, %s199
      %s201 = sphi 0, %s199
      %s202 = sphi 0, %s201
      %s216 = sphi 0, %s202
      %s222 = sphi 0, %s224
      %s225 = sphi 0, %s222
      %s226 = sphi 0, %s225
      %s242 = sphi 0, %s226
    $region4: #{tpu_custom_call.1} parent=1 // loop_header_branch
      %21 = sbr.rel (%p19) target = $region8
    $region5: #{tpu_custom_call.1} parent=1 // loop_body
      %s23 = ssub.s32 %s18, 1
      %s24 = ssub.s32 %s18, 2
      %s25 = sadd.s32 %s18, 1
      %s26 = ssub.s32 %s18, %s25
      %p27 = scmp.eq.s32.totalorder %s26, 0
      %s29 = sadd.s32 %s28, 1
      %s30 = scalar_select %p27, %s28, %s29
      %p33 = pneg %p27
      %p34 = scmp.eq.s32.totalorder %s18, 1
      %p35 = por %p33, %p34
      %p36 = scmp.ne.s32.totalorder %s28, %s31
      %p37 = scmp.eq.s32.totalorder %s18, 0
      %p38 = por %p36, %p37
      %p39 = scmp.ne.s32.totalorder %s28, %s31
      %p40 = scmp.eq.s32.totalorder %s23, 1
      %p41 = por %p39, %p40
      %p42 = scmp.ne.s32.totalorder %s31, %s32
      %p43 = scmp.eq.s32.totalorder %s23, 0
      %p44 = por %p42, %p43
      %p45 = scmp.ne.s32.totalorder %s31, %s32
      %p46 = scmp.eq.s32.totalorder %s24, 1
      %p47 = por %p45, %p46
      %p49 = scmp.ne.s32.totalorder %s32, %s48
      %p50 = scmp.eq.s32.totalorder %s24, 0
      %p51 = por %p49, %p50
      %s53 = sadd.s32 %s52, 1
      %p56 = scmp.eq.s32.totalorder %s18, 1
      %p57 = scmp.ne.s32.totalorder %s52, %s54
      %p58 = scmp.eq.s32.totalorder %s18, 0
      %p59 = por %p57, %p58
      %p60 = scmp.ne.s32.totalorder %s52, %s54
      %p61 = scmp.eq.s32.totalorder %s23, 1
      %p62 = por %p60, %p61
      %p63 = scmp.ne.s32.totalorder %s54, %s55
      %p64 = scmp.eq.s32.totalorder %s23, 0
      %p65 = por %p63, %p64
      %p66 = scmp.ne.s32.totalorder %s54, %s55
      %p67 = scmp.eq.s32.totalorder %s24, 1
      %p68 = por %p66, %p67
      %p70 = scmp.ne.s32.totalorder %s55, %s69
      %p71 = scmp.eq.s32.totalorder %s24, 0
      %p72 = por %p70, %p71
      %s74 = sadd.s32 %s73, 1
      %p77 = scmp.eq.s32.totalorder %s18, 1
      %p78 = scmp.ne.s32.totalorder %s73, %s75
      %p79 = scmp.eq.s32.totalorder %s18, 0
      %p80 = por %p78, %p79
      %p81 = scmp.ne.s32.totalorder %s73, %s75
      %p82 = scmp.eq.s32.totalorder %s23, 1
      %p83 = por %p81, %p82
      %p84 = scmp.ne.s32.totalorder %s75, %s76
      %p85 = scmp.eq.s32.totalorder %s23, 0
      %p86 = por %p84, %p85
      %p87 = scmp.ne.s32.totalorder %s75, %s76
      %p88 = scmp.eq.s32.totalorder %s24, 1
      %p89 = por %p87, %p88
      %p91 = scmp.ne.s32.totalorder %s76, %s90
      %p92 = scmp.eq.s32.totalorder %s24, 0
      %p93 = por %p91, %p92
      %s95 = sadd.s32 %s94, 1
      %p98 = scmp.eq.s32.totalorder %s18, 1
      %p99 = scmp.ne.s32.totalorder %s94, %s96
      %p100 = scmp.eq.s32.totalorder %s18, 0
      %p101 = por %p99, %p100
      %p102 = scmp.ne.s32.totalorder %s94, %s96
      %p103 = scmp.eq.s32.totalorder %s23, 1
      %p104 = por %p102, %p103
      %p105 = scmp.ne.s32.totalorder %s96, %s97
      %p106 = scmp.eq.s32.totalorder %s23, 0
      %p107 = por %p105, %p106
      %p108 = scmp.ne.s32.totalorder %s96, %s97
      %p109 = scmp.eq.s32.totalorder %s24, 1
      %p110 = por %p108, %p109
      %p112 = scmp.ne.s32.totalorder %s97, %s111
      %p113 = scmp.eq.s32.totalorder %s24, 0
      %p114 = por %p112, %p113
      %s116 = sadd.s32 %s115, 1
      %p119 = scmp.eq.s32.totalorder %s18, 1
      %p120 = scmp.ne.s32.totalorder %s115, %s117
      %p121 = scmp.eq.s32.totalorder %s18, 0
      %p122 = por %p120, %p121
      %p123 = scmp.ne.s32.totalorder %s115, %s117
      %p124 = scmp.eq.s32.totalorder %s23, 1
      %p125 = por %p123, %p124
      %p126 = scmp.ne.s32.totalorder %s117, %s118
      %p127 = scmp.eq.s32.totalorder %s23, 0
      %p128 = por %p126, %p127
      %p129 = scmp.ne.s32.totalorder %s117, %s118
      %p130 = scmp.eq.s32.totalorder %s24, 1
      %p131 = por %p129, %p130
      %p133 = scmp.ne.s32.totalorder %s118, %s132
      %p134 = scmp.eq.s32.totalorder %s24, 0
      %p135 = por %p133, %p134
      %s137 = sadd.s32 %s136, 1
      %p140 = scmp.eq.s32.totalorder %s18, 1
      %p141 = scmp.ne.s32.totalorder %s136, %s138
      %p142 = scmp.eq.s32.totalorder %s18, 0
      %p143 = por %p141, %p142
      %p144 = scmp.ne.s32.totalorder %s136, %s138
      %p145 = scmp.eq.s32.totalorder %s23, 1
      %p146 = por %p144, %p145
      %p147 = scmp.ne.s32.totalorder %s138, %s139
      %p148 = scmp.eq.s32.totalorder %s23, 0
      %p149 = por %p147, %p148
      %p150 = scmp.ne.s32.totalorder %s138, %s139
      %p151 = scmp.eq.s32.totalorder %s24, 1
      %p152 = por %p150, %p151
      %p154 = scmp.ne.s32.totalorder %s139, %s153
      %p155 = scmp.eq.s32.totalorder %s24, 0
      %p156 = por %p154, %p155
      %s158 = sadd.s32 %s157, 1
      %p161 = scmp.eq.s32.totalorder %s18, 1
      %p162 = scmp.ne.s32.totalorder %s157, %s159
      %p163 = scmp.eq.s32.totalorder %s18, 0
      %p164 = por %p162, %p163
      %p165 = scmp.ne.s32.totalorder %s157, %s159
      %p166 = scmp.eq.s32.totalorder %s23, 1
      %p167 = por %p165, %p166
      %p168 = scmp.ne.s32.totalorder %s159, %s160
      %p169 = scmp.eq.s32.totalorder %s23, 0
      %p170 = por %p168, %p169
      %p171 = scmp.ne.s32.totalorder %s159, %s160
      %p172 = scmp.eq.s32.totalorder %s24, 1
      %p173 = por %p171, %p172
      %p175 = scmp.ne.s32.totalorder %s160, %s174
      %p176 = scmp.eq.s32.totalorder %s24, 0
      %p177 = por %p175, %p176
      %s179 = sadd.s32 %s178, 1
      %p182 = scmp.eq.s32.totalorder %s18, 1
      %p183 = scmp.ne.s32.totalorder %s178, %s180
      %p184 = scmp.eq.s32.totalorder %s18, 0
      %p185 = por %p183, %p184
      %p186 = scmp.ne.s32.totalorder %s178, %s180
      %p187 = scmp.eq.s32.totalorder %s23, 1
      %p188 = por %p186, %p187
      %p189 = scmp.ne.s32.totalorder %s180, %s181
      %p190 = scmp.eq.s32.totalorder %s23, 0
      %p191 = por %p189, %p190
      %p192 = scmp.ne.s32.totalorder %s180, %s181
      %p193 = scmp.eq.s32.totalorder %s24, 1
      %p194 = por %p192, %p193
      %p196 = scmp.ne.s32.totalorder %s181, %s195
      %p197 = scmp.eq.s32.totalorder %s24, 0
      %p198 = por %p196, %p197
      %s200 = sadd.s32 %s199, 1
      %p203 = scmp.eq.s32.totalorder %s18, 1
      %p204 = scmp.ne.s32.totalorder %s199, %s201
      %p205 = scmp.eq.s32.totalorder %s18, 0
      %p206 = por %p204, %p205
      %p207 = scmp.ne.s32.totalorder %s199, %s201
      %p208 = scmp.eq.s32.totalorder %s23, 1
      %p209 = por %p207, %p208
      %p210 = scmp.ne.s32.totalorder %s201, %s202
      %p211 = scmp.eq.s32.totalorder %s23, 0
      %p212 = por %p210, %p211
      %p213 = scmp.ne.s32.totalorder %s201, %s202
      %p214 = scmp.eq.s32.totalorder %s24, 1
      %p215 = por %p213, %p214
      %p217 = scmp.ne.s32.totalorder %s202, %s216
      %p218 = scmp.eq.s32.totalorder %s24, 0
      %p219 = por %p217, %p218
      %s220 = ssub.s32 %s18, %s25
      %p221 = scmp.eq.s32.totalorder %s220, 0
      %s223 = sadd.s32 %s222, 1
      %s224 = scalar_select %p221, %s222, %s223
      %p227 = pneg %p221
      %p228 = scmp.eq.s32.totalorder %s18, 1
      %p229 = por %p227, %p228
      %p230 = scmp.ne.s32.totalorder %s222, %s225
      %p231 = scmp.eq.s32.totalorder %s18, 0
      %p232 = por %p230, %p231
      %p233 = scmp.ne.s32.totalorder %s222, %s225
      %p234 = scmp.eq.s32.totalorder %s23, 1
      %p235 = por %p233, %p234
      %p236 = scmp.ne.s32.totalorder %s225, %s226
      %p237 = scmp.eq.s32.totalorder %s23, 0
      %p238 = por %p236, %p237
      %p239 = scmp.ne.s32.totalorder %s225, %s226
      %p240 = scmp.eq.s32.totalorder %s24, 1
      %p241 = por %p239, %p240
      %p243 = scmp.ne.s32.totalorder %s226, %s242
      %p244 = scmp.eq.s32.totalorder %s24, 0
      %p245 = por %p243, %p244
      %p246 = scmp.le.s32.totalorder 1, %s18
      %p247 = scmp.lt.s32.totalorder %s18, 3
      %p248 = pnand %p246, %p247
      %p249 = pneg %p248
      // Predicated region
      $region9: #{tpu_custom_call.1} parent=5 // pred_check
        _
      $region10: #{tpu_custom_call.1} parent=5 // pred_check_branch
        %251 = sbr.rel (%p248) target = $region12
      $region11: #{tpu_custom_call.1} parent=5 // pred_region
        %s252 = ssub.s32 %s18, 1
        // Predicated region
        $region13: #{tpu_custom_call.1} parent=11 // pred_check
          %p253 = pneg %p65
        $region14: #{tpu_custom_call.1} parent=11 // pred_check_branch
          %255 = sbr.rel (%p253) target = $region16
        $region15: #{tpu_custom_call.1} parent=11 // pred_region
          _
        $region16: #{tpu_custom_call.1} parent=11 // pred_fallthru
          _
        // Predicated region
        $region17: #{tpu_custom_call.1} parent=11 // pred_check
          %p256 = pneg %p86
        $region18: #{tpu_custom_call.1} parent=11 // pred_check_branch
          %258 = sbr.rel (%p256) target = $region20
        $region19: #{tpu_custom_call.1} parent=11 // pred_region
          _
        $region20: #{tpu_custom_call.1} parent=11 // pred_fallthru
          _
        // Predicated region
        $region21: #{tpu_custom_call.1} parent=11 // pred_check
          %p259 = pneg %p107
        $region22: #{tpu_custom_call.1} parent=11 // pred_check_branch
          %261 = sbr.rel (%p259) target = $region24
        $region23: #{tpu_custom_call.1} parent=11 // pred_region
          _
        $region24: #{tpu_custom_call.1} parent=11 // pred_fallthru
          _
        // Predicated region
        $region25: #{tpu_custom_call.1} parent=11 // pred_check
          %p262 = pneg %p128
        $region26: #{tpu_custom_call.1} parent=11 // pred_check_branch
          %264 = sbr.rel (%p262) target = $region28
        $region27: #{tpu_custom_call.1} parent=11 // pred_region
          _
        $region28: #{tpu_custom_call.1} parent=11 // pred_fallthru
          _
        // Predicated region
        $region29: #{tpu_custom_call.1} parent=11 // pred_check
          %p265 = pneg %p149
        $region30: #{tpu_custom_call.1} parent=11 // pred_check_branch
          %267 = sbr.rel (%p265) target = $region32
        $region31: #{tpu_custom_call.1} parent=11 // pred_region
          _
        $region32: #{tpu_custom_call.1} parent=11 // pred_fallthru
          _
        // Predicated region
        $region33: #{tpu_custom_call.1} parent=11 // pred_check
          %p268 = pneg %p170
        $region34: #{tpu_custom_call.1} parent=11 // pred_check_branch
          %270 = sbr.rel (%p268) target = $region36
        $region35: #{tpu_custom_call.1} parent=11 // pred_region
          _
        $region36: #{tpu_custom_call.1} parent=11 // pred_fallthru
          _
        // Predicated region
        $region37: #{tpu_custom_call.1} parent=11 // pred_check
          %p271 = pneg %p191
        $region38: #{tpu_custom_call.1} parent=11 // pred_check_branch
          %273 = sbr.rel (%p271) target = $region40
        $region39: #{tpu_custom_call.1} parent=11 // pred_region
          _
        $region40: #{tpu_custom_call.1} parent=11 // pred_fallthru
          _
        // Predicated region
        $region41: #{tpu_custom_call.1} parent=11 // pred_check
          %p274 = pneg %p212
        $region42: #{tpu_custom_call.1} parent=11 // pred_check_branch
          %276 = sbr.rel (%p274) target = $region44
        $region43: #{tpu_custom_call.1} parent=11 // pred_region
          _
        $region44: #{tpu_custom_call.1} parent=11 // pred_fallthru
          _
      $region12: #{tpu_custom_call.1} parent=5 // pred_fallthru
        _
      %p277 = scmp.lt.s32.totalorder %s18, 2
      // Predicated region
      $region45: #{tpu_custom_call.1} parent=5 // pred_check
        %p278 = pneg %p277
      $region46: #{tpu_custom_call.1} parent=5 // pred_check_branch
        %280 = sbr.rel (%p278) target = $region48
      $region47: #{tpu_custom_call.1} parent=5 // pred_region
        // Predicated region
        $region49: #{tpu_custom_call.1} parent=47 // pred_check
          %p281 = pneg %p38
        $region50: #{tpu_custom_call.1} parent=47 // pred_check_branch
          %283 = sbr.rel (%p281) target = $region52
        $region51: #{tpu_custom_call.1} parent=47 // pred_region
          %p284 = scmp.lt.s32.totalorder %s18, 1
          %s285 = scalar_select %p284, %s18, 1
          %s286 = smul.addr %s285, 32
          %s287 = smul.addr %s286, 8
          %s288 = scalar_lea.vmem %s0, %s287
        $region52: #{tpu_custom_call.1} parent=47 // pred_fallthru
          _
      $region48: #{tpu_custom_call.1} parent=5 // pred_fallthru
        _
      %p289 = scmp.le.s32.totalorder 1, %s18
      %p290 = scmp.lt.s32.totalorder %s18, 3
      %p291 = pnand %p289, %p290
      %p292 = pneg %p291
      // Predicated region
      $region53: #{tpu_custom_call.1} parent=5 // pred_check
        _
      $region54: #{tpu_custom_call.1} parent=5 // pred_check_branch
        %294 = sbr.rel (%p291) target = $region56
      $region55: #{tpu_custom_call.1} parent=5 // pred_region
        %s295 = ssub.s32 %s18, 1
        %p296 = scmp.lt.s32.totalorder %s23, 1
        %s297 = scalar_select %p296, %s23, 1
        %s298 = smul.addr %s297, 32
        %s299 = smul.addr %s298, 8
        %s300 = scalar_lea.vmem %s0, %s299
        %p301 = pneg %p44
        %p302 = pneg %p41
        %p303 = pneg %p65
        %p304 = pneg %p62
        %p305 = pneg %p86
        %p306 = pneg %p83
        %p307 = pneg %p107
        %p308 = pneg %p104
        %p309 = pneg %p128
        %p310 = pneg %p125
        %p311 = pneg %p149
        %p312 = pneg %p146
        %p313 = pneg %p170
        %p314 = pneg %p167
        %p315 = pneg %p191
        %p316 = pneg %p188
        %p317 = pneg %p212
        %p318 = pneg %p209
        %p319 = pneg %p238
        %p320 = pneg %p235
        %s321 = sand.u32 %s225, 1
        %s322 = scalar_lea.sflag [#allocation8], %s321
        %s323 = sand.u32 %s225, 1
        %s324 = scalar_lea.vmem [#allocation7], %s323
        %p325 = scmp.lt.s32.totalorder %s23, 1
        %s326 = scalar_select %p325, %s23, 1
        %s327 = smul.addr %s326, 32
        %s328 = smul.addr %s327, 8
        %s329 = scalar_lea.vmem %s0, %s328
        %v330 = vld [vmem:[%s329] sm:$0xff]
        %v331 = vld [vmem:[%s329 + $0x8] sm:$0xff]
        %v332 = vld [vmem:[%s329 + $0x10] sm:$0xff]
        %v333 = vld [vmem:[%s329 + $0x18] sm:$0xff]
        %v334 = vld [vmem:[%s329 + $0x20] sm:$0xff]
        %v335 = vld [vmem:[%s329 + $0x28] sm:$0xff]
        %v336 = vld [vmem:[%s329 + $0x30] sm:$0xff]
        %v337 = vld [vmem:[%s329 + $0x38] sm:$0xff]
        %v338 = vld [vmem:[%s329 + $0x40] sm:$0xff]
        %v339 = vld [vmem:[%s329 + $0x48] sm:$0xff]
        %v340 = vld [vmem:[%s329 + $0x50] sm:$0xff]
        %v341 = vld [vmem:[%s329 + $0x58] sm:$0xff]
        %v342 = vld [vmem:[%s329 + $0x60] sm:$0xff]
        %v343 = vld [vmem:[%s329 + $0x68] sm:$0xff]
        %v344 = vld [vmem:[%s329 + $0x70] sm:$0xff]
        %v345 = vld [vmem:[%s329 + $0x78] sm:$0xff]
        %v346 = vld [vmem:[%s329 + $0x80] sm:$0xff]
        %v347 = vld [vmem:[%s329 + $0x88] sm:$0xff]
        %v348 = vld [vmem:[%s329 + $0x90] sm:$0xff]
        %v349 = vld [vmem:[%s329 + $0x98] sm:$0xff]
        %v350 = vld [vmem:[%s329 + $0xa0] sm:$0xff]
        %v351 = vld [vmem:[%s329 + $0xa8] sm:$0xff]
        %v352 = vld [vmem:[%s329 + $0xb0] sm:$0xff]
        %v353 = vld [vmem:[%s329 + $0xb8] sm:$0xff]
        %v354 = vld [vmem:[%s329 + $0xc0] sm:$0xff]
        %v355 = vld [vmem:[%s329 + $0xc8] sm:$0xff]
        %v356 = vld [vmem:[%s329 + $0xd0] sm:$0xff]
        %v357 = vld [vmem:[%s329 + $0xd8] sm:$0xff]
        %v358 = vld [vmem:[%s329 + $0xe0] sm:$0xff]
        %v359 = vld [vmem:[%s329 + $0xe8] sm:$0xff]
        %v360 = vld [vmem:[%s329 + $0xf0] sm:$0xff]
        %v361 = vld [vmem:[%s329 + $0xf8] sm:$0xff]
        %vm362 = vcmask 31744
        %363 = vst.msk [vmem:[#allocation2] sm:$0xff] %vm362, 0.0
        %364 = vst.msk [vmem:[#allocation2 + $0x8] sm:$0xff] %vm362, 0.0
        %vm365 = vcmask 25600
        %366 = vst.msk [vmem:[#allocation2 + $0x10] sm:$0x3] %vm365, 0.0
        %s367 = scalar_lea.vmem [#allocation2], 408
        %368 = vst.msk [vmem:[%s367] sm:$0xff] %vm362, 0.0
        %369 = vst.msk [vmem:[%s367 + $0x8] sm:$0xff] %vm362, 0.0
        %370 = vst.msk [vmem:[%s367 + $0x10] sm:$0x3] %vm365, 0.0
        %vm371 = vcmask 24576
        %372 = vst.msk [vmem:[#allocation2] sm:$0x1] %vm371, 0.0
        %373 = vst.msk [vmem:[#allocation2 + $0x18] sm:$0x1] %vm371, 0.0
        %374 = vst.msk [vmem:[#allocation2 + $0x30] sm:$0x1] %vm371, 0.0
        %375 = vst.msk [vmem:[#allocation2 + $0x48] sm:$0x1] %vm371, 0.0
        %376 = vst.msk [vmem:[#allocation2 + $0x60] sm:$0x1] %vm371, 0.0
        %377 = vst.msk [vmem:[#allocation2 + $0x78] sm:$0x1] %vm371, 0.0
        %378 = vst.msk [vmem:[#allocation2 + $0x90] sm:$0x1] %vm371, 0.0
        %379 = vst.msk [vmem:[#allocation2 + $0xa8] sm:$0x1] %vm371, 0.0
        %380 = vst.msk [vmem:[#allocation2 + $0xc0] sm:$0x1] %vm371, 0.0
        %381 = vst.msk [vmem:[#allocation2 + $0xd8] sm:$0x1] %vm371, 0.0
        %382 = vst.msk [vmem:[#allocation2 + $0xf0] sm:$0x1] %vm371, 0.0
        %383 = vst.msk [vmem:[#allocation2 + $0x108] sm:$0x1] %vm371, 0.0
        %384 = vst.msk [vmem:[#allocation2 + $0x120] sm:$0x1] %vm371, 0.0
        %385 = vst.msk [vmem:[#allocation2 + $0x138] sm:$0x1] %vm371, 0.0
        %386 = vst.msk [vmem:[#allocation2 + $0x150] sm:$0x1] %vm371, 0.0
        %387 = vst.msk [vmem:[#allocation2 + $0x168] sm:$0x1] %vm371, 0.0
        %388 = vst.msk [vmem:[#allocation2 + $0x180] sm:$0x1] %vm371, 0.0
        %389 = vst.msk [vmem:[#allocation2 + $0x198] sm:$0x1] %vm371, 0.0
        %390 = vst.msk [vmem:[#allocation2 + $0x11] sm:$0x1] %vm371, 0.0
        %391 = vst.msk [vmem:[#allocation2 + $0x29] sm:$0x1] %vm371, 0.0
        %392 = vst.msk [vmem:[#allocation2 + $0x41] sm:$0x1] %vm371, 0.0
        %393 = vst.msk [vmem:[#allocation2 + $0x59] sm:$0x1] %vm371, 0.0
        %394 = vst.msk [vmem:[#allocation2 + $0x71] sm:$0x1] %vm371, 0.0
        %395 = vst.msk [vmem:[#allocation2 + $0x89] sm:$0x1] %vm371, 0.0
        %396 = vst.msk [vmem:[#allocation2 + $0xa1] sm:$0x1] %vm371, 0.0
        %397 = vst.msk [vmem:[#allocation2 + $0xb9] sm:$0x1] %vm371, 0.0
        %398 = vst.msk [vmem:[#allocation2 + $0xd1] sm:$0x1] %vm371, 0.0
        %399 = vst.msk [vmem:[#allocation2 + $0xe9] sm:$0x1] %vm371, 0.0
        %400 = vst.msk [vmem:[#allocation2 + $0x101] sm:$0x1] %vm371, 0.0
        %401 = vst.msk [vmem:[#allocation2 + $0x119] sm:$0x1] %vm371, 0.0
        %402 = vst.msk [vmem:[#allocation2 + $0x131] sm:$0x1] %vm371, 0.0
        %403 = vst.msk [vmem:[#allocation2 + $0x149] sm:$0x1] %vm371, 0.0
        %404 = vst.msk [vmem:[#allocation2 + $0x161] sm:$0x1] %vm371, 0.0
        %405 = vst.msk [vmem:[#allocation2 + $0x179] sm:$0x1] %vm371, 0.0
        %406 = vst.msk [vmem:[#allocation2 + $0x191] sm:$0x1] %vm371, 0.0
        %407 = vst.msk [vmem:[#allocation2 + $0x1a9] sm:$0x1] %vm371, 0.0
        %s408 = scalar_lea.vmem [#allocation2], 24
        %409 = vst.msk [vmem:[%s408 + $0x1] sm:$0xff] %vm362, %v330
        %410 = vst.msk [vmem:[%s408 + $0x9] sm:$0xff] %vm362, %v331
        %411 = vst.msk [vmem:[%s408 + $0x19] sm:$0xff] %vm362, %v332
        %412 = vst.msk [vmem:[%s408 + $0x21] sm:$0xff] %vm362, %v333
        %413 = vst.msk [vmem:[%s408 + $0x31] sm:$0xff] %vm362, %v334
        %414 = vst.msk [vmem:[%s408 + $0x39] sm:$0xff] %vm362, %v335
        %415 = vst.msk [vmem:[%s408 + $0x49] sm:$0xff] %vm362, %v336
        %416 = vst.msk [vmem:[%s408 + $0x51] sm:$0xff] %vm362, %v337
        %417 = vst.msk [vmem:[%s408 + $0x61] sm:$0xff] %vm362, %v338
        %418 = vst.msk [vmem:[%s408 + $0x69] sm:$0xff] %vm362, %v339
        %419 = vst.msk [vmem:[%s408 + $0x79] sm:$0xff] %vm362, %v340
        %420 = vst.msk [vmem:[%s408 + $0x81] sm:$0xff] %vm362, %v341
        %421 = vst.msk [vmem:[%s408 + $0x91] sm:$0xff] %vm362, %v342
        %422 = vst.msk [vmem:[%s408 + $0x99] sm:$0xff] %vm362, %v343
        %423 = vst.msk [vmem:[%s408 + $0xa9] sm:$0xff] %vm362, %v344
        %424 = vst.msk [vmem:[%s408 + $0xb1] sm:$0xff] %vm362, %v345
        %425 = vst.msk [vmem:[%s408 + $0xc1] sm:$0xff] %vm362, %v346
        %426 = vst.msk [vmem:[%s408 + $0xc9] sm:$0xff] %vm362, %v347
        %427 = vst.msk [vmem:[%s408 + $0xd9] sm:$0xff] %vm362, %v348
        %428 = vst.msk [vmem:[%s408 + $0xe1] sm:$0xff] %vm362, %v349
        %429 = vst.msk [vmem:[%s408 + $0xf1] sm:$0xff] %vm362, %v350
        %430 = vst.msk [vmem:[%s408 + $0xf9] sm:$0xff] %vm362, %v351
        %431 = vst.msk [vmem:[%s408 + $0x109] sm:$0xff] %vm362, %v352
        %432 = vst.msk [vmem:[%s408 + $0x111] sm:$0xff] %vm362, %v353
        %433 = vst.msk [vmem:[%s408 + $0x121] sm:$0xff] %vm362, %v354
        %434 = vst.msk [vmem:[%s408 + $0x129] sm:$0xff] %vm362, %v355
        %435 = vst.msk [vmem:[%s408 + $0x139] sm:$0xff] %vm362, %v356
        %436 = vst.msk [vmem:[%s408 + $0x141] sm:$0xff] %vm362, %v357
        %437 = vst.msk [vmem:[%s408 + $0x151] sm:$0xff] %vm362, %v358
        %438 = vst.msk [vmem:[%s408 + $0x159] sm:$0xff] %vm362, %v359
        %439 = vst.msk [vmem:[%s408 + $0x169] sm:$0xff] %vm362, %v360
        %440 = vst.msk [vmem:[%s408 + $0x171] sm:$0xff] %vm362, %v361
        %v441 = vld [vmem:[#allocation2] sm:$0xff]
        %v442 = vld [vmem:[#allocation2 + $0x8] sm:$0xff]
        %v443 = vld [vmem:[#allocation2 + $0x18] sm:$0xff]
        %v444 = vld [vmem:[#allocation2 + $0x20] sm:$0xff]
        %v445 = vld [vmem:[#allocation2 + $0x30] sm:$0xff]
        %v446 = vld [vmem:[#allocation2 + $0x38] sm:$0xff]
        %v447 = vld [vmem:[#allocation2 + $0x48] sm:$0xff]
        %v448 = vld [vmem:[#allocation2 + $0x50] sm:$0xff]
        %v449 = vld [vmem:[#allocation2 + $0x60] sm:$0xff]
        %v450 = vld [vmem:[#allocation2 + $0x68] sm:$0xff]
        %v451 = vld [vmem:[#allocation2 + $0x78] sm:$0xff]
        %v452 = vld [vmem:[#allocation2 + $0x80] sm:$0xff]
        %v453 = vld [vmem:[#allocation2 + $0x90] sm:$0xff]
        %v454 = vld [vmem:[#allocation2 + $0x98] sm:$0xff]
        %v455 = vld [vmem:[#allocation2 + $0xa8] sm:$0xff]
        %v456 = vld [vmem:[#allocation2 + $0xb0] sm:$0xff]
        %v457 = vld [vmem:[#allocation2 + $0xc0] sm:$0xff]
        %v458 = vld [vmem:[#allocation2 + $0xc8] sm:$0xff]
        %v459 = vld [vmem:[#allocation2 + $0xd8] sm:$0xff]
        %v460 = vld [vmem:[#allocation2 + $0xe0] sm:$0xff]
        %v461 = vld [vmem:[#allocation2 + $0xf0] sm:$0xff]
        %v462 = vld [vmem:[#allocation2 + $0xf8] sm:$0xff]
        %v463 = vld [vmem:[#allocation2 + $0x108] sm:$0xff]
        %v464 = vld [vmem:[#allocation2 + $0x110] sm:$0xff]
        %v465 = vld [vmem:[#allocation2 + $0x120] sm:$0xff]
        %v466 = vld [vmem:[#allocation2 + $0x128] sm:$0xff]
        %v467 = vld [vmem:[#allocation2 + $0x138] sm:$0xff]
        %v468 = vld [vmem:[#allocation2 + $0x140] sm:$0xff]
        %v469 = vld [vmem:[#allocation2 + $0x150] sm:$0xff]
        %v470 = vld [vmem:[#allocation2 + $0x158] sm:$0xff]
        %v471 = vld [vmem:[#allocation2 + $0x168] sm:$0xff]
        %v472 = vld [vmem:[#allocation2 + $0x170] sm:$0xff]
        %473 = vst.msk [vmem:[#allocation3] sm:$0xff] %vm362, %v441
        %474 = vst.msk [vmem:[#allocation3 + $0x8] sm:$0xff] %vm362, %v442
        %475 = vst.msk [vmem:[#allocation3 + $0x10] sm:$0xff] %vm362, %v443
        %476 = vst.msk [vmem:[#allocation3 + $0x18] sm:$0xff] %vm362, %v444
        %477 = vst.msk [vmem:[#allocation3 + $0x20] sm:$0xff] %vm362, %v445
        %478 = vst.msk [vmem:[#allocation3 + $0x28] sm:$0xff] %vm362, %v446
        %479 = vst.msk [vmem:[#allocation3 + $0x30] sm:$0xff] %vm362, %v447
        %480 = vst.msk [vmem:[#allocation3 + $0x38] sm:$0xff] %vm362, %v448
        %481 = vst.msk [vmem:[#allocation3 + $0x40] sm:$0xff] %vm362, %v449
        %482 = vst.msk [vmem:[#allocation3 + $0x48] sm:$0xff] %vm362, %v450
        %483 = vst.msk [vmem:[#allocation3 + $0x50] sm:$0xff] %vm362, %v451
        %484 = vst.msk [vmem:[#allocation3 + $0x58] sm:$0xff] %vm362, %v452
        %485 = vst.msk [vmem:[#allocation3 + $0x60] sm:$0xff] %vm362, %v453
        %486 = vst.msk [vmem:[#allocation3 + $0x68] sm:$0xff] %vm362, %v454
        %487 = vst.msk [vmem:[#allocation3 + $0x70] sm:$0xff] %vm362, %v455
        %488 = vst.msk [vmem:[#allocation3 + $0x78] sm:$0xff] %vm362, %v456
        %489 = vst.msk [vmem:[#allocation3 + $0x80] sm:$0xff] %vm362, %v457
        %490 = vst.msk [vmem:[#allocation3 + $0x88] sm:$0xff] %vm362, %v458
        %491 = vst.msk [vmem:[#allocation3 + $0x90] sm:$0xff] %vm362, %v459
        %492 = vst.msk [vmem:[#allocation3 + $0x98] sm:$0xff] %vm362, %v460
        %493 = vst.msk [vmem:[#allocation3 + $0xa0] sm:$0xff] %vm362, %v461
        %494 = vst.msk [vmem:[#allocation3 + $0xa8] sm:$0xff] %vm362, %v462
        %495 = vst.msk [vmem:[#allocation3 + $0xb0] sm:$0xff] %vm362, %v463
        %496 = vst.msk [vmem:[#allocation3 + $0xb8] sm:$0xff] %vm362, %v464
        %497 = vst.msk [vmem:[#allocation3 + $0xc0] sm:$0xff] %vm362, %v465
        %498 = vst.msk [vmem:[#allocation3 + $0xc8] sm:$0xff] %vm362, %v466
        %499 = vst.msk [vmem:[#allocation3 + $0xd0] sm:$0xff] %vm362, %v467
        %500 = vst.msk [vmem:[#allocation3 + $0xd8] sm:$0xff] %vm362, %v468
        %501 = vst.msk [vmem:[#allocation3 + $0xe0] sm:$0xff] %vm362, %v469
        %502 = vst.msk [vmem:[#allocation3 + $0xe8] sm:$0xff] %vm362, %v470
        %503 = vst.msk [vmem:[#allocation3 + $0xf0] sm:$0xff] %vm362, %v471
        %504 = vst.msk [vmem:[#allocation3 + $0xf8] sm:$0xff] %vm362, %v472
        %v505 = vld [vmem:[#allocation2 + $0x1] sm:$0xff]
        %v506 = vld [vmem:[#allocation2 + $0x9] sm:$0xff]
        %v507 = vld [vmem:[#allocation2 + $0x19] sm:$0xff]
        %v508 = vld [vmem:[#allocation2 + $0x21] sm:$0xff]
        %v509 = vld [vmem:[#allocation2 + $0x31] sm:$0xff]
        %v510 = vld [vmem:[#allocation2 + $0x39] sm:$0xff]
        %v511 = vld [vmem:[#allocation2 + $0x49] sm:$0xff]
        %v512 = vld [vmem:[#allocation2 + $0x51] sm:$0xff]
        %v513 = vld [vmem:[#allocation2 + $0x61] sm:$0xff]
        %v514 = vld [vmem:[#allocation2 + $0x69] sm:$0xff]
        %v515 = vld [vmem:[#allocation2 + $0x79] sm:$0xff]
        %v516 = vld [vmem:[#allocation2 + $0x81] sm:$0xff]
        %v517 = vld [vmem:[#allocation2 + $0x91] sm:$0xff]
        %v518 = vld [vmem:[#allocation2 + $0x99] sm:$0xff]
        %v519 = vld [vmem:[#allocation2 + $0xa9] sm:$0xff]
        %v520 = vld [vmem:[#allocation2 + $0xb1] sm:$0xff]
        %v521 = vld [vmem:[#allocation2 + $0xc1] sm:$0xff]
        %v522 = vld [vmem:[#allocation2 + $0xc9] sm:$0xff]
        %v523 = vld [vmem:[#allocation2 + $0xd9] sm:$0xff]
        %v524 = vld [vmem:[#allocation2 + $0xe1] sm:$0xff]
        %v525 = vld [vmem:[#allocation2 + $0xf1] sm:$0xff]
        %v526 = vld [vmem:[#allocation2 + $0xf9] sm:$0xff]
        %v527 = vld [vmem:[#allocation2 + $0x109] sm:$0xff]
        %v528 = vld [vmem:[#allocation2 + $0x111] sm:$0xff]
        %v529 = vld [vmem:[#allocation2 + $0x121] sm:$0xff]
        %v530 = vld [vmem:[#allocation2 + $0x129] sm:$0xff]
        %v531 = vld [vmem:[#allocation2 + $0x139] sm:$0xff]
        %v532 = vld [vmem:[#allocation2 + $0x141] sm:$0xff]
        %v533 = vld [vmem:[#allocation2 + $0x151] sm:$0xff]
        %v534 = vld [vmem:[#allocation2 + $0x159] sm:$0xff]
        %v535 = vld [vmem:[#allocation2 + $0x169] sm:$0xff]
        %v536 = vld [vmem:[#allocation2 + $0x171] sm:$0xff]
        %569 = vrot.lane.b32.xlu0 %v505, 4
        %v570 = vpop.permute.xlu0 %569
        %571 = vrot.lane.b32.xlu0 %v506, 4
        %v572 = vpop.permute.xlu0 %571
        %573 = vrot.lane.b32.xlu0 %v507, 4
        %v574 = vpop.permute.xlu0 %573
        %575 = vrot.lane.b32.xlu0 %v508, 4
        %v576 = vpop.permute.xlu0 %575
        %577 = vrot.lane.b32.xlu0 %v509, 4
        %v578 = vpop.permute.xlu0 %577
        %579 = vrot.lane.b32.xlu0 %v510, 4
        %v580 = vpop.permute.xlu0 %579
        %581 = vrot.lane.b32.xlu0 %v511, 4
        %v582 = vpop.permute.xlu0 %581
        %583 = vrot.lane.b32.xlu0 %v512, 4
        %v584 = vpop.permute.xlu0 %583
        %585 = vrot.lane.b32.xlu0 %v513, 4
        %v586 = vpop.permute.xlu0 %585
        %587 = vrot.lane.b32.xlu0 %v514, 4
        %v588 = vpop.permute.xlu0 %587
        %589 = vrot.lane.b32.xlu0 %v515, 4
        %v590 = vpop.permute.xlu0 %589
        %591 = vrot.lane.b32.xlu0 %v516, 4
        %v592 = vpop.permute.xlu0 %591
        %593 = vrot.lane.b32.xlu0 %v517, 4
        %v594 = vpop.permute.xlu0 %593
        %595 = vrot.lane.b32.xlu0 %v518, 4
        %v596 = vpop.permute.xlu0 %595
        %597 = vrot.lane.b32.xlu0 %v519, 4
        %v598 = vpop.permute.xlu0 %597
        %599 = vrot.lane.b32.xlu0 %v520, 4
        %v600 = vpop.permute.xlu0 %599
        %601 = vrot.lane.b32.xlu0 %v521, 4
        %v602 = vpop.permute.xlu0 %601
        %603 = vrot.lane.b32.xlu0 %v522, 4
        %v604 = vpop.permute.xlu0 %603
        %605 = vrot.lane.b32.xlu0 %v523, 4
        %v606 = vpop.permute.xlu0 %605
        %607 = vrot.lane.b32.xlu0 %v524, 4
        %v608 = vpop.permute.xlu0 %607
        %609 = vrot.lane.b32.xlu0 %v525, 4
        %v610 = vpop.permute.xlu0 %609
        %611 = vrot.lane.b32.xlu0 %v526, 4
        %v612 = vpop.permute.xlu0 %611
        %613 = vrot.lane.b32.xlu0 %v527, 4
        %v614 = vpop.permute.xlu0 %613
        %615 = vrot.lane.b32.xlu0 %v528, 4
        %v616 = vpop.permute.xlu0 %615
        %617 = vrot.lane.b32.xlu0 %v529, 4
        %v618 = vpop.permute.xlu0 %617
        %619 = vrot.lane.b32.xlu0 %v530, 4
        %v620 = vpop.permute.xlu0 %619
        %621 = vrot.lane.b32.xlu0 %v531, 4
        %v622 = vpop.permute.xlu0 %621
        %623 = vrot.lane.b32.xlu0 %v532, 4
        %v624 = vpop.permute.xlu0 %623
        %625 = vrot.lane.b32.xlu0 %v533, 4
        %v626 = vpop.permute.xlu0 %625
        %627 = vrot.lane.b32.xlu0 %v534, 4
        %v628 = vpop.permute.xlu0 %627
        %629 = vrot.lane.b32.xlu0 %v535, 4
        %v630 = vpop.permute.xlu0 %629
        %631 = vrot.lane.b32.xlu0 %v536, 4
        %v632 = vpop.permute.xlu0 %631
        %vm665 = vcmask 64544
        %666 = vst.msk [vmem:[#allocation3] sm:$0xff] %vm665, %v570
        %667 = vst.msk [vmem:[#allocation3 + $0x8] sm:$0xff] %vm665, %v572
        %668 = vst.msk [vmem:[#allocation3 + $0x10] sm:$0xff] %vm665, %v574
        %669 = vst.msk [vmem:[#allocation3 + $0x18] sm:$0xff] %vm665, %v576
        %670 = vst.msk [vmem:[#allocation3 + $0x20] sm:$0xff] %vm665, %v578
        %671 = vst.msk [vmem:[#allocation3 + $0x28] sm:$0xff] %vm665, %v580
        %672 = vst.msk [vmem:[#allocation3 + $0x30] sm:$0xff] %vm665, %v582
        %673 = vst.msk [vmem:[#allocation3 + $0x38] sm:$0xff] %vm665, %v584
        %674 = vst.msk [vmem:[#allocation3 + $0x40] sm:$0xff] %vm665, %v586
        %675 = vst.msk [vmem:[#allocation3 + $0x48] sm:$0xff] %vm665, %v588
        %676 = vst.msk [vmem:[#allocation3 + $0x50] sm:$0xff] %vm665, %v590
        %677 = vst.msk [vmem:[#allocation3 + $0x58] sm:$0xff] %vm665, %v592
        %678 = vst.msk [vmem:[#allocation3 + $0x60] sm:$0xff] %vm665, %v594
        %679 = vst.msk [vmem:[#allocation3 + $0x68] sm:$0xff] %vm665, %v596
        %680 = vst.msk [vmem:[#allocation3 + $0x70] sm:$0xff] %vm665, %v598
        %681 = vst.msk [vmem:[#allocation3 + $0x78] sm:$0xff] %vm665, %v600
        %682 = vst.msk [vmem:[#allocation3 + $0x80] sm:$0xff] %vm665, %v602
        %683 = vst.msk [vmem:[#allocation3 + $0x88] sm:$0xff] %vm665, %v604
        %684 = vst.msk [vmem:[#allocation3 + $0x90] sm:$0xff] %vm665, %v606
        %685 = vst.msk [vmem:[#allocation3 + $0x98] sm:$0xff] %vm665, %v608
        %686 = vst.msk [vmem:[#allocation3 + $0xa0] sm:$0xff] %vm665, %v610
        %687 = vst.msk [vmem:[#allocation3 + $0xa8] sm:$0xff] %vm665, %v612
        %688 = vst.msk [vmem:[#allocation3 + $0xb0] sm:$0xff] %vm665, %v614
        %689 = vst.msk [vmem:[#allocation3 + $0xb8] sm:$0xff] %vm665, %v616
        %690 = vst.msk [vmem:[#allocation3 + $0xc0] sm:$0xff] %vm665, %v618
        %691 = vst.msk [vmem:[#allocation3 + $0xc8] sm:$0xff] %vm665, %v620
        %692 = vst.msk [vmem:[#allocation3 + $0xd0] sm:$0xff] %vm665, %v622
        %693 = vst.msk [vmem:[#allocation3 + $0xd8] sm:$0xff] %vm665, %v624
        %694 = vst.msk [vmem:[#allocation3 + $0xe0] sm:$0xff] %vm665, %v626
        %695 = vst.msk [vmem:[#allocation3 + $0xe8] sm:$0xff] %vm665, %v628
        %696 = vst.msk [vmem:[#allocation3 + $0xf0] sm:$0xff] %vm665, %v630
        %697 = vst.msk [vmem:[#allocation3 + $0xf8] sm:$0xff] %vm665, %v632
        %v698 = vld [vmem:[#allocation2 + $0x2] sm:$0xff]
        %v699 = vld [vmem:[#allocation2 + $0xa] sm:$0xff]
        %v700 = vld [vmem:[#allocation2 + $0x1a] sm:$0xff]
        %v701 = vld [vmem:[#allocation2 + $0x22] sm:$0xff]
        %v702 = vld [vmem:[#allocation2 + $0x32] sm:$0xff]
        %v703 = vld [vmem:[#allocation2 + $0x3a] sm:$0xff]
        %v704 = vld [vmem:[#allocation2 + $0x4a] sm:$0xff]
        %v705 = vld [vmem:[#allocation2 + $0x52] sm:$0xff]
        %v706 = vld [vmem:[#allocation2 + $0x62] sm:$0xff]
        %v707 = vld [vmem:[#allocation2 + $0x6a] sm:$0xff]
        %v708 = vld [vmem:[#allocation2 + $0x7a] sm:$0xff]
        %v709 = vld [vmem:[#allocation2 + $0x82] sm:$0xff]
        %v710 = vld [vmem:[#allocation2 + $0x92] sm:$0xff]
        %v711 = vld [vmem:[#allocation2 + $0x9a] sm:$0xff]
        %v712 = vld [vmem:[#allocation2 + $0xaa] sm:$0xff]
        %v713 = vld [vmem:[#allocation2 + $0xb2] sm:$0xff]
        %v714 = vld [vmem:[#allocation2 + $0xc2] sm:$0xff]
        %v715 = vld [vmem:[#allocation2 + $0xca] sm:$0xff]
        %v716 = vld [vmem:[#allocation2 + $0xda] sm:$0xff]
        %v717 = vld [vmem:[#allocation2 + $0xe2] sm:$0xff]
        %v718 = vld [vmem:[#allocation2 + $0xf2] sm:$0xff]
        %v719 = vld [vmem:[#allocation2 + $0xfa] sm:$0xff]
        %v720 = vld [vmem:[#allocation2 + $0x10a] sm:$0xff]
        %v721 = vld [vmem:[#allocation2 + $0x112] sm:$0xff]
        %v722 = vld [vmem:[#allocation2 + $0x122] sm:$0xff]
        %v723 = vld [vmem:[#allocation2 + $0x12a] sm:$0xff]
        %v724 = vld [vmem:[#allocation2 + $0x13a] sm:$0xff]
        %v725 = vld [vmem:[#allocation2 + $0x142] sm:$0xff]
        %v726 = vld [vmem:[#allocation2 + $0x152] sm:$0xff]
        %v727 = vld [vmem:[#allocation2 + $0x15a] sm:$0xff]
        %v728 = vld [vmem:[#allocation2 + $0x16a] sm:$0xff]
        %v729 = vld [vmem:[#allocation2 + $0x172] sm:$0xff]
        %762 = vrot.lane.b32.xlu0 %v698, 8
        %v763 = vpop.permute.xlu0 %762
        %764 = vrot.lane.b32.xlu0 %v699, 8
        %v765 = vpop.permute.xlu0 %764
        %766 = vrot.lane.b32.xlu0 %v700, 8
        %v767 = vpop.permute.xlu0 %766
        %768 = vrot.lane.b32.xlu0 %v701, 8
        %v769 = vpop.permute.xlu0 %768
        %770 = vrot.lane.b32.xlu0 %v702, 8
        %v771 = vpop.permute.xlu0 %770
        %772 = vrot.lane.b32.xlu0 %v703, 8
        %v773 = vpop.permute.xlu0 %772
        %774 = vrot.lane.b32.xlu0 %v704, 8
        %v775 = vpop.permute.xlu0 %774
        %776 = vrot.lane.b32.xlu0 %v705, 8
        %v777 = vpop.permute.xlu0 %776
        %778 = vrot.lane.b32.xlu0 %v706, 8
        %v779 = vpop.permute.xlu0 %778
        %780 = vrot.lane.b32.xlu0 %v707, 8
        %v781 = vpop.permute.xlu0 %780
        %782 = vrot.lane.b32.xlu0 %v708, 8
        %v783 = vpop.permute.xlu0 %782
        %784 = vrot.lane.b32.xlu0 %v709, 8
        %v785 = vpop.permute.xlu0 %784
        %786 = vrot.lane.b32.xlu0 %v710, 8
        %v787 = vpop.permute.xlu0 %786
        %788 = vrot.lane.b32.xlu0 %v711, 8
        %v789 = vpop.permute.xlu0 %788
        %790 = vrot.lane.b32.xlu0 %v712, 8
        %v791 = vpop.permute.xlu0 %790
        %792 = vrot.lane.b32.xlu0 %v713, 8
        %v793 = vpop.permute.xlu0 %792
        %794 = vrot.lane.b32.xlu0 %v714, 8
        %v795 = vpop.permute.xlu0 %794
        %796 = vrot.lane.b32.xlu0 %v715, 8
        %v797 = vpop.permute.xlu0 %796
        %798 = vrot.lane.b32.xlu0 %v716, 8
        %v799 = vpop.permute.xlu0 %798
        %800 = vrot.lane.b32.xlu0 %v717, 8
        %v801 = vpop.permute.xlu0 %800
        %802 = vrot.lane.b32.xlu0 %v718, 8
        %v803 = vpop.permute.xlu0 %802
        %804 = vrot.lane.b32.xlu0 %v719, 8
        %v805 = vpop.permute.xlu0 %804
        %806 = vrot.lane.b32.xlu0 %v720, 8
        %v807 = vpop.permute.xlu0 %806
        %808 = vrot.lane.b32.xlu0 %v721, 8
        %v809 = vpop.permute.xlu0 %808
        %810 = vrot.lane.b32.xlu0 %v722, 8
        %v811 = vpop.permute.xlu0 %810
        %812 = vrot.lane.b32.xlu0 %v723, 8
        %v813 = vpop.permute.xlu0 %812
        %814 = vrot.lane.b32.xlu0 %v724, 8
        %v815 = vpop.permute.xlu0 %814
        %816 = vrot.lane.b32.xlu0 %v725, 8
        %v817 = vpop.permute.xlu0 %816
        %818 = vrot.lane.b32.xlu0 %v726, 8
        %v819 = vpop.permute.xlu0 %818
        %820 = vrot.lane.b32.xlu0 %v727, 8
        %v821 = vpop.permute.xlu0 %820
        %822 = vrot.lane.b32.xlu0 %v728, 8
        %v823 = vpop.permute.xlu0 %822
        %824 = vrot.lane.b32.xlu0 %v729, 8
        %v825 = vpop.permute.xlu0 %824
        %vm858 = vcmask 97344
        %859 = vst.msk [vmem:[#allocation3] sm:$0xff] %vm858, %v763
        %860 = vst.msk [vmem:[#allocation3 + $0x8] sm:$0xff] %vm858, %v765
        %861 = vst.msk [vmem:[#allocation3 + $0x10] sm:$0xff] %vm858, %v767
        %862 = vst.msk [vmem:[#allocation3 + $0x18] sm:$0xff] %vm858, %v769
        %863 = vst.msk [vmem:[#allocation3 + $0x20] sm:$0xff] %vm858, %v771
        %864 = vst.msk [vmem:[#allocation3 + $0x28] sm:$0xff] %vm858, %v773
        %865 = vst.msk [vmem:[#allocation3 + $0x30] sm:$0xff] %vm858, %v775
        %866 = vst.msk [vmem:[#allocation3 + $0x38] sm:$0xff] %vm858, %v777
        %867 = vst.msk [vmem:[#allocation3 + $0x40] sm:$0xff] %vm858, %v779
        %868 = vst.msk [vmem:[#allocation3 + $0x48] sm:$0xff] %vm858, %v781
        %869 = vst.msk [vmem:[#allocation3 + $0x50] sm:$0xff] %vm858, %v783
        %870 = vst.msk [vmem:[#allocation3 + $0x58] sm:$0xff] %vm858, %v785
        %871 = vst.msk [vmem:[#allocation3 + $0x60] sm:$0xff] %vm858, %v787
        %872 = vst.msk [vmem:[#allocation3 + $0x68] sm:$0xff] %vm858, %v789
        %873 = vst.msk [vmem:[#allocation3 + $0x70] sm:$0xff] %vm858, %v791
        %874 = vst.msk [vmem:[#allocation3 + $0x78] sm:$0xff] %vm858, %v793
        %875 = vst.msk [vmem:[#allocation3 + $0x80] sm:$0xff] %vm858, %v795
        %876 = vst.msk [vmem:[#allocation3 + $0x88] sm:$0xff] %vm858, %v797
        %877 = vst.msk [vmem:[#allocation3 + $0x90] sm:$0xff] %vm858, %v799
        %878 = vst.msk [vmem:[#allocation3 + $0x98] sm:$0xff] %vm858, %v801
        %879 = vst.msk [vmem:[#allocation3 + $0xa0] sm:$0xff] %vm858, %v803
        %880 = vst.msk [vmem:[#allocation3 + $0xa8] sm:$0xff] %vm858, %v805
        %881 = vst.msk [vmem:[#allocation3 + $0xb0] sm:$0xff] %vm858, %v807
        %882 = vst.msk [vmem:[#allocation3 + $0xb8] sm:$0xff] %vm858, %v809
        %883 = vst.msk [vmem:[#allocation3 + $0xc0] sm:$0xff] %vm858, %v811
        %884 = vst.msk [vmem:[#allocation3 + $0xc8] sm:$0xff] %vm858, %v813
        %885 = vst.msk [vmem:[#allocation3 + $0xd0] sm:$0xff] %vm858, %v815
        %886 = vst.msk [vmem:[#allocation3 + $0xd8] sm:$0xff] %vm858, %v817
        %887 = vst.msk [vmem:[#allocation3 + $0xe0] sm:$0xff] %vm858, %v819
        %888 = vst.msk [vmem:[#allocation3 + $0xe8] sm:$0xff] %vm858, %v821
        %889 = vst.msk [vmem:[#allocation3 + $0xf0] sm:$0xff] %vm858, %v823
        %890 = vst.msk [vmem:[#allocation3 + $0xf8] sm:$0xff] %vm858, %v825
        %v891 = vld [vmem:[%s408] sm:$0xff]
        %v892 = vld [vmem:[%s408 + $0x8] sm:$0xff]
        %v893 = vld [vmem:[%s408 + $0x18] sm:$0xff]
        %v894 = vld [vmem:[%s408 + $0x20] sm:$0xff]
        %v895 = vld [vmem:[%s408 + $0x30] sm:$0xff]
        %v896 = vld [vmem:[%s408 + $0x38] sm:$0xff]
        %v897 = vld [vmem:[%s408 + $0x48] sm:$0xff]
        %v898 = vld [vmem:[%s408 + $0x50] sm:$0xff]
        %v899 = vld [vmem:[%s408 + $0x60] sm:$0xff]
        %v900 = vld [vmem:[%s408 + $0x68] sm:$0xff]
        %v901 = vld [vmem:[%s408 + $0x78] sm:$0xff]
        %v902 = vld [vmem:[%s408 + $0x80] sm:$0xff]
        %v903 = vld [vmem:[%s408 + $0x90] sm:$0xff]
        %v904 = vld [vmem:[%s408 + $0x98] sm:$0xff]
        %v905 = vld [vmem:[%s408 + $0xa8] sm:$0xff]
        %v906 = vld [vmem:[%s408 + $0xb0] sm:$0xff]
        %v907 = vld [vmem:[%s408 + $0xc0] sm:$0xff]
        %v908 = vld [vmem:[%s408 + $0xc8] sm:$0xff]
        %v909 = vld [vmem:[%s408 + $0xd8] sm:$0xff]
        %v910 = vld [vmem:[%s408 + $0xe0] sm:$0xff]
        %v911 = vld [vmem:[%s408 + $0xf0] sm:$0xff]
        %v912 = vld [vmem:[%s408 + $0xf8] sm:$0xff]
        %v913 = vld [vmem:[%s408 + $0x108] sm:$0xff]
        %v914 = vld [vmem:[%s408 + $0x110] sm:$0xff]
        %v915 = vld [vmem:[%s408 + $0x120] sm:$0xff]
        %v916 = vld [vmem:[%s408 + $0x128] sm:$0xff]
        %v917 = vld [vmem:[%s408 + $0x138] sm:$0xff]
        %v918 = vld [vmem:[%s408 + $0x140] sm:$0xff]
        %v919 = vld [vmem:[%s408 + $0x150] sm:$0xff]
        %v920 = vld [vmem:[%s408 + $0x158] sm:$0xff]
        %v921 = vld [vmem:[%s408 + $0x168] sm:$0xff]
        %v922 = vld [vmem:[%s408 + $0x170] sm:$0xff]
        %955 = vrot.lane.b32.xlu0 %v891, 12
        %v956 = vpop.permute.xlu0 %955
        %957 = vrot.lane.b32.xlu0 %v892, 12
        %v958 = vpop.permute.xlu0 %957
        %959 = vrot.lane.b32.xlu0 %v893, 12
        %v960 = vpop.permute.xlu0 %959
        %961 = vrot.lane.b32.xlu0 %v894, 12
        %v962 = vpop.permute.xlu0 %961
        %963 = vrot.lane.b32.xlu0 %v895, 12
        %v964 = vpop.permute.xlu0 %963
        %965 = vrot.lane.b32.xlu0 %v896, 12
        %v966 = vpop.permute.xlu0 %965
        %967 = vrot.lane.b32.xlu0 %v897, 12
        %v968 = vpop.permute.xlu0 %967
        %969 = vrot.lane.b32.xlu0 %v898, 12
        %v970 = vpop.permute.xlu0 %969
        %971 = vrot.lane.b32.xlu0 %v899, 12
        %v972 = vpop.permute.xlu0 %971
        %973 = vrot.lane.b32.xlu0 %v900, 12
        %v974 = vpop.permute.xlu0 %973
        %975 = vrot.lane.b32.xlu0 %v901, 12
        %v976 = vpop.permute.xlu0 %975
        %977 = vrot.lane.b32.xlu0 %v902, 12
        %v978 = vpop.permute.xlu0 %977
        %979 = vrot.lane.b32.xlu0 %v903, 12
        %v980 = vpop.permute.xlu0 %979
        %981 = vrot.lane.b32.xlu0 %v904, 12
        %v982 = vpop.permute.xlu0 %981
        %983 = vrot.lane.b32.xlu0 %v905, 12
        %v984 = vpop.permute.xlu0 %983
        %985 = vrot.lane.b32.xlu0 %v906, 12
        %v986 = vpop.permute.xlu0 %985
        %987 = vrot.lane.b32.xlu0 %v907, 12
        %v988 = vpop.permute.xlu0 %987
        %989 = vrot.lane.b32.xlu0 %v908, 12
        %v990 = vpop.permute.xlu0 %989
        %991 = vrot.lane.b32.xlu0 %v909, 12
        %v992 = vpop.permute.xlu0 %991
        %993 = vrot.lane.b32.xlu0 %v910, 12
        %v994 = vpop.permute.xlu0 %993
        %995 = vrot.lane.b32.xlu0 %v911, 12
        %v996 = vpop.permute.xlu0 %995
        %997 = vrot.lane.b32.xlu0 %v912, 12
        %v998 = vpop.permute.xlu0 %997
        %999 = vrot.lane.b32.xlu0 %v913, 12
        %v1000 = vpop.permute.xlu0 %999
        %1001 = vrot.lane.b32.xlu0 %v914, 12
        %v1002 = vpop.permute.xlu0 %1001
        %1003 = vrot.lane.b32.xlu0 %v915, 12
        %v1004 = vpop.permute.xlu0 %1003
        %1005 = vrot.lane.b32.xlu0 %v916, 12
        %v1006 = vpop.permute.xlu0 %1005
        %1007 = vrot.lane.b32.xlu0 %v917, 12
        %v1008 = vpop.permute.xlu0 %1007
        %1009 = vrot.lane.b32.xlu0 %v918, 12
        %v1010 = vpop.permute.xlu0 %1009
        %1011 = vrot.lane.b32.xlu0 %v919, 12
        %v1012 = vpop.permute.xlu0 %1011
        %1013 = vrot.lane.b32.xlu0 %v920, 12
        %v1014 = vpop.permute.xlu0 %1013
        %1015 = vrot.lane.b32.xlu0 %v921, 12
        %v1016 = vpop.permute.xlu0 %1015
        %1017 = vrot.lane.b32.xlu0 %v922, 12
        %v1018 = vpop.permute.xlu0 %1017
        %vm1051 = vcmask 130144
        %1052 = vst.msk [vmem:[#allocation3] sm:$0xff] %vm1051, %v956
        %1053 = vst.msk [vmem:[#allocation3 + $0x8] sm:$0xff] %vm1051, %v958
        %1054 = vst.msk [vmem:[#allocation3 + $0x10] sm:$0xff] %vm1051, %v960
        %1055 = vst.msk [vmem:[#allocation3 + $0x18] sm:$0xff] %vm1051, %v962
        %1056 = vst.msk [vmem:[#allocation3 + $0x20] sm:$0xff] %vm1051, %v964
        %1057 = vst.msk [vmem:[#allocation3 + $0x28] sm:$0xff] %vm1051, %v966
        %1058 = vst.msk [vmem:[#allocation3 + $0x30] sm:$0xff] %vm1051, %v968
        %1059 = vst.msk [vmem:[#allocation3 + $0x38] sm:$0xff] %vm1051, %v970
        %1060 = vst.msk [vmem:[#allocation3 + $0x40] sm:$0xff] %vm1051, %v972
        %1061 = vst.msk [vmem:[#allocation3 + $0x48] sm:$0xff] %vm1051, %v974
        %1062 = vst.msk [vmem:[#allocation3 + $0x50] sm:$0xff] %vm1051, %v976
        %1063 = vst.msk [vmem:[#allocation3 + $0x58] sm:$0xff] %vm1051, %v978
        %1064 = vst.msk [vmem:[#allocation3 + $0x60] sm:$0xff] %vm1051, %v980
        %1065 = vst.msk [vmem:[#allocation3 + $0x68] sm:$0xff] %vm1051, %v982
        %1066 = vst.msk [vmem:[#allocation3 + $0x70] sm:$0xff] %vm1051, %v984
        %1067 = vst.msk [vmem:[#allocation3 + $0x78] sm:$0xff] %vm1051, %v986
        %1068 = vst.msk [vmem:[#allocation3 + $0x80] sm:$0xff] %vm1051, %v988
        %1069 = vst.msk [vmem:[#allocation3 + $0x88] sm:$0xff] %vm1051, %v990
        %1070 = vst.msk [vmem:[#allocation3 + $0x90] sm:$0xff] %vm1051, %v992
        %1071 = vst.msk [vmem:[#allocation3 + $0x98] sm:$0xff] %vm1051, %v994
        %1072 = vst.msk [vmem:[#allocation3 + $0xa0] sm:$0xff] %vm1051, %v996
        %1073 = vst.msk [vmem:[#allocation3 + $0xa8] sm:$0xff] %vm1051, %v998
        %1074 = vst.msk [vmem:[#allocation3 + $0xb0] sm:$0xff] %vm1051, %v1000
        %1075 = vst.msk [vmem:[#allocation3 + $0xb8] sm:$0xff] %vm1051, %v1002
        %1076 = vst.msk [vmem:[#allocation3 + $0xc0] sm:$0xff] %vm1051, %v1004
        %1077 = vst.msk [vmem:[#allocation3 + $0xc8] sm:$0xff] %vm1051, %v1006
        %1078 = vst.msk [vmem:[#allocation3 + $0xd0] sm:$0xff] %vm1051, %v1008
        %1079 = vst.msk [vmem:[#allocation3 + $0xd8] sm:$0xff] %vm1051, %v1010
        %1080 = vst.msk [vmem:[#allocation3 + $0xe0] sm:$0xff] %vm1051, %v1012
        %1081 = vst.msk [vmem:[#allocation3 + $0xe8] sm:$0xff] %vm1051, %v1014
        %1082 = vst.msk [vmem:[#allocation3 + $0xf0] sm:$0xff] %vm1051, %v1016
        %1083 = vst.msk [vmem:[#allocation3 + $0xf8] sm:$0xff] %vm1051, %v1018
        %v1084 = vld [vmem:[%s408 + $0x1] sm:$0xff]
        %v1085 = vld [vmem:[%s408 + $0x9] sm:$0xff]
        %v1086 = vld [vmem:[%s408 + $0x19] sm:$0xff]
        %v1087 = vld [vmem:[%s408 + $0x21] sm:$0xff]
        %v1088 = vld [vmem:[%s408 + $0x31] sm:$0xff]
        %v1089 = vld [vmem:[%s408 + $0x39] sm:$0xff]
        %v1090 = vld [vmem:[%s408 + $0x49] sm:$0xff]
        %v1091 = vld [vmem:[%s408 + $0x51] sm:$0xff]
        %v1092 = vld [vmem:[%s408 + $0x61] sm:$0xff]
        %v1093 = vld [vmem:[%s408 + $0x69] sm:$0xff]
        %v1094 = vld [vmem:[%s408 + $0x79] sm:$0xff]
        %v1095 = vld [vmem:[%s408 + $0x81] sm:$0xff]
        %v1096 = vld [vmem:[%s408 + $0x91] sm:$0xff]
        %v1097 = vld [vmem:[%s408 + $0x99] sm:$0xff]
        %v1098 = vld [vmem:[%s408 + $0xa9] sm:$0xff]
        %v1099 = vld [vmem:[%s408 + $0xb1] sm:$0xff]
        %v1100 = vld [vmem:[%s408 + $0xc1] sm:$0xff]
        %v1101 = vld [vmem:[%s408 + $0xc9] sm:$0xff]
        %v1102 = vld [vmem:[%s408 + $0xd9] sm:$0xff]
        %v1103 = vld [vmem:[%s408 + $0xe1] sm:$0xff]
        %v1104 = vld [vmem:[%s408 + $0xf1] sm:$0xff]
        %v1105 = vld [vmem:[%s408 + $0xf9] sm:$0xff]
        %v1106 = vld [vmem:[%s408 + $0x109] sm:$0xff]
        %v1107 = vld [vmem:[%s408 + $0x111] sm:$0xff]
        %v1108 = vld [vmem:[%s408 + $0x121] sm:$0xff]
        %v1109 = vld [vmem:[%s408 + $0x129] sm:$0xff]
        %v1110 = vld [vmem:[%s408 + $0x139] sm:$0xff]
        %v1111 = vld [vmem:[%s408 + $0x141] sm:$0xff]
        %v1112 = vld [vmem:[%s408 + $0x151] sm:$0xff]
        %v1113 = vld [vmem:[%s408 + $0x159] sm:$0xff]
        %v1114 = vld [vmem:[%s408 + $0x169] sm:$0xff]
        %v1115 = vld [vmem:[%s408 + $0x171] sm:$0xff]
        %1148 = vrot.lane.b32.xlu0 %v1084, 16
        %v1149 = vpop.permute.xlu0 %1148
        %1150 = vrot.lane.b32.xlu0 %v1085, 16
        %v1151 = vpop.permute.xlu0 %1150
        %1152 = vrot.lane.b32.xlu0 %v1086, 16
        %v1153 = vpop.permute.xlu0 %1152
        %1154 = vrot.lane.b32.xlu0 %v1087, 16
        %v1155 = vpop.permute.xlu0 %1154
        %1156 = vrot.lane.b32.xlu0 %v1088, 16
        %v1157 = vpop.permute.xlu0 %1156
        %1158 = vrot.lane.b32.xlu0 %v1089, 16
        %v1159 = vpop.permute.xlu0 %1158
        %1160 = vrot.lane.b32.xlu0 %v1090, 16
        %v1161 = vpop.permute.xlu0 %1160
        %1162 = vrot.lane.b32.xlu0 %v1091, 16
        %v1163 = vpop.permute.xlu0 %1162
        %1164 = vrot.lane.b32.xlu0 %v1092, 16
        %v1165 = vpop.permute.xlu0 %1164
        %1166 = vrot.lane.b32.xlu0 %v1093, 16
        %v1167 = vpop.permute.xlu0 %1166
        %1168 = vrot.lane.b32.xlu0 %v1094, 16
        %v1169 = vpop.permute.xlu0 %1168
        %1170 = vrot.lane.b32.xlu0 %v1095, 16
        %v1171 = vpop.permute.xlu0 %1170
        %1172 = vrot.lane.b32.xlu0 %v1096, 16
        %v1173 = vpop.permute.xlu0 %1172
        %1174 = vrot.lane.b32.xlu0 %v1097, 16
        %v1175 = vpop.permute.xlu0 %1174
        %1176 = vrot.lane.b32.xlu0 %v1098, 16
        %v1177 = vpop.permute.xlu0 %1176
        %1178 = vrot.lane.b32.xlu0 %v1099, 16
        %v1179 = vpop.permute.xlu0 %1178
        %1180 = vrot.lane.b32.xlu0 %v1100, 16
        %v1181 = vpop.permute.xlu0 %1180
        %1182 = vrot.lane.b32.xlu0 %v1101, 16
        %v1183 = vpop.permute.xlu0 %1182
        %1184 = vrot.lane.b32.xlu0 %v1102, 16
        %v1185 = vpop.permute.xlu0 %1184
        %1186 = vrot.lane.b32.xlu0 %v1103, 16
        %v1187 = vpop.permute.xlu0 %1186
        %1188 = vrot.lane.b32.xlu0 %v1104, 16
        %v1189 = vpop.permute.xlu0 %1188
        %1190 = vrot.lane.b32.xlu0 %v1105, 16
        %v1191 = vpop.permute.xlu0 %1190
        %1192 = vrot.lane.b32.xlu0 %v1106, 16
        %v1193 = vpop.permute.xlu0 %1192
        %1194 = vrot.lane.b32.xlu0 %v1107, 16
        %v1195 = vpop.permute.xlu0 %1194
        %1196 = vrot.lane.b32.xlu0 %v1108, 16
        %v1197 = vpop.permute.xlu0 %1196
        %1198 = vrot.lane.b32.xlu0 %v1109, 16
        %v1199 = vpop.permute.xlu0 %1198
        %1200 = vrot.lane.b32.xlu0 %v1110, 16
        %v1201 = vpop.permute.xlu0 %1200
        %1202 = vrot.lane.b32.xlu0 %v1111, 16
        %v1203 = vpop.permute.xlu0 %1202
        %1204 = vrot.lane.b32.xlu0 %v1112, 16
        %v1205 = vpop.permute.xlu0 %1204
        %1206 = vrot.lane.b32.xlu0 %v1113, 16
        %v1207 = vpop.permute.xlu0 %1206
        %1208 = vrot.lane.b32.xlu0 %v1114, 16
        %v1209 = vpop.permute.xlu0 %1208
        %1210 = vrot.lane.b32.xlu0 %v1115, 16
        %v1211 = vpop.permute.xlu0 %1210
        %vm1244 = vcmask 162944
        %1245 = vst.msk [vmem:[#allocation3] sm:$0xff] %vm1244, %v1149
        %1246 = vst.msk [vmem:[#allocation3 + $0x8] sm:$0xff] %vm1244, %v1151
        %1247 = vst.msk [vmem:[#allocation3 + $0x10] sm:$0xff] %vm1244, %v1153
        %1248 = vst.msk [vmem:[#allocation3 + $0x18] sm:$0xff] %vm1244, %v1155
        %1249 = vst.msk [vmem:[#allocation3 + $0x20] sm:$0xff] %vm1244, %v1157
        %1250 = vst.msk [vmem:[#allocation3 + $0x28] sm:$0xff] %vm1244, %v1159
        %1251 = vst.msk [vmem:[#allocation3 + $0x30] sm:$0xff] %vm1244, %v1161
        %1252 = vst.msk [vmem:[#allocation3 + $0x38] sm:$0xff] %vm1244, %v1163
        %1253 = vst.msk [vmem:[#allocation3 + $0x40] sm:$0xff] %vm1244, %v1165
        %1254 = vst.msk [vmem:[#allocation3 + $0x48] sm:$0xff] %vm1244, %v1167
        %1255 = vst.msk [vmem:[#allocation3 + $0x50] sm:$0xff] %vm1244, %v1169
        %1256 = vst.msk [vmem:[#allocation3 + $0x58] sm:$0xff] %vm1244, %v1171
        %1257 = vst.msk [vmem:[#allocation3 + $0x60] sm:$0xff] %vm1244, %v1173
        %1258 = vst.msk [vmem:[#allocation3 + $0x68] sm:$0xff] %vm1244, %v1175
        %1259 = vst.msk [vmem:[#allocation3 + $0x70] sm:$0xff] %vm1244, %v1177
        %1260 = vst.msk [vmem:[#allocation3 + $0x78] sm:$0xff] %vm1244, %v1179
        %1261 = vst.msk [vmem:[#allocation3 + $0x80] sm:$0xff] %vm1244, %v1181
        %1262 = vst.msk [vmem:[#allocation3 + $0x88] sm:$0xff] %vm1244, %v1183
        %1263 = vst.msk [vmem:[#allocation3 + $0x90] sm:$0xff] %vm1244, %v1185
        %1264 = vst.msk [vmem:[#allocation3 + $0x98] sm:$0xff] %vm1244, %v1187
        %1265 = vst.msk [vmem:[#allocation3 + $0xa0] sm:$0xff] %vm1244, %v1189
        %1266 = vst.msk [vmem:[#allocation3 + $0xa8] sm:$0xff] %vm1244, %v1191
        %1267 = vst.msk [vmem:[#allocation3 + $0xb0] sm:$0xff] %vm1244, %v1193
        %1268 = vst.msk [vmem:[#allocation3 + $0xb8] sm:$0xff] %vm1244, %v1195
        %1269 = vst.msk [vmem:[#allocation3 + $0xc0] sm:$0xff] %vm1244, %v1197
        %1270 = vst.msk [vmem:[#allocation3 + $0xc8] sm:$0xff] %vm1244, %v1199
        %1271 = vst.msk [vmem:[#allocation3 + $0xd0] sm:$0xff] %vm1244, %v1201
        %1272 = vst.msk [vmem:[#allocation3 + $0xd8] sm:$0xff] %vm1244, %v1203
        %1273 = vst.msk [vmem:[#allocation3 + $0xe0] sm:$0xff] %vm1244, %v1205
        %1274 = vst.msk [vmem:[#allocation3 + $0xe8] sm:$0xff] %vm1244, %v1207
        %1275 = vst.msk [vmem:[#allocation3 + $0xf0] sm:$0xff] %vm1244, %v1209
        %1276 = vst.msk [vmem:[#allocation3 + $0xf8] sm:$0xff] %vm1244, %v1211
        %v1277 = vld [vmem:[%s408 + $0x2] sm:$0xff]
        %v1278 = vld [vmem:[%s408 + $0xa] sm:$0xff]
        %v1279 = vld [vmem:[%s408 + $0x1a] sm:$0xff]
        %v1280 = vld [vmem:[%s408 + $0x22] sm:$0xff]
        %v1281 = vld [vmem:[%s408 + $0x32] sm:$0xff]
        %v1282 = vld [vmem:[%s408 + $0x3a] sm:$0xff]
        %v1283 = vld [vmem:[%s408 + $0x4a] sm:$0xff]
        %v1284 = vld [vmem:[%s408 + $0x52] sm:$0xff]
        %v1285 = vld [vmem:[%s408 + $0x62] sm:$0xff]
        %v1286 = vld [vmem:[%s408 + $0x6a] sm:$0xff]
        %v1287 = vld [vmem:[%s408 + $0x7a] sm:$0xff]
        %v1288 = vld [vmem:[%s408 + $0x82] sm:$0xff]
        %v1289 = vld [vmem:[%s408 + $0x92] sm:$0xff]
        %v1290 = vld [vmem:[%s408 + $0x9a] sm:$0xff]
        %v1291 = vld [vmem:[%s408 + $0xaa] sm:$0xff]
        %v1292 = vld [vmem:[%s408 + $0xb2] sm:$0xff]
        %v1293 = vld [vmem:[%s408 + $0xc2] sm:$0xff]
        %v1294 = vld [vmem:[%s408 + $0xca] sm:$0xff]
        %v1295 = vld [vmem:[%s408 + $0xda] sm:$0xff]
        %v1296 = vld [vmem:[%s408 + $0xe2] sm:$0xff]
        %v1297 = vld [vmem:[%s408 + $0xf2] sm:$0xff]
        %v1298 = vld [vmem:[%s408 + $0xfa] sm:$0xff]
        %v1299 = vld [vmem:[%s408 + $0x10a] sm:$0xff]
        %v1300 = vld [vmem:[%s408 + $0x112] sm:$0xff]
        %v1301 = vld [vmem:[%s408 + $0x122] sm:$0xff]
        %v1302 = vld [vmem:[%s408 + $0x12a] sm:$0xff]
        %v1303 = vld [vmem:[%s408 + $0x13a] sm:$0xff]
        %v1304 = vld [vmem:[%s408 + $0x142] sm:$0xff]
        %v1305 = vld [vmem:[%s408 + $0x152] sm:$0xff]
        %v1306 = vld [vmem:[%s408 + $0x15a] sm:$0xff]
        %v1307 = vld [vmem:[%s408 + $0x16a] sm:$0xff]
        %v1308 = vld [vmem:[%s408 + $0x172] sm:$0xff]
        %1341 = vrot.lane.b32.xlu0 %v1277, 20
        %v1342 = vpop.permute.xlu0 %1341
        %1343 = vrot.lane.b32.xlu0 %v1278, 20
        %v1344 = vpop.permute.xlu0 %1343
        %1345 = vrot.lane.b32.xlu0 %v1279, 20
        %v1346 = vpop.permute.xlu0 %1345
        %1347 = vrot.lane.b32.xlu0 %v1280, 20
        %v1348 = vpop.permute.xlu0 %1347
        %1349 = vrot.lane.b32.xlu0 %v1281, 20
        %v1350 = vpop.permute.xlu0 %1349
        %1351 = vrot.lane.b32.xlu0 %v1282, 20
        %v1352 = vpop.permute.xlu0 %1351
        %1353 = vrot.lane.b32.xlu0 %v1283, 20
        %v1354 = vpop.permute.xlu0 %1353
        %1355 = vrot.lane.b32.xlu0 %v1284, 20
        %v1356 = vpop.permute.xlu0 %1355
        %1357 = vrot.lane.b32.xlu0 %v1285, 20
        %v1358 = vpop.permute.xlu0 %1357
        %1359 = vrot.lane.b32.xlu0 %v1286, 20
        %v1360 = vpop.permute.xlu0 %1359
        %1361 = vrot.lane.b32.xlu0 %v1287, 20
        %v1362 = vpop.permute.xlu0 %1361
        %1363 = vrot.lane.b32.xlu0 %v1288, 20
        %v1364 = vpop.permute.xlu0 %1363
        %1365 = vrot.lane.b32.xlu0 %v1289, 20
        %v1366 = vpop.permute.xlu0 %1365
        %1367 = vrot.lane.b32.xlu0 %v1290, 20
        %v1368 = vpop.permute.xlu0 %1367
        %1369 = vrot.lane.b32.xlu0 %v1291, 20
        %v1370 = vpop.permute.xlu0 %1369
        %1371 = vrot.lane.b32.xlu0 %v1292, 20
        %v1372 = vpop.permute.xlu0 %1371
        %1373 = vrot.lane.b32.xlu0 %v1293, 20
        %v1374 = vpop.permute.xlu0 %1373
        %1375 = vrot.lane.b32.xlu0 %v1294, 20
        %v1376 = vpop.permute.xlu0 %1375
        %1377 = vrot.lane.b32.xlu0 %v1295, 20
        %v1378 = vpop.permute.xlu0 %1377
        %1379 = vrot.lane.b32.xlu0 %v1296, 20
        %v1380 = vpop.permute.xlu0 %1379
        %1381 = vrot.lane.b32.xlu0 %v1297, 20
        %v1382 = vpop.permute.xlu0 %1381
        %1383 = vrot.lane.b32.xlu0 %v1298, 20
        %v1384 = vpop.permute.xlu0 %1383
        %1385 = vrot.lane.b32.xlu0 %v1299, 20
        %v1386 = vpop.permute.xlu0 %1385
        %1387 = vrot.lane.b32.xlu0 %v1300, 20
        %v1388 = vpop.permute.xlu0 %1387
        %1389 = vrot.lane.b32.xlu0 %v1301, 20
        %v1390 = vpop.permute.xlu0 %1389
        %1391 = vrot.lane.b32.xlu0 %v1302, 20
        %v1392 = vpop.permute.xlu0 %1391
        %1393 = vrot.lane.b32.xlu0 %v1303, 20
        %v1394 = vpop.permute.xlu0 %1393
        %1395 = vrot.lane.b32.xlu0 %v1304, 20
        %v1396 = vpop.permute.xlu0 %1395
        %1397 = vrot.lane.b32.xlu0 %v1305, 20
        %v1398 = vpop.permute.xlu0 %1397
        %1399 = vrot.lane.b32.xlu0 %v1306, 20
        %v1400 = vpop.permute.xlu0 %1399
        %1401 = vrot.lane.b32.xlu0 %v1307, 20
        %v1402 = vpop.permute.xlu0 %1401
        %1403 = vrot.lane.b32.xlu0 %v1308, 20
        %v1404 = vpop.permute.xlu0 %1403
        %vm1437 = vcmask 195744
        %1438 = vst.msk [vmem:[#allocation3] sm:$0xff] %vm1437, %v1342
        %1439 = vst.msk [vmem:[#allocation3 + $0x8] sm:$0xff] %vm1437, %v1344
        %1440 = vst.msk [vmem:[#allocation3 + $0x10] sm:$0xff] %vm1437, %v1346
        %1441 = vst.msk [vmem:[#allocation3 + $0x18] sm:$0xff] %vm1437, %v1348
        %1442 = vst.msk [vmem:[#allocation3 + $0x20] sm:$0xff] %vm1437, %v1350
        %1443 = vst.msk [vmem:[#allocation3 + $0x28] sm:$0xff] %vm1437, %v1352
        %1444 = vst.msk [vmem:[#allocation3 + $0x30] sm:$0xff] %vm1437, %v1354
        %1445 = vst.msk [vmem:[#allocation3 + $0x38] sm:$0xff] %vm1437, %v1356
        %1446 = vst.msk [vmem:[#allocation3 + $0x40] sm:$0xff] %vm1437, %v1358
        %1447 = vst.msk [vmem:[#allocation3 + $0x48] sm:$0xff] %vm1437, %v1360
        %1448 = vst.msk [vmem:[#allocation3 + $0x50] sm:$0xff] %vm1437, %v1362
        %1449 = vst.msk [vmem:[#allocation3 + $0x58] sm:$0xff] %vm1437, %v1364
        %1450 = vst.msk [vmem:[#allocation3 + $0x60] sm:$0xff] %vm1437, %v1366
        %1451 = vst.msk [vmem:[#allocation3 + $0x68] sm:$0xff] %vm1437, %v1368
        %1452 = vst.msk [vmem:[#allocation3 + $0x70] sm:$0xff] %vm1437, %v1370
        %1453 = vst.msk [vmem:[#allocation3 + $0x78] sm:$0xff] %vm1437, %v1372
        %1454 = vst.msk [vmem:[#allocation3 + $0x80] sm:$0xff] %vm1437, %v1374
        %1455 = vst.msk [vmem:[#allocation3 + $0x88] sm:$0xff] %vm1437, %v1376
        %1456 = vst.msk [vmem:[#allocation3 + $0x90] sm:$0xff] %vm1437, %v1378
        %1457 = vst.msk [vmem:[#allocation3 + $0x98] sm:$0xff] %vm1437, %v1380
        %1458 = vst.msk [vmem:[#allocation3 + $0xa0] sm:$0xff] %vm1437, %v1382
        %1459 = vst.msk [vmem:[#allocation3 + $0xa8] sm:$0xff] %vm1437, %v1384
        %1460 = vst.msk [vmem:[#allocation3 + $0xb0] sm:$0xff] %vm1437, %v1386
        %1461 = vst.msk [vmem:[#allocation3 + $0xb8] sm:$0xff] %vm1437, %v1388
        %1462 = vst.msk [vmem:[#allocation3 + $0xc0] sm:$0xff] %vm1437, %v1390
        %1463 = vst.msk [vmem:[#allocation3 + $0xc8] sm:$0xff] %vm1437, %v1392
        %1464 = vst.msk [vmem:[#allocation3 + $0xd0] sm:$0xff] %vm1437, %v1394
        %1465 = vst.msk [vmem:[#allocation3 + $0xd8] sm:$0xff] %vm1437, %v1396
        %1466 = vst.msk [vmem:[#allocation3 + $0xe0] sm:$0xff] %vm1437, %v1398
        %1467 = vst.msk [vmem:[#allocation3 + $0xe8] sm:$0xff] %vm1437, %v1400
        %1468 = vst.msk [vmem:[#allocation3 + $0xf0] sm:$0xff] %vm1437, %v1402
        %1469 = vst.msk [vmem:[#allocation3 + $0xf8] sm:$0xff] %vm1437, %v1404
        %s1470 = scalar_lea.vmem [#allocation2], 48
        %v1471 = vld [vmem:[%s1470] sm:$0xff]
        %v1472 = vld [vmem:[%s1470 + $0x8] sm:$0xff]
        %v1473 = vld [vmem:[%s1470 + $0x18] sm:$0xff]
        %v1474 = vld [vmem:[%s1470 + $0x20] sm:$0xff]
        %v1475 = vld [vmem:[%s1470 + $0x30] sm:$0xff]
        %v1476 = vld [vmem:[%s1470 + $0x38] sm:$0xff]
        %v1477 = vld [vmem:[%s1470 + $0x48] sm:$0xff]
        %v1478 = vld [vmem:[%s1470 + $0x50] sm:$0xff]
        %v1479 = vld [vmem:[%s1470 + $0x60] sm:$0xff]
        %v1480 = vld [vmem:[%s1470 + $0x68] sm:$0xff]
        %v1481 = vld [vmem:[%s1470 + $0x78] sm:$0xff]
        %v1482 = vld [vmem:[%s1470 + $0x80] sm:$0xff]
        %v1483 = vld [vmem:[%s1470 + $0x90] sm:$0xff]
        %v1484 = vld [vmem:[%s1470 + $0x98] sm:$0xff]
        %v1485 = vld [vmem:[%s1470 + $0xa8] sm:$0xff]
        %v1486 = vld [vmem:[%s1470 + $0xb0] sm:$0xff]
        %v1487 = vld [vmem:[%s1470 + $0xc0] sm:$0xff]
        %v1488 = vld [vmem:[%s1470 + $0xc8] sm:$0xff]
        %v1489 = vld [vmem:[%s1470 + $0xd8] sm:$0xff]
        %v1490 = vld [vmem:[%s1470 + $0xe0] sm:$0xff]
        %v1491 = vld [vmem:[%s1470 + $0xf0] sm:$0xff]
        %v1492 = vld [vmem:[%s1470 + $0xf8] sm:$0xff]
        %v1493 = vld [vmem:[%s1470 + $0x108] sm:$0xff]
        %v1494 = vld [vmem:[%s1470 + $0x110] sm:$0xff]
        %v1495 = vld [vmem:[%s1470 + $0x120] sm:$0xff]
        %v1496 = vld [vmem:[%s1470 + $0x128] sm:$0xff]
        %v1497 = vld [vmem:[%s1470 + $0x138] sm:$0xff]
        %v1498 = vld [vmem:[%s1470 + $0x140] sm:$0xff]
        %v1499 = vld [vmem:[%s1470 + $0x150] sm:$0xff]
        %v1500 = vld [vmem:[%s1470 + $0x158] sm:$0xff]
        %v1501 = vld [vmem:[%s1470 + $0x168] sm:$0xff]
        %v1502 = vld [vmem:[%s1470 + $0x170] sm:$0xff]
        %1535 = vrot.lane.b32.xlu0 %v1471, 24
        %v1536 = vpop.permute.xlu0 %1535
        %1537 = vrot.lane.b32.xlu0 %v1472, 24
        %v1538 = vpop.permute.xlu0 %1537
        %1539 = vrot.lane.b32.xlu0 %v1473, 24
        %v1540 = vpop.permute.xlu0 %1539
        %1541 = vrot.lane.b32.xlu0 %v1474, 24
        %v1542 = vpop.permute.xlu0 %1541
        %1543 = vrot.lane.b32.xlu0 %v1475, 24
        %v1544 = vpop.permute.xlu0 %1543
        %1545 = vrot.lane.b32.xlu0 %v1476, 24
        %v1546 = vpop.permute.xlu0 %1545
        %1547 = vrot.lane.b32.xlu0 %v1477, 24
        %v1548 = vpop.permute.xlu0 %1547
        %1549 = vrot.lane.b32.xlu0 %v1478, 24
        %v1550 = vpop.permute.xlu0 %1549
        %1551 = vrot.lane.b32.xlu0 %v1479, 24
        %v1552 = vpop.permute.xlu0 %1551
        %1553 = vrot.lane.b32.xlu0 %v1480, 24
        %v1554 = vpop.permute.xlu0 %1553
        %1555 = vrot.lane.b32.xlu0 %v1481, 24
        %v1556 = vpop.permute.xlu0 %1555
        %1557 = vrot.lane.b32.xlu0 %v1482, 24
        %v1558 = vpop.permute.xlu0 %1557
        %1559 = vrot.lane.b32.xlu0 %v1483, 24
        %v1560 = vpop.permute.xlu0 %1559
        %1561 = vrot.lane.b32.xlu0 %v1484, 24
        %v1562 = vpop.permute.xlu0 %1561
        %1563 = vrot.lane.b32.xlu0 %v1485, 24
        %v1564 = vpop.permute.xlu0 %1563
        %1565 = vrot.lane.b32.xlu0 %v1486, 24
        %v1566 = vpop.permute.xlu0 %1565
        %1567 = vrot.lane.b32.xlu0 %v1487, 24
        %v1568 = vpop.permute.xlu0 %1567
        %1569 = vrot.lane.b32.xlu0 %v1488, 24
        %v1570 = vpop.permute.xlu0 %1569
        %1571 = vrot.lane.b32.xlu0 %v1489, 24
        %v1572 = vpop.permute.xlu0 %1571
        %1573 = vrot.lane.b32.xlu0 %v1490, 24
        %v1574 = vpop.permute.xlu0 %1573
        %1575 = vrot.lane.b32.xlu0 %v1491, 24
        %v1576 = vpop.permute.xlu0 %1575
        %1577 = vrot.lane.b32.xlu0 %v1492, 24
        %v1578 = vpop.permute.xlu0 %1577
        %1579 = vrot.lane.b32.xlu0 %v1493, 24
        %v1580 = vpop.permute.xlu0 %1579
        %1581 = vrot.lane.b32.xlu0 %v1494, 24
        %v1582 = vpop.permute.xlu0 %1581
        %1583 = vrot.lane.b32.xlu0 %v1495, 24
        %v1584 = vpop.permute.xlu0 %1583
        %1585 = vrot.lane.b32.xlu0 %v1496, 24
        %v1586 = vpop.permute.xlu0 %1585
        %1587 = vrot.lane.b32.xlu0 %v1497, 24
        %v1588 = vpop.permute.xlu0 %1587
        %1589 = vrot.lane.b32.xlu0 %v1498, 24
        %v1590 = vpop.permute.xlu0 %1589
        %1591 = vrot.lane.b32.xlu0 %v1499, 24
        %v1592 = vpop.permute.xlu0 %1591
        %1593 = vrot.lane.b32.xlu0 %v1500, 24
        %v1594 = vpop.permute.xlu0 %1593
        %1595 = vrot.lane.b32.xlu0 %v1501, 24
        %v1596 = vpop.permute.xlu0 %1595
        %1597 = vrot.lane.b32.xlu0 %v1502, 24
        %v1598 = vpop.permute.xlu0 %1597
        %vm1631 = vcmask 228544
        %1632 = vst.msk [vmem:[#allocation3] sm:$0xff] %vm1631, %v1536
        %1633 = vst.msk [vmem:[#allocation3 + $0x8] sm:$0xff] %vm1631, %v1538
        %1634 = vst.msk [vmem:[#allocation3 + $0x10] sm:$0xff] %vm1631, %v1540
        %1635 = vst.msk [vmem:[#allocation3 + $0x18] sm:$0xff] %vm1631, %v1542
        %1636 = vst.msk [vmem:[#allocation3 + $0x20] sm:$0xff] %vm1631, %v1544
        %1637 = vst.msk [vmem:[#allocation3 + $0x28] sm:$0xff] %vm1631, %v1546
        %1638 = vst.msk [vmem:[#allocation3 + $0x30] sm:$0xff] %vm1631, %v1548
        %1639 = vst.msk [vmem:[#allocation3 + $0x38] sm:$0xff] %vm1631, %v1550
        %1640 = vst.msk [vmem:[#allocation3 + $0x40] sm:$0xff] %vm1631, %v1552
        %1641 = vst.msk [vmem:[#allocation3 + $0x48] sm:$0xff] %vm1631, %v1554
        %1642 = vst.msk [vmem:[#allocation3 + $0x50] sm:$0xff] %vm1631, %v1556
        %1643 = vst.msk [vmem:[#allocation3 + $0x58] sm:$0xff] %vm1631, %v1558
        %1644 = vst.msk [vmem:[#allocation3 + $0x60] sm:$0xff] %vm1631, %v1560
        %1645 = vst.msk [vmem:[#allocation3 + $0x68] sm:$0xff] %vm1631, %v1562
        %1646 = vst.msk [vmem:[#allocation3 + $0x70] sm:$0xff] %vm1631, %v1564
        %1647 = vst.msk [vmem:[#allocation3 + $0x78] sm:$0xff] %vm1631, %v1566
        %1648 = vst.msk [vmem:[#allocation3 + $0x80] sm:$0xff] %vm1631, %v1568
        %1649 = vst.msk [vmem:[#allocation3 + $0x88] sm:$0xff] %vm1631, %v1570
        %1650 = vst.msk [vmem:[#allocation3 + $0x90] sm:$0xff] %vm1631, %v1572
        %1651 = vst.msk [vmem:[#allocation3 + $0x98] sm:$0xff] %vm1631, %v1574
        %1652 = vst.msk [vmem:[#allocation3 + $0xa0] sm:$0xff] %vm1631, %v1576
        %1653 = vst.msk [vmem:[#allocation3 + $0xa8] sm:$0xff] %vm1631, %v1578
        %1654 = vst.msk [vmem:[#allocation3 + $0xb0] sm:$0xff] %vm1631, %v1580
        %1655 = vst.msk [vmem:[#allocation3 + $0xb8] sm:$0xff] %vm1631, %v1582
        %1656 = vst.msk [vmem:[#allocation3 + $0xc0] sm:$0xff] %vm1631, %v1584
        %1657 = vst.msk [vmem:[#allocation3 + $0xc8] sm:$0xff] %vm1631, %v1586
        %1658 = vst.msk [vmem:[#allocation3 + $0xd0] sm:$0xff] %vm1631, %v1588
        %1659 = vst.msk [vmem:[#allocation3 + $0xd8] sm:$0xff] %vm1631, %v1590
        %1660 = vst.msk [vmem:[#allocation3 + $0xe0] sm:$0xff] %vm1631, %v1592
        %1661 = vst.msk [vmem:[#allocation3 + $0xe8] sm:$0xff] %vm1631, %v1594
        %1662 = vst.msk [vmem:[#allocation3 + $0xf0] sm:$0xff] %vm1631, %v1596
        %1663 = vst.msk [vmem:[#allocation3 + $0xf8] sm:$0xff] %vm1631, %v1598
        %v1664 = vld [vmem:[%s1470 + $0x1] sm:$0xff]
        %v1665 = vld [vmem:[%s1470 + $0x9] sm:$0xff]
        %v1666 = vld [vmem:[%s1470 + $0x19] sm:$0xff]
        %v1667 = vld [vmem:[%s1470 + $0x21] sm:$0xff]
        %v1668 = vld [vmem:[%s1470 + $0x31] sm:$0xff]
        %v1669 = vld [vmem:[%s1470 + $0x39] sm:$0xff]
        %v1670 = vld [vmem:[%s1470 + $0x49] sm:$0xff]
        %v1671 = vld [vmem:[%s1470 + $0x51] sm:$0xff]
        %v1672 = vld [vmem:[%s1470 + $0x61] sm:$0xff]
        %v1673 = vld [vmem:[%s1470 + $0x69] sm:$0xff]
        %v1674 = vld [vmem:[%s1470 + $0x79] sm:$0xff]
        %v1675 = vld [vmem:[%s1470 + $0x81] sm:$0xff]
        %v1676 = vld [vmem:[%s1470 + $0x91] sm:$0xff]
        %v1677 = vld [vmem:[%s1470 + $0x99] sm:$0xff]
        %v1678 = vld [vmem:[%s1470 + $0xa9] sm:$0xff]
        %v1679 = vld [vmem:[%s1470 + $0xb1] sm:$0xff]
        %v1680 = vld [vmem:[%s1470 + $0xc1] sm:$0xff]
        %v1681 = vld [vmem:[%s1470 + $0xc9] sm:$0xff]
        %v1682 = vld [vmem:[%s1470 + $0xd9] sm:$0xff]
        %v1683 = vld [vmem:[%s1470 + $0xe1] sm:$0xff]
        %v1684 = vld [vmem:[%s1470 + $0xf1] sm:$0xff]
        %v1685 = vld [vmem:[%s1470 + $0xf9] sm:$0xff]
        %v1686 = vld [vmem:[%s1470 + $0x109] sm:$0xff]
        %v1687 = vld [vmem:[%s1470 + $0x111] sm:$0xff]
        %v1688 = vld [vmem:[%s1470 + $0x121] sm:$0xff]
        %v1689 = vld [vmem:[%s1470 + $0x129] sm:$0xff]
        %v1690 = vld [vmem:[%s1470 + $0x139] sm:$0xff]
        %v1691 = vld [vmem:[%s1470 + $0x141] sm:$0xff]
        %v1692 = vld [vmem:[%s1470 + $0x151] sm:$0xff]
        %v1693 = vld [vmem:[%s1470 + $0x159] sm:$0xff]
        %v1694 = vld [vmem:[%s1470 + $0x169] sm:$0xff]
        %v1695 = vld [vmem:[%s1470 + $0x171] sm:$0xff]
        %1728 = vrot.lane.b32.xlu0 %v1664, 28
        %v1729 = vpop.permute.xlu0 %1728
        %1730 = vrot.lane.b32.xlu0 %v1665, 28
        %v1731 = vpop.permute.xlu0 %1730
        %1732 = vrot.lane.b32.xlu0 %v1666, 28
        %v1733 = vpop.permute.xlu0 %1732
        %1734 = vrot.lane.b32.xlu0 %v1667, 28
        %v1735 = vpop.permute.xlu0 %1734
        %1736 = vrot.lane.b32.xlu0 %v1668, 28
        %v1737 = vpop.permute.xlu0 %1736
        %1738 = vrot.lane.b32.xlu0 %v1669, 28
        %v1739 = vpop.permute.xlu0 %1738
        %1740 = vrot.lane.b32.xlu0 %v1670, 28
        %v1741 = vpop.permute.xlu0 %1740
        %1742 = vrot.lane.b32.xlu0 %v1671, 28
        %v1743 = vpop.permute.xlu0 %1742
        %1744 = vrot.lane.b32.xlu0 %v1672, 28
        %v1745 = vpop.permute.xlu0 %1744
        %1746 = vrot.lane.b32.xlu0 %v1673, 28
        %v1747 = vpop.permute.xlu0 %1746
        %1748 = vrot.lane.b32.xlu0 %v1674, 28
        %v1749 = vpop.permute.xlu0 %1748
        %1750 = vrot.lane.b32.xlu0 %v1675, 28
        %v1751 = vpop.permute.xlu0 %1750
        %1752 = vrot.lane.b32.xlu0 %v1676, 28
        %v1753 = vpop.permute.xlu0 %1752
        %1754 = vrot.lane.b32.xlu0 %v1677, 28
        %v1755 = vpop.permute.xlu0 %1754
        %1756 = vrot.lane.b32.xlu0 %v1678, 28
        %v1757 = vpop.permute.xlu0 %1756
        %1758 = vrot.lane.b32.xlu0 %v1679, 28
        %v1759 = vpop.permute.xlu0 %1758
        %1760 = vrot.lane.b32.xlu0 %v1680, 28
        %v1761 = vpop.permute.xlu0 %1760
        %1762 = vrot.lane.b32.xlu0 %v1681, 28
        %v1763 = vpop.permute.xlu0 %1762
        %1764 = vrot.lane.b32.xlu0 %v1682, 28
        %v1765 = vpop.permute.xlu0 %1764
        %1766 = vrot.lane.b32.xlu0 %v1683, 28
        %v1767 = vpop.permute.xlu0 %1766
        %1768 = vrot.lane.b32.xlu0 %v1684, 28
        %v1769 = vpop.permute.xlu0 %1768
        %1770 = vrot.lane.b32.xlu0 %v1685, 28
        %v1771 = vpop.permute.xlu0 %1770
        %1772 = vrot.lane.b32.xlu0 %v1686, 28
        %v1773 = vpop.permute.xlu0 %1772
        %1774 = vrot.lane.b32.xlu0 %v1687, 28
        %v1775 = vpop.permute.xlu0 %1774
        %1776 = vrot.lane.b32.xlu0 %v1688, 28
        %v1777 = vpop.permute.xlu0 %1776
        %1778 = vrot.lane.b32.xlu0 %v1689, 28
        %v1779 = vpop.permute.xlu0 %1778
        %1780 = vrot.lane.b32.xlu0 %v1690, 28
        %v1781 = vpop.permute.xlu0 %1780
        %1782 = vrot.lane.b32.xlu0 %v1691, 28
        %v1783 = vpop.permute.xlu0 %1782
        %1784 = vrot.lane.b32.xlu0 %v1692, 28
        %v1785 = vpop.permute.xlu0 %1784
        %1786 = vrot.lane.b32.xlu0 %v1693, 28
        %v1787 = vpop.permute.xlu0 %1786
        %1788 = vrot.lane.b32.xlu0 %v1694, 28
        %v1789 = vpop.permute.xlu0 %1788
        %1790 = vrot.lane.b32.xlu0 %v1695, 28
        %v1791 = vpop.permute.xlu0 %1790
        %vm1824 = vcmask 261344
        %1825 = vst.msk [vmem:[#allocation3] sm:$0xff] %vm1824, %v1729
        %1826 = vst.msk [vmem:[#allocation3 + $0x8] sm:$0xff] %vm1824, %v1731
        %1827 = vst.msk [vmem:[#allocation3 + $0x10] sm:$0xff] %vm1824, %v1733
        %1828 = vst.msk [vmem:[#allocation3 + $0x18] sm:$0xff] %vm1824, %v1735
        %1829 = vst.msk [vmem:[#allocation3 + $0x20] sm:$0xff] %vm1824, %v1737
        %1830 = vst.msk [vmem:[#allocation3 + $0x28] sm:$0xff] %vm1824, %v1739
        %1831 = vst.msk [vmem:[#allocation3 + $0x30] sm:$0xff] %vm1824, %v1741
        %1832 = vst.msk [vmem:[#allocation3 + $0x38] sm:$0xff] %vm1824, %v1743
        %1833 = vst.msk [vmem:[#allocation3 + $0x40] sm:$0xff] %vm1824, %v1745
        %1834 = vst.msk [vmem:[#allocation3 + $0x48] sm:$0xff] %vm1824, %v1747
        %1835 = vst.msk [vmem:[#allocation3 + $0x50] sm:$0xff] %vm1824, %v1749
        %1836 = vst.msk [vmem:[#allocation3 + $0x58] sm:$0xff] %vm1824, %v1751
        %1837 = vst.msk [vmem:[#allocation3 + $0x60] sm:$0xff] %vm1824, %v1753
        %1838 = vst.msk [vmem:[#allocation3 + $0x68] sm:$0xff] %vm1824, %v1755
        %1839 = vst.msk [vmem:[#allocation3 + $0x70] sm:$0xff] %vm1824, %v1757
        %1840 = vst.msk [vmem:[#allocation3 + $0x78] sm:$0xff] %vm1824, %v1759
        %1841 = vst.msk [vmem:[#allocation3 + $0x80] sm:$0xff] %vm1824, %v1761
        %1842 = vst.msk [vmem:[#allocation3 + $0x88] sm:$0xff] %vm1824, %v1763
        %1843 = vst.msk [vmem:[#allocation3 + $0x90] sm:$0xff] %vm1824, %v1765
        %1844 = vst.msk [vmem:[#allocation3 + $0x98] sm:$0xff] %vm1824, %v1767
        %1845 = vst.msk [vmem:[#allocation3 + $0xa0] sm:$0xff] %vm1824, %v1769
        %1846 = vst.msk [vmem:[#allocation3 + $0xa8] sm:$0xff] %vm1824, %v1771
        %1847 = vst.msk [vmem:[#allocation3 + $0xb0] sm:$0xff] %vm1824, %v1773
        %1848 = vst.msk [vmem:[#allocation3 + $0xb8] sm:$0xff] %vm1824, %v1775
        %1849 = vst.msk [vmem:[#allocation3 + $0xc0] sm:$0xff] %vm1824, %v1777
        %1850 = vst.msk [vmem:[#allocation3 + $0xc8] sm:$0xff] %vm1824, %v1779
        %1851 = vst.msk [vmem:[#allocation3 + $0xd0] sm:$0xff] %vm1824, %v1781
        %1852 = vst.msk [vmem:[#allocation3 + $0xd8] sm:$0xff] %vm1824, %v1783
        %1853 = vst.msk [vmem:[#allocation3 + $0xe0] sm:$0xff] %vm1824, %v1785
        %1854 = vst.msk [vmem:[#allocation3 + $0xe8] sm:$0xff] %vm1824, %v1787
        %1855 = vst.msk [vmem:[#allocation3 + $0xf0] sm:$0xff] %vm1824, %v1789
        %1856 = vst.msk [vmem:[#allocation3 + $0xf8] sm:$0xff] %vm1824, %v1791
        %v1857 = vld [vmem:[%s1470 + $0x2] sm:$0xff]
        %v1858 = vld [vmem:[%s1470 + $0xa] sm:$0xff]
        %v1859 = vld [vmem:[%s1470 + $0x1a] sm:$0xff]
        %v1860 = vld [vmem:[%s1470 + $0x22] sm:$0xff]
        %v1861 = vld [vmem:[%s1470 + $0x32] sm:$0xff]
        %v1862 = vld [vmem:[%s1470 + $0x3a] sm:$0xff]
        %v1863 = vld [vmem:[%s1470 + $0x4a] sm:$0xff]
        %v1864 = vld [vmem:[%s1470 + $0x52] sm:$0xff]
        %v1865 = vld [vmem:[%s1470 + $0x62] sm:$0xff]
        %v1866 = vld [vmem:[%s1470 + $0x6a] sm:$0xff]
        %v1867 = vld [vmem:[%s1470 + $0x7a] sm:$0xff]
        %v1868 = vld [vmem:[%s1470 + $0x82] sm:$0xff]
        %v1869 = vld [vmem:[%s1470 + $0x92] sm:$0xff]
        %v1870 = vld [vmem:[%s1470 + $0x9a] sm:$0xff]
        %v1871 = vld [vmem:[%s1470 + $0xaa] sm:$0xff]
        %v1872 = vld [vmem:[%s1470 + $0xb2] sm:$0xff]
        %v1873 = vld [vmem:[%s1470 + $0xc2] sm:$0xff]
        %v1874 = vld [vmem:[%s1470 + $0xca] sm:$0xff]
        %v1875 = vld [vmem:[%s1470 + $0xda] sm:$0xff]
        %v1876 = vld [vmem:[%s1470 + $0xe2] sm:$0xff]
        %v1877 = vld [vmem:[%s1470 + $0xf2] sm:$0xff]
        %v1878 = vld [vmem:[%s1470 + $0xfa] sm:$0xff]
        %v1879 = vld [vmem:[%s1470 + $0x10a] sm:$0xff]
        %v1880 = vld [vmem:[%s1470 + $0x112] sm:$0xff]
        %v1881 = vld [vmem:[%s1470 + $0x122] sm:$0xff]
        %v1882 = vld [vmem:[%s1470 + $0x12a] sm:$0xff]
        %v1883 = vld [vmem:[%s1470 + $0x13a] sm:$0xff]
        %v1884 = vld [vmem:[%s1470 + $0x142] sm:$0xff]
        %v1885 = vld [vmem:[%s1470 + $0x152] sm:$0xff]
        %v1886 = vld [vmem:[%s1470 + $0x15a] sm:$0xff]
        %v1887 = vld [vmem:[%s1470 + $0x16a] sm:$0xff]
        %v1888 = vld [vmem:[%s1470 + $0x172] sm:$0xff]
        %1921 = vrot.lane.b32.xlu0 %v1857, 32
        %v1922 = vpop.permute.xlu0 %1921
        %1923 = vrot.lane.b32.xlu0 %v1858, 32
        %v1924 = vpop.permute.xlu0 %1923
        %1925 = vrot.lane.b32.xlu0 %v1859, 32
        %v1926 = vpop.permute.xlu0 %1925
        %1927 = vrot.lane.b32.xlu0 %v1860, 32
        %v1928 = vpop.permute.xlu0 %1927
        %1929 = vrot.lane.b32.xlu0 %v1861, 32
        %v1930 = vpop.permute.xlu0 %1929
        %1931 = vrot.lane.b32.xlu0 %v1862, 32
        %v1932 = vpop.permute.xlu0 %1931
        %1933 = vrot.lane.b32.xlu0 %v1863, 32
        %v1934 = vpop.permute.xlu0 %1933
        %1935 = vrot.lane.b32.xlu0 %v1864, 32
        %v1936 = vpop.permute.xlu0 %1935
        %1937 = vrot.lane.b32.xlu0 %v1865, 32
        %v1938 = vpop.permute.xlu0 %1937
        %1939 = vrot.lane.b32.xlu0 %v1866, 32
        %v1940 = vpop.permute.xlu0 %1939
        %1941 = vrot.lane.b32.xlu0 %v1867, 32
        %v1942 = vpop.permute.xlu0 %1941
        %1943 = vrot.lane.b32.xlu0 %v1868, 32
        %v1944 = vpop.permute.xlu0 %1943
        %1945 = vrot.lane.b32.xlu0 %v1869, 32
        %v1946 = vpop.permute.xlu0 %1945
        %1947 = vrot.lane.b32.xlu0 %v1870, 32
        %v1948 = vpop.permute.xlu0 %1947
        %1949 = vrot.lane.b32.xlu0 %v1871, 32
        %v1950 = vpop.permute.xlu0 %1949
        %1951 = vrot.lane.b32.xlu0 %v1872, 32
        %v1952 = vpop.permute.xlu0 %1951
        %1953 = vrot.lane.b32.xlu0 %v1873, 32
        %v1954 = vpop.permute.xlu0 %1953
        %1955 = vrot.lane.b32.xlu0 %v1874, 32
        %v1956 = vpop.permute.xlu0 %1955
        %1957 = vrot.lane.b32.xlu0 %v1875, 32
        %v1958 = vpop.permute.xlu0 %1957
        %1959 = vrot.lane.b32.xlu0 %v1876, 32
        %v1960 = vpop.permute.xlu0 %1959
        %1961 = vrot.lane.b32.xlu0 %v1877, 32
        %v1962 = vpop.permute.xlu0 %1961
        %1963 = vrot.lane.b32.xlu0 %v1878, 32
        %v1964 = vpop.permute.xlu0 %1963
        %1965 = vrot.lane.b32.xlu0 %v1879, 32
        %v1966 = vpop.permute.xlu0 %1965
        %1967 = vrot.lane.b32.xlu0 %v1880, 32
        %v1968 = vpop.permute.xlu0 %1967
        %1969 = vrot.lane.b32.xlu0 %v1881, 32
        %v1970 = vpop.permute.xlu0 %1969
        %1971 = vrot.lane.b32.xlu0 %v1882, 32
        %v1972 = vpop.permute.xlu0 %1971
        %1973 = vrot.lane.b32.xlu0 %v1883, 32
        %v1974 = vpop.permute.xlu0 %1973
        %1975 = vrot.lane.b32.xlu0 %v1884, 32
        %v1976 = vpop.permute.xlu0 %1975
        %1977 = vrot.lane.b32.xlu0 %v1885, 32
        %v1978 = vpop.permute.xlu0 %1977
        %1979 = vrot.lane.b32.xlu0 %v1886, 32
        %v1980 = vpop.permute.xlu0 %1979
        %1981 = vrot.lane.b32.xlu0 %v1887, 32
        %v1982 = vpop.permute.xlu0 %1981
        %1983 = vrot.lane.b32.xlu0 %v1888, 32
        %v1984 = vpop.permute.xlu0 %1983
        %vm2017 = vcmask 294144
        %2018 = vst.msk [vmem:[#allocation3] sm:$0xff] %vm2017, %v1922
        %2019 = vst.msk [vmem:[#allocation3 + $0x8] sm:$0xff] %vm2017, %v1924
        %2020 = vst.msk [vmem:[#allocation3 + $0x10] sm:$0xff] %vm2017, %v1926
        %2021 = vst.msk [vmem:[#allocation3 + $0x18] sm:$0xff] %vm2017, %v1928
        %2022 = vst.msk [vmem:[#allocation3 + $0x20] sm:$0xff] %vm2017, %v1930
        %2023 = vst.msk [vmem:[#allocation3 + $0x28] sm:$0xff] %vm2017, %v1932
        %2024 = vst.msk [vmem:[#allocation3 + $0x30] sm:$0xff] %vm2017, %v1934
        %2025 = vst.msk [vmem:[#allocation3 + $0x38] sm:$0xff] %vm2017, %v1936
        %2026 = vst.msk [vmem:[#allocation3 + $0x40] sm:$0xff] %vm2017, %v1938
        %2027 = vst.msk [vmem:[#allocation3 + $0x48] sm:$0xff] %vm2017, %v1940
        %2028 = vst.msk [vmem:[#allocation3 + $0x50] sm:$0xff] %vm2017, %v1942
        %2029 = vst.msk [vmem:[#allocation3 + $0x58] sm:$0xff] %vm2017, %v1944
        %2030 = vst.msk [vmem:[#allocation3 + $0x60] sm:$0xff] %vm2017, %v1946
        %2031 = vst.msk [vmem:[#allocation3 + $0x68] sm:$0xff] %vm2017, %v1948
        %2032 = vst.msk [vmem:[#allocation3 + $0x70] sm:$0xff] %vm2017, %v1950
        %2033 = vst.msk [vmem:[#allocation3 + $0x78] sm:$0xff] %vm2017, %v1952
        %2034 = vst.msk [vmem:[#allocation3 + $0x80] sm:$0xff] %vm2017, %v1954
        %2035 = vst.msk [vmem:[#allocation3 + $0x88] sm:$0xff] %vm2017, %v1956
        %2036 = vst.msk [vmem:[#allocation3 + $0x90] sm:$0xff] %vm2017, %v1958
        %2037 = vst.msk [vmem:[#allocation3 + $0x98] sm:$0xff] %vm2017, %v1960
        %2038 = vst.msk [vmem:[#allocation3 + $0xa0] sm:$0xff] %vm2017, %v1962
        %2039 = vst.msk [vmem:[#allocation3 + $0xa8] sm:$0xff] %vm2017, %v1964
        %2040 = vst.msk [vmem:[#allocation3 + $0xb0] sm:$0xff] %vm2017, %v1966
        %2041 = vst.msk [vmem:[#allocation3 + $0xb8] sm:$0xff] %vm2017, %v1968
        %2042 = vst.msk [vmem:[#allocation3 + $0xc0] sm:$0xff] %vm2017, %v1970
        %2043 = vst.msk [vmem:[#allocation3 + $0xc8] sm:$0xff] %vm2017, %v1972
        %2044 = vst.msk [vmem:[#allocation3 + $0xd0] sm:$0xff] %vm2017, %v1974
        %2045 = vst.msk [vmem:[#allocation3 + $0xd8] sm:$0xff] %vm2017, %v1976
        %2046 = vst.msk [vmem:[#allocation3 + $0xe0] sm:$0xff] %vm2017, %v1978
        %2047 = vst.msk [vmem:[#allocation3 + $0xe8] sm:$0xff] %vm2017, %v1980
        %2048 = vst.msk [vmem:[#allocation3 + $0xf0] sm:$0xff] %vm2017, %v1982
        %2049 = vst.msk [vmem:[#allocation3 + $0xf8] sm:$0xff] %vm2017, %v1984
        %v2050 = vld [vmem:[#allocation3] sm:$0xff]
        %v2051 = vld [vmem:[#allocation3 + $0x8] sm:$0xff]
        %v2052 = vld [vmem:[#allocation3 + $0x10] sm:$0xff]
        %v2053 = vld [vmem:[#allocation3 + $0x18] sm:$0xff]
        %v2054 = vld [vmem:[#allocation3 + $0x20] sm:$0xff]
        %v2055 = vld [vmem:[#allocation3 + $0x28] sm:$0xff]
        %v2056 = vld [vmem:[#allocation3 + $0x30] sm:$0xff]
        %v2057 = vld [vmem:[#allocation3 + $0x38] sm:$0xff]
        %v2058 = vld [vmem:[#allocation3 + $0x40] sm:$0xff]
        %v2059 = vld [vmem:[#allocation3 + $0x48] sm:$0xff]
        %v2060 = vld [vmem:[#allocation3 + $0x50] sm:$0xff]
        %v2061 = vld [vmem:[#allocation3 + $0x58] sm:$0xff]
        %v2062 = vld [vmem:[#allocation3 + $0x60] sm:$0xff]
        %v2063 = vld [vmem:[#allocation3 + $0x68] sm:$0xff]
        %v2064 = vld [vmem:[#allocation3 + $0x70] sm:$0xff]
        %v2065 = vld [vmem:[#allocation3 + $0x78] sm:$0xff]
        %v2066 = vld [vmem:[#allocation3 + $0x80] sm:$0xff]
        %v2067 = vld [vmem:[#allocation3 + $0x88] sm:$0xff]
        %v2068 = vld [vmem:[#allocation3 + $0x90] sm:$0xff]
        %v2069 = vld [vmem:[#allocation3 + $0x98] sm:$0xff]
        %v2070 = vld [vmem:[#allocation3 + $0xa0] sm:$0xff]
        %v2071 = vld [vmem:[#allocation3 + $0xa8] sm:$0xff]
        %v2072 = vld [vmem:[#allocation3 + $0xb0] sm:$0xff]
        %v2073 = vld [vmem:[#allocation3 + $0xb8] sm:$0xff]
        %v2074 = vld [vmem:[#allocation3 + $0xc0] sm:$0xff]
        %v2075 = vld [vmem:[#allocation3 + $0xc8] sm:$0xff]
        %v2076 = vld [vmem:[#allocation3 + $0xd0] sm:$0xff]
        %v2077 = vld [vmem:[#allocation3 + $0xd8] sm:$0xff]
        %v2078 = vld [vmem:[#allocation3 + $0xe0] sm:$0xff]
        %v2079 = vld [vmem:[#allocation3 + $0xe8] sm:$0xff]
        %v2080 = vld [vmem:[#allocation3 + $0xf0] sm:$0xff]
        %v2081 = vld [vmem:[#allocation3 + $0xf8] sm:$0xff]
        %v2082 = vld [vmem:[%s1] sm:$0xff]
        %v2083 = vld [vmem:[%s1 + $0x8] sm:$0xff]
        %v2084 = vld [vmem:[%s1 + $0x10] sm:$0xff]
        %v2085 = vld [vmem:[%s1 + $0x18] sm:$0xff]
        %v2086 = vld [vmem:[%s1 + $0x20] sm:$0xf]
        %v2087 = vld [vmem:[%s2] sm:$0x1]
        %v2089 = vlaneseq
        %v2090 = vshrl.u32 %v2089, 7
        %v2091 = vsub.s32 0, %v2090
        %v2092 = vrot.slane %v2087, %v2091
        %vm2094 = vcmask 293888
        %v2096 = vsel %vm2094, %v2050, 0
        %v2099 = vsel %vm2094, %v2051, 0
        %v2102 = vsel %vm2094, %v2052, 0
        %v2105 = vsel %vm2094, %v2053, 0
        %v2108 = vsel %vm2094, %v2054, 0
        %v2111 = vsel %vm2094, %v2055, 0
        %v2114 = vsel %vm2094, %v2056, 0
        %v2117 = vsel %vm2094, %v2057, 0
        %v2120 = vsel %vm2094, %v2058, 0
        %v2123 = vsel %vm2094, %v2059, 0
        %v2126 = vsel %vm2094, %v2060, 0
        %v2129 = vsel %vm2094, %v2061, 0
        %v2132 = vsel %vm2094, %v2062, 0
        %v2135 = vsel %vm2094, %v2063, 0
        %v2138 = vsel %vm2094, %v2064, 0
        %v2141 = vsel %vm2094, %v2065, 0
        %v2144 = vsel %vm2094, %v2066, 0
        %v2147 = vsel %vm2094, %v2067, 0
        %v2150 = vsel %vm2094, %v2068, 0
        %v2153 = vsel %vm2094, %v2069, 0
        %v2156 = vsel %vm2094, %v2070, 0
        %v2159 = vsel %vm2094, %v2071, 0
        %v2162 = vsel %vm2094, %v2072, 0
        %v2165 = vsel %vm2094, %v2073, 0
        %v2168 = vsel %vm2094, %v2074, 0
        %v2171 = vsel %vm2094, %v2075, 0
        %v2174 = vsel %vm2094, %v2076, 0
        %v2177 = vsel %vm2094, %v2077, 0
        %v2180 = vsel %vm2094, %v2078, 0
        %v2183 = vsel %vm2094, %v2079, 0
        %v2186 = vsel %vm2094, %v2080, 0
        %v2189 = vsel %vm2094, %v2081, 0
        %vm2191 = vcmask 1043456
        %v2193 = vsel %vm2191, %v2086, 0
        %2195 = vmatprep.subr.mxu0 0.0
        %2196 = vmatpush1.msra.mxu0 %v2082
        %2197 = vmatprep.subr.mxu0 0.0
        %2198 = vmatpush1.msra.mxu0 %v2083
        %2199 = vmatprep.subr.mxu0 0.0
        %2200 = vmatpush1.msra.mxu0 %v2084
        %2201 = vmatprep.subr.mxu0 0.0
        %2202 = vmatpush1.msra.mxu0 %v2085
        %2203 = vmatprep.subr.mxu0 0.0
        %2204 = vmatpush1.msra.mxu0 %v2193
        %2205 = vmatprep.subr.mxu0 0.0
        %2206 = vmatpush1.msra.mxu0 0.0
        %2207 = vmatprep.subr.mxu0 0.0
        %2208 = vmatpush1.msra.mxu0 0.0
        %2209 = vmatprep.subr.mxu0 0.0
        %2210 = vmatpush1.msra.mxu0 0.0
        %2211 = vmatprep.subr.mxu0 0.0
        %2212 = vmatpush1.msra.mxu0 0.0
        %2213 = vmatprep.subr.mxu0 0.0
        %2214 = vmatpush1.msra.mxu0 0.0
        %2215 = vmatprep.subr.mxu0 0.0
        %2216 = vmatpush1.msra.mxu0 0.0
        %2217 = vmatprep.subr.mxu0 0.0
        %2218 = vmatpush1.msra.mxu0 0.0
        %2219 = vmatprep.subr.mxu0 0.0
        %2220 = vmatpush1.msra.mxu0 0.0
        %2221 = vmatprep.subr.mxu0 0.0
        %2222 = vmatpush1.msra.mxu0 0.0
        %2223 = vmatprep.subr.mxu0 0.0
        %2224 = vmatpush1.msra.mxu0 0.0
        %2225 = vmatprep.subr.mxu0 0.0
        %2226 = vmatpush1.msra.mxu0 0.0
        %2227 = vmatprep.subr.mxu0 0.0
        %2228 = vmatpush1.msra.mxu0 0.0
        %2229 = vmatprep.subr.mxu0 0.0
        %2230 = vmatpush1.msra.mxu0 0.0
        %2231 = vmatprep.subr.mxu0 0.0
        %2232 = vmatpush1.msra.mxu0 0.0
        %2233 = vmatprep.subr.mxu0 0.0
        %2234 = vmatpush1.msra.mxu0 0.0
        %2235 = vmatprep.subr.mxu0 0.0
        %2236 = vmatpush1.msra.mxu0 0.0
        %2237 = vmatprep.subr.mxu0 0.0
        %2238 = vmatpush1.msra.mxu0 0.0
        %2239 = vmatprep.subr.mxu0 0.0
        %2240 = vmatpush1.msra.mxu0 0.0
        %2241 = vmatprep.subr.mxu0 0.0
        %2242 = vmatpush1.msra.mxu0 0.0
        %2243 = vmatprep.subr.mxu0 0.0
        %2244 = vmatpush1.msra.mxu0 0.0
        %2245 = vmatprep.subr.mxu0 0.0
        %2246 = vmatpush1.msra.mxu0 0.0
        %2247 = vmatprep.subr.mxu0 0.0
        %2248 = vmatpush1.msra.mxu0 0.0
        %2249 = vmatprep.subr.mxu0 0.0
        %2250 = vmatpush1.msra.mxu0 0.0
        %2251 = vmatprep.subr.mxu0 0.0
        %2252 = vmatpush1.msra.mxu0 0.0
        %2253 = vmatprep.subr.mxu0 0.0
        %2254 = vmatpush1.msra.mxu0 0.0
        %2255 = vmatprep.subr.mxu0 0.0
        %2256 = vmatpush1.msra.mxu0 0.0
        %2257 = vmatprep.subr.mxu0 0.0
        %2258 = vmatpush1.msra.mxu0 0.0
        %2259 = vmatprep.mubr.f32.mxu0 0.0
        %2260 = vmatmul.mubr.f32.gmra.mrb[0].mxu0 %v2096
        %v2261 = vpop.f32.mrb[0].mxu0
        %v2262 = vadd.f32 %v2092, %v2261
        %v2263 = vpop.f32.mrb[0].mxu0
        %2264 = vmatprep.mubr.f32.mxu0 0.0
        %2265 = vmatmul.mubr.f32.gmra.mrb[0].mxu0 %v2099
        %v2266 = vpop.f32.mrb[0].mxu0
        %v2267 = vadd.f32 %v2092, %v2266
        %v2268 = vpop.f32.mrb[0].mxu0
        %2269 = vmatprep.mubr.f32.mxu0 0.0
        %2270 = vmatmul.mubr.f32.gmra.mrb[0].mxu0 %v2102
        %v2271 = vpop.f32.mrb[0].mxu0
        %v2272 = vadd.f32 %v2092, %v2271
        %v2273 = vpop.f32.mrb[0].mxu0
        %2274 = vmatprep.mubr.f32.mxu0 0.0
        %2275 = vmatmul.mubr.f32.gmra.mrb[0].mxu0 %v2105
        %v2276 = vpop.f32.mrb[0].mxu0
        %v2277 = vadd.f32 %v2092, %v2276
        %v2278 = vpop.f32.mrb[0].mxu0
        %2279 = vmatprep.mubr.f32.mxu0 0.0
        %2280 = vmatmul.mubr.f32.gmra.mrb[0].mxu0 %v2108
        %v2281 = vpop.f32.mrb[0].mxu0
        %v2282 = vadd.f32 %v2092, %v2281
        %v2283 = vpop.f32.mrb[0].mxu0
        %2284 = vmatprep.mubr.f32.mxu0 0.0
        %2285 = vmatmul.mubr.f32.gmra.mrb[0].mxu0 %v2111
        %v2286 = vpop.f32.mrb[0].mxu0
        %v2287 = vadd.f32 %v2092, %v2286
        %v2288 = vpop.f32.mrb[0].mxu0
        %2289 = vmatprep.mubr.f32.mxu0 0.0
        %2290 = vmatmul.mubr.f32.gmra.mrb[0].mxu0 %v2114
        %v2291 = vpop.f32.mrb[0].mxu0
        %v2292 = vadd.f32 %v2092, %v2291
        %v2293 = vpop.f32.mrb[0].mxu0
        %2294 = vmatprep.mubr.f32.mxu0 0.0
        %2295 = vmatmul.mubr.f32.gmra.mrb[0].mxu0 %v2117
        %v2296 = vpop.f32.mrb[0].mxu0
        %v2297 = vadd.f32 %v2092, %v2296
        %v2298 = vpop.f32.mrb[0].mxu0
        %2299 = vmatprep.mubr.f32.mxu0 0.0
        %2300 = vmatmul.mubr.f32.gmra.mrb[0].mxu0 %v2120
        %v2301 = vpop.f32.mrb[0].mxu0
        %v2302 = vadd.f32 %v2092, %v2301
        %v2303 = vpop.f32.mrb[0].mxu0
        %2304 = vmatprep.mubr.f32.mxu0 0.0
        %2305 = vmatmul.mubr.f32.gmra.mrb[0].mxu0 %v2123
        %v2306 = vpop.f32.mrb[0].mxu0
        %v2307 = vadd.f32 %v2092, %v2306
        %v2308 = vpop.f32.mrb[0].mxu0
        %2309 = vmatprep.mubr.f32.mxu0 0.0
        %2310 = vmatmul.mubr.f32.gmra.mrb[0].mxu0 %v2126
        %v2311 = vpop.f32.mrb[0].mxu0
        %v2312 = vadd.f32 %v2092, %v2311
        %v2313 = vpop.f32.mrb[0].mxu0
        %2314 = vmatprep.mubr.f32.mxu0 0.0
        %2315 = vmatmul.mubr.f32.gmra.mrb[0].mxu0 %v2129
        %v2316 = vpop.f32.mrb[0].mxu0
        %v2317 = vadd.f32 %v2092, %v2316
        %v2318 = vpop.f32.mrb[0].mxu0
        %2319 = vmatprep.mubr.f32.mxu0 0.0
        %2320 = vmatmul.mubr.f32.gmra.mrb[0].mxu0 %v2132
        %v2321 = vpop.f32.mrb[0].mxu0
        %v2322 = vadd.f32 %v2092, %v2321
        %v2323 = vpop.f32.mrb[0].mxu0
        %2324 = vmatprep.mubr.f32.mxu0 0.0
        %2325 = vmatmul.mubr.f32.gmra.mrb[0].mxu0 %v2135
        %v2326 = vpop.f32.mrb[0].mxu0
        %v2327 = vadd.f32 %v2092, %v2326
        %v2328 = vpop.f32.mrb[0].mxu0
        %2329 = vmatprep.mubr.f32.mxu0 0.0
        %2330 = vmatmul.mubr.f32.gmra.mrb[0].mxu0 %v2138
        %v2331 = vpop.f32.mrb[0].mxu0
        %v2332 = vadd.f32 %v2092, %v2331
        %v2333 = vpop.f32.mrb[0].mxu0
        %2334 = vmatprep.mubr.f32.mxu0 0.0
        %2335 = vmatmul.mubr.f32.gmra.mrb[0].mxu0 %v2141
        %v2336 = vpop.f32.mrb[0].mxu0
        %v2337 = vadd.f32 %v2092, %v2336
        %v2338 = vpop.f32.mrb[0].mxu0
        %2339 = vmatprep.mubr.f32.mxu0 0.0
        %2340 = vmatmul.mubr.f32.gmra.mrb[0].mxu0 %v2144
        %v2341 = vpop.f32.mrb[0].mxu0
        %v2342 = vadd.f32 %v2092, %v2341
        %v2343 = vpop.f32.mrb[0].mxu0
        %2344 = vmatprep.mubr.f32.mxu0 0.0
        %2345 = vmatmul.mubr.f32.gmra.mrb[0].mxu0 %v2147
        %v2346 = vpop.f32.mrb[0].mxu0
        %v2347 = vadd.f32 %v2092, %v2346
        %v2348 = vpop.f32.mrb[0].mxu0
        %2349 = vmatprep.mubr.f32.mxu0 0.0
        %2350 = vmatmul.mubr.f32.gmra.mrb[0].mxu0 %v2150
        %v2351 = vpop.f32.mrb[0].mxu0
        %v2352 = vadd.f32 %v2092, %v2351
        %v2353 = vpop.f32.mrb[0].mxu0
        %2354 = vmatprep.mubr.f32.mxu0 0.0
        %2355 = vmatmul.mubr.f32.gmra.mrb[0].mxu0 %v2153
        %v2356 = vpop.f32.mrb[0].mxu0
        %v2357 = vadd.f32 %v2092, %v2356
        %v2358 = vpop.f32.mrb[0].mxu0
        %2359 = vmatprep.mubr.f32.mxu0 0.0
        %2360 = vmatmul.mubr.f32.gmra.mrb[0].mxu0 %v2156
        %v2361 = vpop.f32.mrb[0].mxu0
        %v2362 = vadd.f32 %v2092, %v2361
        %v2363 = vpop.f32.mrb[0].mxu0
        %2364 = vmatprep.mubr.f32.mxu0 0.0
        %2365 = vmatmul.mubr.f32.gmra.mrb[0].mxu0 %v2159
        %v2366 = vpop.f32.mrb[0].mxu0
        %v2367 = vadd.f32 %v2092, %v2366
        %v2368 = vpop.f32.mrb[0].mxu0
        %2369 = vmatprep.mubr.f32.mxu0 0.0
        %2370 = vmatmul.mubr.f32.gmra.mrb[0].mxu0 %v2162
        %v2371 = vpop.f32.mrb[0].mxu0
        %v2372 = vadd.f32 %v2092, %v2371
        %v2373 = vpop.f32.mrb[0].mxu0
        %2374 = vmatprep.mubr.f32.mxu0 0.0
        %2375 = vmatmul.mubr.f32.gmra.mrb[0].mxu0 %v2165
        %v2376 = vpop.f32.mrb[0].mxu0
        %v2377 = vadd.f32 %v2092, %v2376
        %v2378 = vpop.f32.mrb[0].mxu0
        %2379 = vmatprep.mubr.f32.mxu0 0.0
        %2380 = vmatmul.mubr.f32.gmra.mrb[0].mxu0 %v2168
        %v2381 = vpop.f32.mrb[0].mxu0
        %v2382 = vadd.f32 %v2092, %v2381
        %v2383 = vpop.f32.mrb[0].mxu0
        %2384 = vmatprep.mubr.f32.mxu0 0.0
        %2385 = vmatmul.mubr.f32.gmra.mrb[0].mxu0 %v2171
        %v2386 = vpop.f32.mrb[0].mxu0
        %v2387 = vadd.f32 %v2092, %v2386
        %v2388 = vpop.f32.mrb[0].mxu0
        %2389 = vmatprep.mubr.f32.mxu0 0.0
        %2390 = vmatmul.mubr.f32.gmra.mrb[0].mxu0 %v2174
        %v2391 = vpop.f32.mrb[0].mxu0
        %v2392 = vadd.f32 %v2092, %v2391
        %v2393 = vpop.f32.mrb[0].mxu0
        %2394 = vmatprep.mubr.f32.mxu0 0.0
        %2395 = vmatmul.mubr.f32.gmra.mrb[0].mxu0 %v2177
        %v2396 = vpop.f32.mrb[0].mxu0
        %v2397 = vadd.f32 %v2092, %v2396
        %v2398 = vpop.f32.mrb[0].mxu0
        %2399 = vmatprep.mubr.f32.mxu0 0.0
        %2400 = vmatmul.mubr.f32.gmra.mrb[0].mxu0 %v2180
        %v2401 = vpop.f32.mrb[0].mxu0
        %v2402 = vadd.f32 %v2092, %v2401
        %v2403 = vpop.f32.mrb[0].mxu0
        %2404 = vmatprep.mubr.f32.mxu0 0.0
        %2405 = vmatmul.mubr.f32.gmra.mrb[0].mxu0 %v2183
        %v2406 = vpop.f32.mrb[0].mxu0
        %v2407 = vadd.f32 %v2092, %v2406
        %v2408 = vpop.f32.mrb[0].mxu0
        %2409 = vmatprep.mubr.f32.mxu0 0.0
        %2410 = vmatmul.mubr.f32.gmra.mrb[0].mxu0 %v2186
        %v2411 = vpop.f32.mrb[0].mxu0
        %v2412 = vadd.f32 %v2092, %v2411
        %v2413 = vpop.f32.mrb[0].mxu0
        %2414 = vmatprep.mubr.f32.mxu0 0.0
        %2415 = vmatmul.mubr.f32.gmra.mrb[0].mxu0 %v2189
        %v2416 = vpop.f32.mrb[0].mxu0
        %v2417 = vadd.f32 %v2092, %v2416
        %v2418 = vpop.f32.mrb[0].mxu0
        %2419 = vdwg.mxu0
        %v2420 = vmax.f32 %v2262, 0.0
        %v2421 = vmax.f32 %v2267, 0.0
        %v2422 = vmax.f32 %v2272, 0.0
        %v2423 = vmax.f32 %v2277, 0.0
        %v2424 = vmax.f32 %v2282, 0.0
        %v2425 = vmax.f32 %v2287, 0.0
        %v2426 = vmax.f32 %v2292, 0.0
        %v2427 = vmax.f32 %v2297, 0.0
        %v2428 = vmax.f32 %v2302, 0.0
        %v2429 = vmax.f32 %v2307, 0.0
        %v2430 = vmax.f32 %v2312, 0.0
        %v2431 = vmax.f32 %v2317, 0.0
        %v2432 = vmax.f32 %v2322, 0.0
        %v2433 = vmax.f32 %v2327, 0.0
        %v2434 = vmax.f32 %v2332, 0.0
        %v2435 = vmax.f32 %v2337, 0.0
        %v2436 = vmax.f32 %v2342, 0.0
        %v2437 = vmax.f32 %v2347, 0.0
        %v2438 = vmax.f32 %v2352, 0.0
        %v2439 = vmax.f32 %v2357, 0.0
        %v2440 = vmax.f32 %v2362, 0.0
        %v2441 = vmax.f32 %v2367, 0.0
        %v2442 = vmax.f32 %v2372, 0.0
        %v2443 = vmax.f32 %v2377, 0.0
        %v2444 = vmax.f32 %v2382, 0.0
        %v2445 = vmax.f32 %v2387, 0.0
        %v2446 = vmax.f32 %v2392, 0.0
        %v2447 = vmax.f32 %v2397, 0.0
        %v2448 = vmax.f32 %v2402, 0.0
        %v2449 = vmax.f32 %v2407, 0.0
        %v2450 = vmax.f32 %v2412, 0.0
        %v2451 = vmax.f32 %v2417, 0.0
        %v2452 = vmax.f32 %v2420, %v2422
        %v2453 = vmax.f32 %v2421, %v2423
        %v2454 = vmax.f32 %v2424, %v2426
        %v2455 = vmax.f32 %v2425, %v2427
        %v2456 = vmax.f32 %v2428, %v2430
        %v2457 = vmax.f32 %v2429, %v2431
        %v2458 = vmax.f32 %v2432, %v2434
        %v2459 = vmax.f32 %v2433, %v2435
        %v2460 = vmax.f32 %v2436, %v2438
        %v2461 = vmax.f32 %v2437, %v2439
        %v2462 = vmax.f32 %v2440, %v2442
        %v2463 = vmax.f32 %v2441, %v2443
        %v2464 = vmax.f32 %v2444, %v2446
        %v2465 = vmax.f32 %v2445, %v2447
        %v2466 = vmax.f32 %v2448, %v2450
        %v2467 = vmax.f32 %v2449, %v2451
        %v2484 = vcombine.high %v2452, %v2452
        %v2486 = vunpack.c.l.s4 1983009808
        %v2487 = vunpack.c.0.s8 %v2486
        %v2488 = vlaneseq
        %v2489 = vshrl.u32 %v2488, 7
        %v2490 = vsub.s32 %v2487, %v2489
        %v2491 = vrot.slane %v2452, %v2490
        %v2493 = vunpack.c.l.s4 1983009808
        %v2494 = vunpack.c.0.s8 %v2493
        %v2495 = vlaneseq
        %v2496 = vshrl.u32 %v2495, 7
        %v2497 = vsub.s32 %v2494, %v2496
        %v2498 = vrot.slane %v2484, %v2497
        %v2499 = vcombine.high %v2491, %v2491
        %v2500 = vcombine.high %v2498, %v2498
        %v2501 = vcombine.high %v2453, %v2453
        %v2503 = vunpack.c.l.s4 1983009808
        %v2504 = vunpack.c.0.s8 %v2503
        %v2505 = vlaneseq
        %v2506 = vshrl.u32 %v2505, 7
        %v2507 = vsub.s32 %v2504, %v2506
        %v2508 = vrot.slane %v2453, %v2507
        %v2510 = vunpack.c.l.s4 1983009808
        %v2511 = vunpack.c.0.s8 %v2510
        %v2512 = vlaneseq
        %v2513 = vshrl.u32 %v2512, 7
        %v2514 = vsub.s32 %v2511, %v2513
        %v2515 = vrot.slane %v2501, %v2514
        %v2516 = vcombine.high %v2508, %v2508
        %v2517 = vcombine.high %v2515, %v2515
        %v2518 = vcombine.high %v2454, %v2454
        %v2520 = vunpack.c.l.s4 1983009808
        %v2521 = vunpack.c.0.s8 %v2520
        %v2522 = vlaneseq
        %v2523 = vshrl.u32 %v2522, 7
        %v2524 = vsub.s32 %v2521, %v2523
        %v2525 = vrot.slane %v2454, %v2524
        %v2527 = vunpack.c.l.s4 1983009808
        %v2528 = vunpack.c.0.s8 %v2527
        %v2529 = vlaneseq
        %v2530 = vshrl.u32 %v2529, 7
        %v2531 = vsub.s32 %v2528, %v2530
        %v2532 = vrot.slane %v2518, %v2531
        %v2533 = vcombine.high %v2525, %v2525
        %v2534 = vcombine.high %v2532, %v2532
        %v2535 = vcombine.high %v2455, %v2455
        %v2537 = vunpack.c.l.s4 1983009808
        %v2538 = vunpack.c.0.s8 %v2537
        %v2539 = vlaneseq
        %v2540 = vshrl.u32 %v2539, 7
        %v2541 = vsub.s32 %v2538, %v2540
        %v2542 = vrot.slane %v2455, %v2541
        %v2544 = vunpack.c.l.s4 1983009808
        %v2545 = vunpack.c.0.s8 %v2544
        %v2546 = vlaneseq
        %v2547 = vshrl.u32 %v2546, 7
        %v2548 = vsub.s32 %v2545, %v2547
        %v2549 = vrot.slane %v2535, %v2548
        %v2550 = vcombine.high %v2542, %v2542
        %v2551 = vcombine.high %v2549, %v2549
        %v2552 = vcombine.high %v2456, %v2456
        %v2554 = vunpack.c.l.s4 1983009808
        %v2555 = vunpack.c.0.s8 %v2554
        %v2556 = vlaneseq
        %v2557 = vshrl.u32 %v2556, 7
        %v2558 = vsub.s32 %v2555, %v2557
        %v2559 = vrot.slane %v2456, %v2558
        %v2561 = vunpack.c.l.s4 1983009808
        %v2562 = vunpack.c.0.s8 %v2561
        %v2563 = vlaneseq
        %v2564 = vshrl.u32 %v2563, 7
        %v2565 = vsub.s32 %v2562, %v2564
        %v2566 = vrot.slane %v2552, %v2565
        %v2567 = vcombine.high %v2559, %v2559
        %v2568 = vcombine.high %v2566, %v2566
        %v2569 = vcombine.high %v2457, %v2457
        %v2571 = vunpack.c.l.s4 1983009808
        %v2572 = vunpack.c.0.s8 %v2571
        %v2573 = vlaneseq
        %v2574 = vshrl.u32 %v2573, 7
        %v2575 = vsub.s32 %v2572, %v2574
        %v2576 = vrot.slane %v2457, %v2575
        %v2578 = vunpack.c.l.s4 1983009808
        %v2579 = vunpack.c.0.s8 %v2578
        %v2580 = vlaneseq
        %v2581 = vshrl.u32 %v2580, 7
        %v2582 = vsub.s32 %v2579, %v2581
        %v2583 = vrot.slane %v2569, %v2582
        %v2584 = vcombine.high %v2576, %v2576
        %v2585 = vcombine.high %v2583, %v2583
        %v2586 = vcombine.high %v2458, %v2458
        %v2588 = vunpack.c.l.s4 1983009808
        %v2589 = vunpack.c.0.s8 %v2588
        %v2590 = vlaneseq
        %v2591 = vshrl.u32 %v2590, 7
        %v2592 = vsub.s32 %v2589, %v2591
        %v2593 = vrot.slane %v2458, %v2592
        %v2595 = vunpack.c.l.s4 1983009808
        %v2596 = vunpack.c.0.s8 %v2595
        %v2597 = vlaneseq
        %v2598 = vshrl.u32 %v2597, 7
        %v2599 = vsub.s32 %v2596, %v2598
        %v2600 = vrot.slane %v2586, %v2599
        %v2601 = vcombine.high %v2593, %v2593
        %v2602 = vcombine.high %v2600, %v2600
        %v2603 = vcombine.high %v2459, %v2459
        %v2605 = vunpack.c.l.s4 1983009808
        %v2606 = vunpack.c.0.s8 %v2605
        %v2607 = vlaneseq
        %v2608 = vshrl.u32 %v2607, 7
        %v2609 = vsub.s32 %v2606, %v2608
        %v2610 = vrot.slane %v2459, %v2609
        %v2612 = vunpack.c.l.s4 1983009808
        %v2613 = vunpack.c.0.s8 %v2612
        %v2614 = vlaneseq
        %v2615 = vshrl.u32 %v2614, 7
        %v2616 = vsub.s32 %v2613, %v2615
        %v2617 = vrot.slane %v2603, %v2616
        %v2618 = vcombine.high %v2610, %v2610
        %v2619 = vcombine.high %v2617, %v2617
        %v2620 = vcombine.high %v2460, %v2460
        %v2622 = vunpack.c.l.s4 1983009808
        %v2623 = vunpack.c.0.s8 %v2622
        %v2624 = vlaneseq
        %v2625 = vshrl.u32 %v2624, 7
        %v2626 = vsub.s32 %v2623, %v2625
        %v2627 = vrot.slane %v2460, %v2626
        %v2629 = vunpack.c.l.s4 1983009808
        %v2630 = vunpack.c.0.s8 %v2629
        %v2631 = vlaneseq
        %v2632 = vshrl.u32 %v2631, 7
        %v2633 = vsub.s32 %v2630, %v2632
        %v2634 = vrot.slane %v2620, %v2633
        %v2635 = vcombine.high %v2627, %v2627
        %v2636 = vcombine.high %v2634, %v2634
        %v2637 = vcombine.high %v2461, %v2461
        %v2639 = vunpack.c.l.s4 1983009808
        %v2640 = vunpack.c.0.s8 %v2639
        %v2641 = vlaneseq
        %v2642 = vshrl.u32 %v2641, 7
        %v2643 = vsub.s32 %v2640, %v2642
        %v2644 = vrot.slane %v2461, %v2643
        %v2646 = vunpack.c.l.s4 1983009808
        %v2647 = vunpack.c.0.s8 %v2646
        %v2648 = vlaneseq
        %v2649 = vshrl.u32 %v2648, 7
        %v2650 = vsub.s32 %v2647, %v2649
        %v2651 = vrot.slane %v2637, %v2650
        %v2652 = vcombine.high %v2644, %v2644
        %v2653 = vcombine.high %v2651, %v2651
        %v2654 = vcombine.high %v2462, %v2462
        %v2656 = vunpack.c.l.s4 1983009808
        %v2657 = vunpack.c.0.s8 %v2656
        %v2658 = vlaneseq
        %v2659 = vshrl.u32 %v2658, 7
        %v2660 = vsub.s32 %v2657, %v2659
        %v2661 = vrot.slane %v2462, %v2660
        %v2663 = vunpack.c.l.s4 1983009808
        %v2664 = vunpack.c.0.s8 %v2663
        %v2665 = vlaneseq
        %v2666 = vshrl.u32 %v2665, 7
        %v2667 = vsub.s32 %v2664, %v2666
        %v2668 = vrot.slane %v2654, %v2667
        %v2669 = vcombine.high %v2661, %v2661
        %v2670 = vcombine.high %v2668, %v2668
        %v2671 = vcombine.high %v2463, %v2463
        %v2673 = vunpack.c.l.s4 1983009808
        %v2674 = vunpack.c.0.s8 %v2673
        %v2675 = vlaneseq
        %v2676 = vshrl.u32 %v2675, 7
        %v2677 = vsub.s32 %v2674, %v2676
        %v2678 = vrot.slane %v2463, %v2677
        %v2680 = vunpack.c.l.s4 1983009808
        %v2681 = vunpack.c.0.s8 %v2680
        %v2682 = vlaneseq
        %v2683 = vshrl.u32 %v2682, 7
        %v2684 = vsub.s32 %v2681, %v2683
        %v2685 = vrot.slane %v2671, %v2684
        %v2686 = vcombine.high %v2678, %v2678
        %v2687 = vcombine.high %v2685, %v2685
        %v2688 = vcombine.high %v2464, %v2464
        %v2690 = vunpack.c.l.s4 1983009808
        %v2691 = vunpack.c.0.s8 %v2690
        %v2692 = vlaneseq
        %v2693 = vshrl.u32 %v2692, 7
        %v2694 = vsub.s32 %v2691, %v2693
        %v2695 = vrot.slane %v2464, %v2694
        %v2697 = vunpack.c.l.s4 1983009808
        %v2698 = vunpack.c.0.s8 %v2697
        %v2699 = vlaneseq
        %v2700 = vshrl.u32 %v2699, 7
        %v2701 = vsub.s32 %v2698, %v2700
        %v2702 = vrot.slane %v2688, %v2701
        %v2703 = vcombine.high %v2695, %v2695
        %v2704 = vcombine.high %v2702, %v2702
        %v2705 = vcombine.high %v2465, %v2465
        %v2707 = vunpack.c.l.s4 1983009808
        %v2708 = vunpack.c.0.s8 %v2707
        %v2709 = vlaneseq
        %v2710 = vshrl.u32 %v2709, 7
        %v2711 = vsub.s32 %v2708, %v2710
        %v2712 = vrot.slane %v2465, %v2711
        %v2714 = vunpack.c.l.s4 1983009808
        %v2715 = vunpack.c.0.s8 %v2714
        %v2716 = vlaneseq
        %v2717 = vshrl.u32 %v2716, 7
        %v2718 = vsub.s32 %v2715, %v2717
        %v2719 = vrot.slane %v2705, %v2718
        %v2720 = vcombine.high %v2712, %v2712
        %v2721 = vcombine.high %v2719, %v2719
        %v2722 = vcombine.high %v2466, %v2466
        %v2724 = vunpack.c.l.s4 1983009808
        %v2725 = vunpack.c.0.s8 %v2724
        %v2726 = vlaneseq
        %v2727 = vshrl.u32 %v2726, 7
        %v2728 = vsub.s32 %v2725, %v2727
        %v2729 = vrot.slane %v2466, %v2728
        %v2731 = vunpack.c.l.s4 1983009808
        %v2732 = vunpack.c.0.s8 %v2731
        %v2733 = vlaneseq
        %v2734 = vshrl.u32 %v2733, 7
        %v2735 = vsub.s32 %v2732, %v2734
        %v2736 = vrot.slane %v2722, %v2735
        %v2737 = vcombine.high %v2729, %v2729
        %v2738 = vcombine.high %v2736, %v2736
        %v2739 = vcombine.high %v2467, %v2467
        %v2741 = vunpack.c.l.s4 1983009808
        %v2742 = vunpack.c.0.s8 %v2741
        %v2743 = vlaneseq
        %v2744 = vshrl.u32 %v2743, 7
        %v2745 = vsub.s32 %v2742, %v2744
        %v2746 = vrot.slane %v2467, %v2745
        %v2748 = vunpack.c.l.s4 1983009808
        %v2749 = vunpack.c.0.s8 %v2748
        %v2750 = vlaneseq
        %v2751 = vshrl.u32 %v2750, 7
        %v2752 = vsub.s32 %v2749, %v2751
        %v2753 = vrot.slane %v2739, %v2752
        %v2754 = vcombine.high %v2746, %v2746
        %v2755 = vcombine.high %v2753, %v2753
        %v2820 = vrot.slane %v2491, 7
        %v2821 = vrot.slane %v2820, 2
        %v2822 = vrot.slane %v2499, 7
        %v2823 = vrot.slane %v2822, 2
        %v2824 = vrot.slane %v2498, 7
        %v2825 = vrot.slane %v2824, 2
        %v2826 = vrot.slane %v2500, 7
        %v2827 = vrot.slane %v2826, 2
        %v2828 = vrot.slane %v2508, 7
        %v2829 = vrot.slane %v2828, 2
        %v2830 = vrot.slane %v2516, 7
        %v2831 = vrot.slane %v2830, 2
        %v2832 = vrot.slane %v2515, 7
        %v2833 = vrot.slane %v2832, 2
        %v2834 = vrot.slane %v2517, 7
        %v2835 = vrot.slane %v2834, 2
        %v2836 = vrot.slane %v2525, 7
        %v2837 = vrot.slane %v2836, 2
        %v2838 = vrot.slane %v2533, 7
        %v2839 = vrot.slane %v2838, 2
        %v2840 = vrot.slane %v2532, 7
        %v2841 = vrot.slane %v2840, 2
        %v2842 = vrot.slane %v2534, 7
        %v2843 = vrot.slane %v2842, 2
        %v2844 = vrot.slane %v2542, 7
        %v2845 = vrot.slane %v2844, 2
        %v2846 = vrot.slane %v2550, 7
        %v2847 = vrot.slane %v2846, 2
        %v2848 = vrot.slane %v2549, 7
        %v2849 = vrot.slane %v2848, 2
        %v2850 = vrot.slane %v2551, 7
        %v2851 = vrot.slane %v2850, 2
        %v2852 = vrot.slane %v2559, 7
        %v2853 = vrot.slane %v2852, 2
        %v2854 = vrot.slane %v2567, 7
        %v2855 = vrot.slane %v2854, 2
        %v2856 = vrot.slane %v2566, 7
        %v2857 = vrot.slane %v2856, 2
        %v2858 = vrot.slane %v2568, 7
        %v2859 = vrot.slane %v2858, 2
        %v2860 = vrot.slane %v2576, 7
        %v2861 = vrot.slane %v2860, 2
        %v2862 = vrot.slane %v2584, 7
        %v2863 = vrot.slane %v2862, 2
        %v2864 = vrot.slane %v2583, 7
        %v2865 = vrot.slane %v2864, 2
        %v2866 = vrot.slane %v2585, 7
        %v2867 = vrot.slane %v2866, 2
        %v2868 = vrot.slane %v2593, 7
        %v2869 = vrot.slane %v2868, 2
        %v2870 = vrot.slane %v2601, 7
        %v2871 = vrot.slane %v2870, 2
        %v2872 = vrot.slane %v2600, 7
        %v2873 = vrot.slane %v2872, 2
        %v2874 = vrot.slane %v2602, 7
        %v2875 = vrot.slane %v2874, 2
        %v2876 = vrot.slane %v2610, 7
        %v2877 = vrot.slane %v2876, 2
        %v2878 = vrot.slane %v2618, 7
        %v2879 = vrot.slane %v2878, 2
        %v2880 = vrot.slane %v2617, 7
        %v2881 = vrot.slane %v2880, 2
        %v2882 = vrot.slane %v2619, 7
        %v2883 = vrot.slane %v2882, 2
        %v2884 = vrot.slane %v2627, 7
        %v2885 = vrot.slane %v2884, 2
        %v2886 = vrot.slane %v2635, 7
        %v2887 = vrot.slane %v2886, 2
        %v2888 = vrot.slane %v2634, 7
        %v2889 = vrot.slane %v2888, 2
        %v2890 = vrot.slane %v2636, 7
        %v2891 = vrot.slane %v2890, 2
        %v2892 = vrot.slane %v2644, 7
        %v2893 = vrot.slane %v2892, 2
        %v2894 = vrot.slane %v2652, 7
        %v2895 = vrot.slane %v2894, 2
        %v2896 = vrot.slane %v2651, 7
        %v2897 = vrot.slane %v2896, 2
        %v2898 = vrot.slane %v2653, 7
        %v2899 = vrot.slane %v2898, 2
        %v2900 = vrot.slane %v2661, 7
        %v2901 = vrot.slane %v2900, 2
        %v2902 = vrot.slane %v2669, 7
        %v2903 = vrot.slane %v2902, 2
        %v2904 = vrot.slane %v2668, 7
        %v2905 = vrot.slane %v2904, 2
        %v2906 = vrot.slane %v2670, 7
        %v2907 = vrot.slane %v2906, 2
        %v2908 = vrot.slane %v2678, 7
        %v2909 = vrot.slane %v2908, 2
        %v2910 = vrot.slane %v2686, 7
        %v2911 = vrot.slane %v2910, 2
        %v2912 = vrot.slane %v2685, 7
        %v2913 = vrot.slane %v2912, 2
        %v2914 = vrot.slane %v2687, 7
        %v2915 = vrot.slane %v2914, 2
        %v2916 = vrot.slane %v2695, 7
        %v2917 = vrot.slane %v2916, 2
        %v2918 = vrot.slane %v2703, 7
        %v2919 = vrot.slane %v2918, 2
        %v2920 = vrot.slane %v2702, 7
        %v2921 = vrot.slane %v2920, 2
        %v2922 = vrot.slane %v2704, 7
        %v2923 = vrot.slane %v2922, 2
        %v2924 = vrot.slane %v2712, 7
        %v2925 = vrot.slane %v2924, 2
        %v2926 = vrot.slane %v2720, 7
        %v2927 = vrot.slane %v2926, 2
        %v2928 = vrot.slane %v2719, 7
        %v2929 = vrot.slane %v2928, 2
        %v2930 = vrot.slane %v2721, 7
        %v2931 = vrot.slane %v2930, 2
        %v2932 = vrot.slane %v2729, 7
        %v2933 = vrot.slane %v2932, 2
        %v2934 = vrot.slane %v2737, 7
        %v2935 = vrot.slane %v2934, 2
        %v2936 = vrot.slane %v2736, 7
        %v2937 = vrot.slane %v2936, 2
        %v2938 = vrot.slane %v2738, 7
        %v2939 = vrot.slane %v2938, 2
        %v2940 = vrot.slane %v2746, 7
        %v2941 = vrot.slane %v2940, 2
        %v2942 = vrot.slane %v2754, 7
        %v2943 = vrot.slane %v2942, 2
        %v2944 = vrot.slane %v2753, 7
        %v2945 = vrot.slane %v2944, 2
        %v2946 = vrot.slane %v2755, 7
        %v2947 = vrot.slane %v2946, 2
        %v3012 = vmax.f32 %v2491, %v2821
        %v3013 = vmax.f32 %v2499, %v2823
        %v3014 = vmax.f32 %v2498, %v2825
        %v3015 = vmax.f32 %v2500, %v2827
        %v3016 = vmax.f32 %v2508, %v2829
        %v3017 = vmax.f32 %v2516, %v2831
        %v3018 = vmax.f32 %v2515, %v2833
        %v3019 = vmax.f32 %v2517, %v2835
        %v3020 = vmax.f32 %v2525, %v2837
        %v3021 = vmax.f32 %v2533, %v2839
        %v3022 = vmax.f32 %v2532, %v2841
        %v3023 = vmax.f32 %v2534, %v2843
        %v3024 = vmax.f32 %v2542, %v2845
        %v3025 = vmax.f32 %v2550, %v2847
        %v3026 = vmax.f32 %v2549, %v2849
        %v3027 = vmax.f32 %v2551, %v2851
        %v3028 = vmax.f32 %v2559, %v2853
        %v3029 = vmax.f32 %v2567, %v2855
        %v3030 = vmax.f32 %v2566, %v2857
        %v3031 = vmax.f32 %v2568, %v2859
        %v3032 = vmax.f32 %v2576, %v2861
        %v3033 = vmax.f32 %v2584, %v2863
        %v3034 = vmax.f32 %v2583, %v2865
        %v3035 = vmax.f32 %v2585, %v2867
        %v3036 = vmax.f32 %v2593, %v2869
        %v3037 = vmax.f32 %v2601, %v2871
        %v3038 = vmax.f32 %v2600, %v2873
        %v3039 = vmax.f32 %v2602, %v2875
        %v3040 = vmax.f32 %v2610, %v2877
        %v3041 = vmax.f32 %v2618, %v2879
        %v3042 = vmax.f32 %v2617, %v2881
        %v3043 = vmax.f32 %v2619, %v2883
        %v3044 = vmax.f32 %v2627, %v2885
        %v3045 = vmax.f32 %v2635, %v2887
        %v3046 = vmax.f32 %v2634, %v2889
        %v3047 = vmax.f32 %v2636, %v2891
        %v3048 = vmax.f32 %v2644, %v2893
        %v3049 = vmax.f32 %v2652, %v2895
        %v3050 = vmax.f32 %v2651, %v2897
        %v3051 = vmax.f32 %v2653, %v2899
        %v3052 = vmax.f32 %v2661, %v2901
        %v3053 = vmax.f32 %v2669, %v2903
        %v3054 = vmax.f32 %v2668, %v2905
        %v3055 = vmax.f32 %v2670, %v2907
        %v3056 = vmax.f32 %v2678, %v2909
        %v3057 = vmax.f32 %v2686, %v2911
        %v3058 = vmax.f32 %v2685, %v2913
        %v3059 = vmax.f32 %v2687, %v2915
        %v3060 = vmax.f32 %v2695, %v2917
        %v3061 = vmax.f32 %v2703, %v2919
        %v3062 = vmax.f32 %v2702, %v2921
        %v3063 = vmax.f32 %v2704, %v2923
        %v3064 = vmax.f32 %v2712, %v2925
        %v3065 = vmax.f32 %v2720, %v2927
        %v3066 = vmax.f32 %v2719, %v2929
        %v3067 = vmax.f32 %v2721, %v2931
        %v3068 = vmax.f32 %v2729, %v2933
        %v3069 = vmax.f32 %v2737, %v2935
        %v3070 = vmax.f32 %v2736, %v2937
        %v3071 = vmax.f32 %v2738, %v2939
        %v3072 = vmax.f32 %v2746, %v2941
        %v3073 = vmax.f32 %v2754, %v2943
        %v3074 = vmax.f32 %v2753, %v2945
        %v3075 = vmax.f32 %v2755, %v2947
        %v3076 = vmul.f32 %v3012, 255.0
        %v3077 = vmul.f32 %v3013, 255.0
        %v3078 = vmul.f32 %v3014, 255.0
        %v3079 = vmul.f32 %v3015, 255.0
        %v3080 = vmul.f32 %v3016, 255.0
        %v3081 = vmul.f32 %v3017, 255.0
        %v3082 = vmul.f32 %v3018, 255.0
        %v3083 = vmul.f32 %v3019, 255.0
        %v3084 = vmul.f32 %v3020, 255.0
        %v3085 = vmul.f32 %v3021, 255.0
        %v3086 = vmul.f32 %v3022, 255.0
        %v3087 = vmul.f32 %v3023, 255.0
        %v3088 = vmul.f32 %v3024, 255.0
        %v3089 = vmul.f32 %v3025, 255.0
        %v3090 = vmul.f32 %v3026, 255.0
        %v3091 = vmul.f32 %v3027, 255.0
        %v3092 = vmul.f32 %v3028, 255.0
        %v3093 = vmul.f32 %v3029, 255.0
        %v3094 = vmul.f32 %v3030, 255.0
        %v3095 = vmul.f32 %v3031, 255.0
        %v3096 = vmul.f32 %v3032, 255.0
        %v3097 = vmul.f32 %v3033, 255.0
        %v3098 = vmul.f32 %v3034, 255.0
        %v3099 = vmul.f32 %v3035, 255.0
        %v3100 = vmul.f32 %v3036, 255.0
        %v3101 = vmul.f32 %v3037, 255.0
        %v3102 = vmul.f32 %v3038, 255.0
        %v3103 = vmul.f32 %v3039, 255.0
        %v3104 = vmul.f32 %v3040, 255.0
        %v3105 = vmul.f32 %v3041, 255.0
        %v3106 = vmul.f32 %v3042, 255.0
        %v3107 = vmul.f32 %v3043, 255.0
        %v3108 = vmul.f32 %v3044, 255.0
        %v3109 = vmul.f32 %v3045, 255.0
        %v3110 = vmul.f32 %v3046, 255.0
        %v3111 = vmul.f32 %v3047, 255.0
        %v3112 = vmul.f32 %v3048, 255.0
        %v3113 = vmul.f32 %v3049, 255.0
        %v3114 = vmul.f32 %v3050, 255.0
        %v3115 = vmul.f32 %v3051, 255.0
        %v3116 = vmul.f32 %v3052, 255.0
        %v3117 = vmul.f32 %v3053, 255.0
        %v3118 = vmul.f32 %v3054, 255.0
        %v3119 = vmul.f32 %v3055, 255.0
        %v3120 = vmul.f32 %v3056, 255.0
        %v3121 = vmul.f32 %v3057, 255.0
        %v3122 = vmul.f32 %v3058, 255.0
        %v3123 = vmul.f32 %v3059, 255.0
        %v3124 = vmul.f32 %v3060, 255.0
        %v3125 = vmul.f32 %v3061, 255.0
        %v3126 = vmul.f32 %v3062, 255.0
        %v3127 = vmul.f32 %v3063, 255.0
        %v3128 = vmul.f32 %v3064, 255.0
        %v3129 = vmul.f32 %v3065, 255.0
        %v3130 = vmul.f32 %v3066, 255.0
        %v3131 = vmul.f32 %v3067, 255.0
        %v3132 = vmul.f32 %v3068, 255.0
        %v3133 = vmul.f32 %v3069, 255.0
        %v3134 = vmul.f32 %v3070, 255.0
        %v3135 = vmul.f32 %v3071, 255.0
        %v3136 = vmul.f32 %v3072, 255.0
        %v3137 = vmul.f32 %v3073, 255.0
        %v3138 = vmul.f32 %v3074, 255.0
        %v3139 = vmul.f32 %v3075, 255.0
        %v3140 = vround.ne.pseudo %v3076
        %v3141 = vround.ne.pseudo %v3077
        %v3142 = vround.ne.pseudo %v3078
        %v3143 = vround.ne.pseudo %v3079
        %v3144 = vround.ne.pseudo %v3080
        %v3145 = vround.ne.pseudo %v3081
        %v3146 = vround.ne.pseudo %v3082
        %v3147 = vround.ne.pseudo %v3083
        %v3148 = vround.ne.pseudo %v3084
        %v3149 = vround.ne.pseudo %v3085
        %v3150 = vround.ne.pseudo %v3086
        %v3151 = vround.ne.pseudo %v3087
        %v3152 = vround.ne.pseudo %v3088
        %v3153 = vround.ne.pseudo %v3089
        %v3154 = vround.ne.pseudo %v3090
        %v3155 = vround.ne.pseudo %v3091
        %v3156 = vround.ne.pseudo %v3092
        %v3157 = vround.ne.pseudo %v3093
        %v3158 = vround.ne.pseudo %v3094
        %v3159 = vround.ne.pseudo %v3095
        %v3160 = vround.ne.pseudo %v3096
        %v3161 = vround.ne.pseudo %v3097
        %v3162 = vround.ne.pseudo %v3098
        %v3163 = vround.ne.pseudo %v3099
        %v3164 = vround.ne.pseudo %v3100
        %v3165 = vround.ne.pseudo %v3101
        %v3166 = vround.ne.pseudo %v3102
        %v3167 = vround.ne.pseudo %v3103
        %v3168 = vround.ne.pseudo %v3104
        %v3169 = vround.ne.pseudo %v3105
        %v3170 = vround.ne.pseudo %v3106
        %v3171 = vround.ne.pseudo %v3107
        %v3172 = vround.ne.pseudo %v3108
        %v3173 = vround.ne.pseudo %v3109
        %v3174 = vround.ne.pseudo %v3110
        %v3175 = vround.ne.pseudo %v3111
        %v3176 = vround.ne.pseudo %v3112
        %v3177 = vround.ne.pseudo %v3113
        %v3178 = vround.ne.pseudo %v3114
        %v3179 = vround.ne.pseudo %v3115
        %v3180 = vround.ne.pseudo %v3116
        %v3181 = vround.ne.pseudo %v3117
        %v3182 = vround.ne.pseudo %v3118
        %v3183 = vround.ne.pseudo %v3119
        %v3184 = vround.ne.pseudo %v3120
        %v3185 = vround.ne.pseudo %v3121
        %v3186 = vround.ne.pseudo %v3122
        %v3187 = vround.ne.pseudo %v3123
        %v3188 = vround.ne.pseudo %v3124
        %v3189 = vround.ne.pseudo %v3125
        %v3190 = vround.ne.pseudo %v3126
        %v3191 = vround.ne.pseudo %v3127
        %v3192 = vround.ne.pseudo %v3128
        %v3193 = vround.ne.pseudo %v3129
        %v3194 = vround.ne.pseudo %v3130
        %v3195 = vround.ne.pseudo %v3131
        %v3196 = vround.ne.pseudo %v3132
        %v3197 = vround.ne.pseudo %v3133
        %v3198 = vround.ne.pseudo %v3134
        %v3199 = vround.ne.pseudo %v3135
        %v3200 = vround.ne.pseudo %v3136
        %v3201 = vround.ne.pseudo %v3137
        %v3202 = vround.ne.pseudo %v3138
        %v3203 = vround.ne.pseudo %v3139
        %v3204 = vmax.f32 %v3140, 0.0
        %v3205 = vmax.f32 %v3141, 0.0
        %v3206 = vmax.f32 %v3142, 0.0
        %v3207 = vmax.f32 %v3143, 0.0
        %v3208 = vmax.f32 %v3144, 0.0
        %v3209 = vmax.f32 %v3145, 0.0
        %v3210 = vmax.f32 %v3146, 0.0
        %v3211 = vmax.f32 %v3147, 0.0
        %v3212 = vmax.f32 %v3148, 0.0
        %v3213 = vmax.f32 %v3149, 0.0
        %v3214 = vmax.f32 %v3150, 0.0
        %v3215 = vmax.f32 %v3151, 0.0
        %v3216 = vmax.f32 %v3152, 0.0
        %v3217 = vmax.f32 %v3153, 0.0
        %v3218 = vmax.f32 %v3154, 0.0
        %v3219 = vmax.f32 %v3155, 0.0
        %v3220 = vmax.f32 %v3156, 0.0
        %v3221 = vmax.f32 %v3157, 0.0
        %v3222 = vmax.f32 %v3158, 0.0
        %v3223 = vmax.f32 %v3159, 0.0
        %v3224 = vmax.f32 %v3160, 0.0
        %v3225 = vmax.f32 %v3161, 0.0
        %v3226 = vmax.f32 %v3162, 0.0
        %v3227 = vmax.f32 %v3163, 0.0
        %v3228 = vmax.f32 %v3164, 0.0
        %v3229 = vmax.f32 %v3165, 0.0
        %v3230 = vmax.f32 %v3166, 0.0
        %v3231 = vmax.f32 %v3167, 0.0
        %v3232 = vmax.f32 %v3168, 0.0
        %v3233 = vmax.f32 %v3169, 0.0
        %v3234 = vmax.f32 %v3170, 0.0
        %v3235 = vmax.f32 %v3171, 0.0
        %v3236 = vmax.f32 %v3172, 0.0
        %v3237 = vmax.f32 %v3173, 0.0
        %v3238 = vmax.f32 %v3174, 0.0
        %v3239 = vmax.f32 %v3175, 0.0
        %v3240 = vmax.f32 %v3176, 0.0
        %v3241 = vmax.f32 %v3177, 0.0
        %v3242 = vmax.f32 %v3178, 0.0
        %v3243 = vmax.f32 %v3179, 0.0
        %v3244 = vmax.f32 %v3180, 0.0
        %v3245 = vmax.f32 %v3181, 0.0
        %v3246 = vmax.f32 %v3182, 0.0
        %v3247 = vmax.f32 %v3183, 0.0
        %v3248 = vmax.f32 %v3184, 0.0
        %v3249 = vmax.f32 %v3185, 0.0
        %v3250 = vmax.f32 %v3186, 0.0
        %v3251 = vmax.f32 %v3187, 0.0
        %v3252 = vmax.f32 %v3188, 0.0
        %v3253 = vmax.f32 %v3189, 0.0
        %v3254 = vmax.f32 %v3190, 0.0
        %v3255 = vmax.f32 %v3191, 0.0
        %v3256 = vmax.f32 %v3192, 0.0
        %v3257 = vmax.f32 %v3193, 0.0
        %v3258 = vmax.f32 %v3194, 0.0
        %v3259 = vmax.f32 %v3195, 0.0
        %v3260 = vmax.f32 %v3196, 0.0
        %v3261 = vmax.f32 %v3197, 0.0
        %v3262 = vmax.f32 %v3198, 0.0
        %v3263 = vmax.f32 %v3199, 0.0
        %v3264 = vmax.f32 %v3200, 0.0
        %v3265 = vmax.f32 %v3201, 0.0
        %v3266 = vmax.f32 %v3202, 0.0
        %v3267 = vmax.f32 %v3203, 0.0
        %v3268 = vmin.f32 %v3204, 255.0
        %v3269 = vmin.f32 %v3205, 255.0
        %v3270 = vmin.f32 %v3206, 255.0
        %v3271 = vmin.f32 %v3207, 255.0
        %v3272 = vmin.f32 %v3208, 255.0
        %v3273 = vmin.f32 %v3209, 255.0
        %v3274 = vmin.f32 %v3210, 255.0
        %v3275 = vmin.f32 %v3211, 255.0
        %v3276 = vmin.f32 %v3212, 255.0
        %v3277 = vmin.f32 %v3213, 255.0
        %v3278 = vmin.f32 %v3214, 255.0
        %v3279 = vmin.f32 %v3215, 255.0
        %v3280 = vmin.f32 %v3216, 255.0
        %v3281 = vmin.f32 %v3217, 255.0
        %v3282 = vmin.f32 %v3218, 255.0
        %v3283 = vmin.f32 %v3219, 255.0
        %v3284 = vmin.f32 %v3220, 255.0
        %v3285 = vmin.f32 %v3221, 255.0
        %v3286 = vmin.f32 %v3222, 255.0
        %v3287 = vmin.f32 %v3223, 255.0
        %v3288 = vmin.f32 %v3224, 255.0
        %v3289 = vmin.f32 %v3225, 255.0
        %v3290 = vmin.f32 %v3226, 255.0
        %v3291 = vmin.f32 %v3227, 255.0
        %v3292 = vmin.f32 %v3228, 255.0
        %v3293 = vmin.f32 %v3229, 255.0
        %v3294 = vmin.f32 %v3230, 255.0
        %v3295 = vmin.f32 %v3231, 255.0
        %v3296 = vmin.f32 %v3232, 255.0
        %v3297 = vmin.f32 %v3233, 255.0
        %v3298 = vmin.f32 %v3234, 255.0
        %v3299 = vmin.f32 %v3235, 255.0
        %v3300 = vmin.f32 %v3236, 255.0
        %v3301 = vmin.f32 %v3237, 255.0
        %v3302 = vmin.f32 %v3238, 255.0
        %v3303 = vmin.f32 %v3239, 255.0
        %v3304 = vmin.f32 %v3240, 255.0
        %v3305 = vmin.f32 %v3241, 255.0
        %v3306 = vmin.f32 %v3242, 255.0
        %v3307 = vmin.f32 %v3243, 255.0
        %v3308 = vmin.f32 %v3244, 255.0
        %v3309 = vmin.f32 %v3245, 255.0
        %v3310 = vmin.f32 %v3246, 255.0
        %v3311 = vmin.f32 %v3247, 255.0
        %v3312 = vmin.f32 %v3248, 255.0
        %v3313 = vmin.f32 %v3249, 255.0
        %v3314 = vmin.f32 %v3250, 255.0
        %v3315 = vmin.f32 %v3251, 255.0
        %v3316 = vmin.f32 %v3252, 255.0
        %v3317 = vmin.f32 %v3253, 255.0
        %v3318 = vmin.f32 %v3254, 255.0
        %v3319 = vmin.f32 %v3255, 255.0
        %v3320 = vmin.f32 %v3256, 255.0
        %v3321 = vmin.f32 %v3257, 255.0
        %v3322 = vmin.f32 %v3258, 255.0
        %v3323 = vmin.f32 %v3259, 255.0
        %v3324 = vmin.f32 %v3260, 255.0
        %v3325 = vmin.f32 %v3261, 255.0
        %v3326 = vmin.f32 %v3262, 255.0
        %v3327 = vmin.f32 %v3263, 255.0
        %v3328 = vmin.f32 %v3264, 255.0
        %v3329 = vmin.f32 %v3265, 255.0
        %v3330 = vmin.f32 %v3266, 255.0
        %v3331 = vmin.f32 %v3267, 255.0
        %v3332 = vmul.f32 %v3268, 0.003921569
        %v3333 = vmul.f32 %v3269, 0.003921569
        %v3334 = vmul.f32 %v3270, 0.003921569
        %v3335 = vmul.f32 %v3271, 0.003921569
        %v3336 = vmul.f32 %v3272, 0.003921569
        %v3337 = vmul.f32 %v3273, 0.003921569
        %v3338 = vmul.f32 %v3274, 0.003921569
        %v3339 = vmul.f32 %v3275, 0.003921569
        %v3340 = vmul.f32 %v3276, 0.003921569
        %v3341 = vmul.f32 %v3277, 0.003921569
        %v3342 = vmul.f32 %v3278, 0.003921569
        %v3343 = vmul.f32 %v3279, 0.003921569
        %v3344 = vmul.f32 %v3280, 0.003921569
        %v3345 = vmul.f32 %v3281, 0.003921569
        %v3346 = vmul.f32 %v3282, 0.003921569
        %v3347 = vmul.f32 %v3283, 0.003921569
        %v3348 = vmul.f32 %v3284, 0.003921569
        %v3349 = vmul.f32 %v3285, 0.003921569
        %v3350 = vmul.f32 %v3286, 0.003921569
        %v3351 = vmul.f32 %v3287, 0.003921569
        %v3352 = vmul.f32 %v3288, 0.003921569
        %v3353 = vmul.f32 %v3289, 0.003921569
        %v3354 = vmul.f32 %v3290, 0.003921569
        %v3355 = vmul.f32 %v3291, 0.003921569
        %v3356 = vmul.f32 %v3292, 0.003921569
        %v3357 = vmul.f32 %v3293, 0.003921569
        %v3358 = vmul.f32 %v3294, 0.003921569
        %v3359 = vmul.f32 %v3295, 0.003921569
        %v3360 = vmul.f32 %v3296, 0.003921569
        %v3361 = vmul.f32 %v3297, 0.003921569
        %v3362 = vmul.f32 %v3298, 0.003921569
        %v3363 = vmul.f32 %v3299, 0.003921569
        %v3364 = vmul.f32 %v3300, 0.003921569
        %v3365 = vmul.f32 %v3301, 0.003921569
        %v3366 = vmul.f32 %v3302, 0.003921569
        %v3367 = vmul.f32 %v3303, 0.003921569
        %v3368 = vmul.f32 %v3304, 0.003921569
        %v3369 = vmul.f32 %v3305, 0.003921569
        %v3370 = vmul.f32 %v3306, 0.003921569
        %v3371 = vmul.f32 %v3307, 0.003921569
        %v3372 = vmul.f32 %v3308, 0.003921569
        %v3373 = vmul.f32 %v3309, 0.003921569
        %v3374 = vmul.f32 %v3310, 0.003921569
        %v3375 = vmul.f32 %v3311, 0.003921569
        %v3376 = vmul.f32 %v3312, 0.003921569
        %v3377 = vmul.f32 %v3313, 0.003921569
        %v3378 = vmul.f32 %v3314, 0.003921569
        %v3379 = vmul.f32 %v3315, 0.003921569
        %v3380 = vmul.f32 %v3316, 0.003921569
        %v3381 = vmul.f32 %v3317, 0.003921569
        %v3382 = vmul.f32 %v3318, 0.003921569
        %v3383 = vmul.f32 %v3319, 0.003921569
        %v3384 = vmul.f32 %v3320, 0.003921569
        %v3385 = vmul.f32 %v3321, 0.003921569
        %v3386 = vmul.f32 %v3322, 0.003921569
        %v3387 = vmul.f32 %v3323, 0.003921569
        %v3388 = vmul.f32 %v3324, 0.003921569
        %v3389 = vmul.f32 %v3325, 0.003921569
        %v3390 = vmul.f32 %v3326, 0.003921569
        %v3391 = vmul.f32 %v3327, 0.003921569
        %v3392 = vmul.f32 %v3328, 0.003921569
        %v3393 = vmul.f32 %v3329, 0.003921569
        %v3394 = vmul.f32 %v3330, 0.003921569
        %v3395 = vmul.f32 %v3331, 0.003921569
        %vm3396 = vcmask 64512
        %3397 = vst.msk [vmem:[#allocation4] sm:$0xff] %vm3396, 0.0
        %vm3398 = vcmask 58368
        %3399 = vst.msk [vmem:[#allocation4 + $0x8] sm:$0x3] %vm3398, 0.0
        %s3400 = scalar_lea.vmem [#allocation4], 144
        %3401 = vst.msk [vmem:[%s3400] sm:$0xff] %vm3396, 0.0
        %3402 = vst.msk [vmem:[%s3400 + $0x8] sm:$0x3] %vm3398, 0.0
        %vm3403 = vcmask 57344
        %3404 = vst.msk [vmem:[#allocation4] sm:$0x1] %vm3403, 0.0
        %3405 = vst.msk [vmem:[#allocation4 + $0x10] sm:$0x1] %vm3403, 0.0
        %3406 = vst.msk [vmem:[#allocation4 + $0x20] sm:$0x1] %vm3403, 0.0
        %3407 = vst.msk [vmem:[#allocation4 + $0x30] sm:$0x1] %vm3403, 0.0
        %3408 = vst.msk [vmem:[#allocation4 + $0x40] sm:$0x1] %vm3403, 0.0
        %3409 = vst.msk [vmem:[#allocation4 + $0x50] sm:$0x1] %vm3403, 0.0
        %3410 = vst.msk [vmem:[#allocation4 + $0x60] sm:$0x1] %vm3403, 0.0
        %3411 = vst.msk [vmem:[#allocation4 + $0x70] sm:$0x1] %vm3403, 0.0
        %3412 = vst.msk [vmem:[#allocation4 + $0x80] sm:$0x1] %vm3403, 0.0
        %3413 = vst.msk [vmem:[#allocation4 + $0x90] sm:$0x1] %vm3403, 0.0
        %3414 = vst.msk [vmem:[#allocation4 + $0x9] sm:$0x1] %vm3403, 0.0
        %3415 = vst.msk [vmem:[#allocation4 + $0x19] sm:$0x1] %vm3403, 0.0
        %3416 = vst.msk [vmem:[#allocation4 + $0x29] sm:$0x1] %vm3403, 0.0
        %3417 = vst.msk [vmem:[#allocation4 + $0x39] sm:$0x1] %vm3403, 0.0
        %3418 = vst.msk [vmem:[#allocation4 + $0x49] sm:$0x1] %vm3403, 0.0
        %3419 = vst.msk [vmem:[#allocation4 + $0x59] sm:$0x1] %vm3403, 0.0
        %3420 = vst.msk [vmem:[#allocation4 + $0x69] sm:$0x1] %vm3403, 0.0
        %3421 = vst.msk [vmem:[#allocation4 + $0x79] sm:$0x1] %vm3403, 0.0
        %3422 = vst.msk [vmem:[#allocation4 + $0x89] sm:$0x1] %vm3403, 0.0
        %3423 = vst.msk [vmem:[#allocation4 + $0x99] sm:$0x1] %vm3403, 0.0
        %v3488 = vlaneseq
        %v3489 = vshrl.u32 %v3488, 7
        %v3490 = vsub.s32 0, %v3489
        %v3491 = vrot.slane %v3332, %v3490
        %v3492 = vlaneseq
        %v3493 = vshrl.u32 %v3492, 7
        %v3494 = vsub.s32 0, %v3493
        %v3495 = vrot.slane %v3333, %v3494
        %v3496 = vlaneseq
        %v3497 = vshrl.u32 %v3496, 7
        %v3498 = vsub.s32 0, %v3497
        %v3499 = vrot.slane %v3334, %v3498
        %v3500 = vlaneseq
        %v3501 = vshrl.u32 %v3500, 7
        %v3502 = vsub.s32 0, %v3501
        %v3503 = vrot.slane %v3335, %v3502
        %v3504 = vlaneseq
        %v3505 = vshrl.u32 %v3504, 7
        %v3506 = vsub.s32 0, %v3505
        %v3507 = vrot.slane %v3336, %v3506
        %v3508 = vlaneseq
        %v3509 = vshrl.u32 %v3508, 7
        %v3510 = vsub.s32 0, %v3509
        %v3511 = vrot.slane %v3337, %v3510
        %v3512 = vlaneseq
        %v3513 = vshrl.u32 %v3512, 7
        %v3514 = vsub.s32 0, %v3513
        %v3515 = vrot.slane %v3338, %v3514
        %v3516 = vlaneseq
        %v3517 = vshrl.u32 %v3516, 7
        %v3518 = vsub.s32 0, %v3517
        %v3519 = vrot.slane %v3339, %v3518
        %v3520 = vlaneseq
        %v3521 = vshrl.u32 %v3520, 7
        %v3522 = vsub.s32 0, %v3521
        %v3523 = vrot.slane %v3340, %v3522
        %v3524 = vlaneseq
        %v3525 = vshrl.u32 %v3524, 7
        %v3526 = vsub.s32 0, %v3525
        %v3527 = vrot.slane %v3341, %v3526
        %v3528 = vlaneseq
        %v3529 = vshrl.u32 %v3528, 7
        %v3530 = vsub.s32 0, %v3529
        %v3531 = vrot.slane %v3342, %v3530
        %v3532 = vlaneseq
        %v3533 = vshrl.u32 %v3532, 7
        %v3534 = vsub.s32 0, %v3533
        %v3535 = vrot.slane %v3343, %v3534
        %v3536 = vlaneseq
        %v3537 = vshrl.u32 %v3536, 7
        %v3538 = vsub.s32 0, %v3537
        %v3539 = vrot.slane %v3344, %v3538
        %v3540 = vlaneseq
        %v3541 = vshrl.u32 %v3540, 7
        %v3542 = vsub.s32 0, %v3541
        %v3543 = vrot.slane %v3345, %v3542
        %v3544 = vlaneseq
        %v3545 = vshrl.u32 %v3544, 7
        %v3546 = vsub.s32 0, %v3545
        %v3547 = vrot.slane %v3346, %v3546
        %v3548 = vlaneseq
        %v3549 = vshrl.u32 %v3548, 7
        %v3550 = vsub.s32 0, %v3549
        %v3551 = vrot.slane %v3347, %v3550
        %v3552 = vlaneseq
        %v3553 = vshrl.u32 %v3552, 7
        %v3554 = vsub.s32 0, %v3553
        %v3555 = vrot.slane %v3348, %v3554
        %v3556 = vlaneseq
        %v3557 = vshrl.u32 %v3556, 7
        %v3558 = vsub.s32 0, %v3557
        %v3559 = vrot.slane %v3349, %v3558
        %v3560 = vlaneseq
        %v3561 = vshrl.u32 %v3560, 7
        %v3562 = vsub.s32 0, %v3561
        %v3563 = vrot.slane %v3350, %v3562
        %v3564 = vlaneseq
        %v3565 = vshrl.u32 %v3564, 7
        %v3566 = vsub.s32 0, %v3565
        %v3567 = vrot.slane %v3351, %v3566
        %v3568 = vlaneseq
        %v3569 = vshrl.u32 %v3568, 7
        %v3570 = vsub.s32 0, %v3569
        %v3571 = vrot.slane %v3352, %v3570
        %v3572 = vlaneseq
        %v3573 = vshrl.u32 %v3572, 7
        %v3574 = vsub.s32 0, %v3573
        %v3575 = vrot.slane %v3353, %v3574
        %v3576 = vlaneseq
        %v3577 = vshrl.u32 %v3576, 7
        %v3578 = vsub.s32 0, %v3577
        %v3579 = vrot.slane %v3354, %v3578
        %v3580 = vlaneseq
        %v3581 = vshrl.u32 %v3580, 7
        %v3582 = vsub.s32 0, %v3581
        %v3583 = vrot.slane %v3355, %v3582
        %v3584 = vlaneseq
        %v3585 = vshrl.u32 %v3584, 7
        %v3586 = vsub.s32 0, %v3585
        %v3587 = vrot.slane %v3356, %v3586
        %v3588 = vlaneseq
        %v3589 = vshrl.u32 %v3588, 7
        %v3590 = vsub.s32 0, %v3589
        %v3591 = vrot.slane %v3357, %v3590
        %v3592 = vlaneseq
        %v3593 = vshrl.u32 %v3592, 7
        %v3594 = vsub.s32 0, %v3593
        %v3595 = vrot.slane %v3358, %v3594
        %v3596 = vlaneseq
        %v3597 = vshrl.u32 %v3596, 7
        %v3598 = vsub.s32 0, %v3597
        %v3599 = vrot.slane %v3359, %v3598
        %v3600 = vlaneseq
        %v3601 = vshrl.u32 %v3600, 7
        %v3602 = vsub.s32 0, %v3601
        %v3603 = vrot.slane %v3360, %v3602
        %v3604 = vlaneseq
        %v3605 = vshrl.u32 %v3604, 7
        %v3606 = vsub.s32 0, %v3605
        %v3607 = vrot.slane %v3361, %v3606
        %v3608 = vlaneseq
        %v3609 = vshrl.u32 %v3608, 7
        %v3610 = vsub.s32 0, %v3609
        %v3611 = vrot.slane %v3362, %v3610
        %v3612 = vlaneseq
        %v3613 = vshrl.u32 %v3612, 7
        %v3614 = vsub.s32 0, %v3613
        %v3615 = vrot.slane %v3363, %v3614
        %v3616 = vlaneseq
        %v3617 = vshrl.u32 %v3616, 7
        %v3618 = vsub.s32 0, %v3617
        %v3619 = vrot.slane %v3364, %v3618
        %v3620 = vlaneseq
        %v3621 = vshrl.u32 %v3620, 7
        %v3622 = vsub.s32 0, %v3621
        %v3623 = vrot.slane %v3365, %v3622
        %v3624 = vlaneseq
        %v3625 = vshrl.u32 %v3624, 7
        %v3626 = vsub.s32 0, %v3625
        %v3627 = vrot.slane %v3366, %v3626
        %v3628 = vlaneseq
        %v3629 = vshrl.u32 %v3628, 7
        %v3630 = vsub.s32 0, %v3629
        %v3631 = vrot.slane %v3367, %v3630
        %v3632 = vlaneseq
        %v3633 = vshrl.u32 %v3632, 7
        %v3634 = vsub.s32 0, %v3633
        %v3635 = vrot.slane %v3368, %v3634
        %v3636 = vlaneseq
        %v3637 = vshrl.u32 %v3636, 7
        %v3638 = vsub.s32 0, %v3637
        %v3639 = vrot.slane %v3369, %v3638
        %v3640 = vlaneseq
        %v3641 = vshrl.u32 %v3640, 7
        %v3642 = vsub.s32 0, %v3641
        %v3643 = vrot.slane %v3370, %v3642
        %v3644 = vlaneseq
        %v3645 = vshrl.u32 %v3644, 7
        %v3646 = vsub.s32 0, %v3645
        %v3647 = vrot.slane %v3371, %v3646
        %v3648 = vlaneseq
        %v3649 = vshrl.u32 %v3648, 7
        %v3650 = vsub.s32 0, %v3649
        %v3651 = vrot.slane %v3372, %v3650
        %v3652 = vlaneseq
        %v3653 = vshrl.u32 %v3652, 7
        %v3654 = vsub.s32 0, %v3653
        %v3655 = vrot.slane %v3373, %v3654
        %v3656 = vlaneseq
        %v3657 = vshrl.u32 %v3656, 7
        %v3658 = vsub.s32 0, %v3657
        %v3659 = vrot.slane %v3374, %v3658
        %v3660 = vlaneseq
        %v3661 = vshrl.u32 %v3660, 7
        %v3662 = vsub.s32 0, %v3661
        %v3663 = vrot.slane %v3375, %v3662
        %v3664 = vlaneseq
        %v3665 = vshrl.u32 %v3664, 7
        %v3666 = vsub.s32 0, %v3665
        %v3667 = vrot.slane %v3376, %v3666
        %v3668 = vlaneseq
        %v3669 = vshrl.u32 %v3668, 7
        %v3670 = vsub.s32 0, %v3669
        %v3671 = vrot.slane %v3377, %v3670
        %v3672 = vlaneseq
        %v3673 = vshrl.u32 %v3672, 7
        %v3674 = vsub.s32 0, %v3673
        %v3675 = vrot.slane %v3378, %v3674
        %v3676 = vlaneseq
        %v3677 = vshrl.u32 %v3676, 7
        %v3678 = vsub.s32 0, %v3677
        %v3679 = vrot.slane %v3379, %v3678
        %v3680 = vlaneseq
        %v3681 = vshrl.u32 %v3680, 7
        %v3682 = vsub.s32 0, %v3681
        %v3683 = vrot.slane %v3380, %v3682
        %v3684 = vlaneseq
        %v3685 = vshrl.u32 %v3684, 7
        %v3686 = vsub.s32 0, %v3685
        %v3687 = vrot.slane %v3381, %v3686
        %v3688 = vlaneseq
        %v3689 = vshrl.u32 %v3688, 7
        %v3690 = vsub.s32 0, %v3689
        %v3691 = vrot.slane %v3382, %v3690
        %v3692 = vlaneseq
        %v3693 = vshrl.u32 %v3692, 7
        %v3694 = vsub.s32 0, %v3693
        %v3695 = vrot.slane %v3383, %v3694
        %v3696 = vlaneseq
        %v3697 = vshrl.u32 %v3696, 7
        %v3698 = vsub.s32 0, %v3697
        %v3699 = vrot.slane %v3384, %v3698
        %v3700 = vlaneseq
        %v3701 = vshrl.u32 %v3700, 7
        %v3702 = vsub.s32 0, %v3701
        %v3703 = vrot.slane %v3385, %v3702
        %v3704 = vlaneseq
        %v3705 = vshrl.u32 %v3704, 7
        %v3706 = vsub.s32 0, %v3705
        %v3707 = vrot.slane %v3386, %v3706
        %v3708 = vlaneseq
        %v3709 = vshrl.u32 %v3708, 7
        %v3710 = vsub.s32 0, %v3709
        %v3711 = vrot.slane %v3387, %v3710
        %v3712 = vlaneseq
        %v3713 = vshrl.u32 %v3712, 7
        %v3714 = vsub.s32 0, %v3713
        %v3715 = vrot.slane %v3388, %v3714
        %v3716 = vlaneseq
        %v3717 = vshrl.u32 %v3716, 7
        %v3718 = vsub.s32 0, %v3717
        %v3719 = vrot.slane %v3389, %v3718
        %v3720 = vlaneseq
        %v3721 = vshrl.u32 %v3720, 7
        %v3722 = vsub.s32 0, %v3721
        %v3723 = vrot.slane %v3390, %v3722
        %v3724 = vlaneseq
        %v3725 = vshrl.u32 %v3724, 7
        %v3726 = vsub.s32 0, %v3725
        %v3727 = vrot.slane %v3391, %v3726
        %v3728 = vlaneseq
        %v3729 = vshrl.u32 %v3728, 7
        %v3730 = vsub.s32 0, %v3729
        %v3731 = vrot.slane %v3392, %v3730
        %v3732 = vlaneseq
        %v3733 = vshrl.u32 %v3732, 7
        %v3734 = vsub.s32 0, %v3733
        %v3735 = vrot.slane %v3393, %v3734
        %v3736 = vlaneseq
        %v3737 = vshrl.u32 %v3736, 7
        %v3738 = vsub.s32 0, %v3737
        %v3739 = vrot.slane %v3394, %v3738
        %v3740 = vlaneseq
        %v3741 = vshrl.u32 %v3740, 7
        %v3742 = vsub.s32 0, %v3741
        %v3743 = vrot.slane %v3395, %v3742
        %vm3744 = vcmask 1041409
        %v3745 = vsel %vm3744, %v3495, %v3491
        %vm3746 = vcmask 1042434
        %v3747 = vsel %vm3746, %v3499, %v3745
        %vm3748 = vcmask 1043459
        %v3749 = vsel %vm3748, %v3503, %v3747
        %vm3750 = vcmask 1044484
        %v3751 = vsel %vm3750, %v3507, %v3749
        %vm3752 = vcmask 1045509
        %v3753 = vsel %vm3752, %v3511, %v3751
        %vm3754 = vcmask 1046534
        %v3755 = vsel %vm3754, %v3515, %v3753
        %vm3756 = vcmask 1047559
        %v3757 = vsel %vm3756, %v3519, %v3755
        %v3758 = vsel %vm3744, %v3527, %v3523
        %v3759 = vsel %vm3746, %v3531, %v3758
        %v3760 = vsel %vm3748, %v3535, %v3759
        %v3761 = vsel %vm3750, %v3539, %v3760
        %v3762 = vsel %vm3752, %v3543, %v3761
        %v3763 = vsel %vm3754, %v3547, %v3762
        %v3764 = vsel %vm3756, %v3551, %v3763
        %v3765 = vsel %vm3744, %v3559, %v3555
        %v3766 = vsel %vm3746, %v3563, %v3765
        %v3767 = vsel %vm3748, %v3567, %v3766
        %v3768 = vsel %vm3750, %v3571, %v3767
        %v3769 = vsel %vm3752, %v3575, %v3768
        %v3770 = vsel %vm3754, %v3579, %v3769
        %v3771 = vsel %vm3756, %v3583, %v3770
        %v3772 = vsel %vm3744, %v3591, %v3587
        %v3773 = vsel %vm3746, %v3595, %v3772
        %v3774 = vsel %vm3748, %v3599, %v3773
        %v3775 = vsel %vm3750, %v3603, %v3774
        %v3776 = vsel %vm3752, %v3607, %v3775
        %v3777 = vsel %vm3754, %v3611, %v3776
        %v3778 = vsel %vm3756, %v3615, %v3777
        %v3779 = vsel %vm3744, %v3623, %v3619
        %v3780 = vsel %vm3746, %v3627, %v3779
        %v3781 = vsel %vm3748, %v3631, %v3780
        %v3782 = vsel %vm3750, %v3635, %v3781
        %v3783 = vsel %vm3752, %v3639, %v3782
        %v3784 = vsel %vm3754, %v3643, %v3783
        %v3785 = vsel %vm3756, %v3647, %v3784
        %v3786 = vsel %vm3744, %v3655, %v3651
        %v3787 = vsel %vm3746, %v3659, %v3786
        %v3788 = vsel %vm3748, %v3663, %v3787
        %v3789 = vsel %vm3750, %v3667, %v3788
        %v3790 = vsel %vm3752, %v3671, %v3789
        %v3791 = vsel %vm3754, %v3675, %v3790
        %v3792 = vsel %vm3756, %v3679, %v3791
        %v3793 = vsel %vm3744, %v3687, %v3683
        %v3794 = vsel %vm3746, %v3691, %v3793
        %v3795 = vsel %vm3748, %v3695, %v3794
        %v3796 = vsel %vm3750, %v3699, %v3795
        %v3797 = vsel %vm3752, %v3703, %v3796
        %v3798 = vsel %vm3754, %v3707, %v3797
        %v3799 = vsel %vm3756, %v3711, %v3798
        %v3800 = vsel %vm3744, %v3719, %v3715
        %v3801 = vsel %vm3746, %v3723, %v3800
        %v3802 = vsel %vm3748, %v3727, %v3801
        %v3803 = vsel %vm3750, %v3731, %v3802
        %v3804 = vsel %vm3752, %v3735, %v3803
        %v3805 = vsel %vm3754, %v3739, %v3804
        %v3806 = vsel %vm3756, %v3743, %v3805
        %s3815 = scalar_lea.vmem [#allocation4], 16
        %3816 = vst.msk [vmem:[%s3815 + $0x1] sm:$0xff] %vm3396, %v3757
        %3817 = vst.msk [vmem:[%s3815 + $0x11] sm:$0xff] %vm3396, %v3764
        %3818 = vst.msk [vmem:[%s3815 + $0x21] sm:$0xff] %vm3396, %v3771
        %3819 = vst.msk [vmem:[%s3815 + $0x31] sm:$0xff] %vm3396, %v3778
        %3820 = vst.msk [vmem:[%s3815 + $0x41] sm:$0xff] %vm3396, %v3785
        %3821 = vst.msk [vmem:[%s3815 + $0x51] sm:$0xff] %vm3396, %v3792
        %3822 = vst.msk [vmem:[%s3815 + $0x61] sm:$0xff] %vm3396, %v3799
        %3823 = vst.msk [vmem:[%s3815 + $0x71] sm:$0xff] %vm3396, %v3806
        %v3824 = vld [vmem:[#allocation4] sm:$0xff]
        %v3825 = vld [vmem:[#allocation4 + $0x10] sm:$0xff]
        %v3826 = vld [vmem:[#allocation4 + $0x20] sm:$0xff]
        %v3827 = vld [vmem:[#allocation4 + $0x30] sm:$0xff]
        %v3828 = vld [vmem:[#allocation4 + $0x40] sm:$0xff]
        %v3829 = vld [vmem:[#allocation4 + $0x50] sm:$0xff]
        %v3830 = vld [vmem:[#allocation4 + $0x60] sm:$0xff]
        %v3831 = vld [vmem:[#allocation4 + $0x70] sm:$0xff]
        %3832 = vst.msk [vmem:[#allocation5] sm:$0xff] %vm3396, %v3824
        %3833 = vst.msk [vmem:[#allocation5 + $0x8] sm:$0xff] %vm3396, %v3825
        %3834 = vst.msk [vmem:[#allocation5 + $0x10] sm:$0xff] %vm3396, %v3826
        %3835 = vst.msk [vmem:[#allocation5 + $0x18] sm:$0xff] %vm3396, %v3827
        %3836 = vst.msk [vmem:[#allocation5 + $0x20] sm:$0xff] %vm3396, %v3828
        %3837 = vst.msk [vmem:[#allocation5 + $0x28] sm:$0xff] %vm3396, %v3829
        %3838 = vst.msk [vmem:[#allocation5 + $0x30] sm:$0xff] %vm3396, %v3830
        %3839 = vst.msk [vmem:[#allocation5 + $0x38] sm:$0xff] %vm3396, %v3831
        %v3840 = vld [vmem:[#allocation4 + $0x1] sm:$0xff]
        %v3841 = vld [vmem:[#allocation4 + $0x11] sm:$0xff]
        %v3842 = vld [vmem:[#allocation4 + $0x21] sm:$0xff]
        %v3843 = vld [vmem:[#allocation4 + $0x31] sm:$0xff]
        %v3844 = vld [vmem:[#allocation4 + $0x41] sm:$0xff]
        %v3845 = vld [vmem:[#allocation4 + $0x51] sm:$0xff]
        %v3846 = vld [vmem:[#allocation4 + $0x61] sm:$0xff]
        %v3847 = vld [vmem:[#allocation4 + $0x71] sm:$0xff]
        %3856 = vrot.lane.b32.xlu0 %v3840, 8
        %v3857 = vpop.permute.xlu0 %3856
        %3858 = vrot.lane.b32.xlu0 %v3841, 8
        %v3859 = vpop.permute.xlu0 %3858
        %3860 = vrot.lane.b32.xlu0 %v3842, 8
        %v3861 = vpop.permute.xlu0 %3860
        %3862 = vrot.lane.b32.xlu0 %v3843, 8
        %v3863 = vpop.permute.xlu0 %3862
        %3864 = vrot.lane.b32.xlu0 %v3844, 8
        %v3865 = vpop.permute.xlu0 %3864
        %3866 = vrot.lane.b32.xlu0 %v3845, 8
        %v3867 = vpop.permute.xlu0 %3866
        %3868 = vrot.lane.b32.xlu0 %v3846, 8
        %v3869 = vpop.permute.xlu0 %3868
        %3870 = vrot.lane.b32.xlu0 %v3847, 8
        %v3871 = vpop.permute.xlu0 %3870
        %vm3880 = vcmask 130112
        %3881 = vst.msk [vmem:[#allocation5] sm:$0xff] %vm3880, %v3857
        %3882 = vst.msk [vmem:[#allocation5 + $0x8] sm:$0xff] %vm3880, %v3859
        %3883 = vst.msk [vmem:[#allocation5 + $0x10] sm:$0xff] %vm3880, %v3861
        %3884 = vst.msk [vmem:[#allocation5 + $0x18] sm:$0xff] %vm3880, %v3863
        %3885 = vst.msk [vmem:[#allocation5 + $0x20] sm:$0xff] %vm3880, %v3865
        %3886 = vst.msk [vmem:[#allocation5 + $0x28] sm:$0xff] %vm3880, %v3867
        %3887 = vst.msk [vmem:[#allocation5 + $0x30] sm:$0xff] %vm3880, %v3869
        %3888 = vst.msk [vmem:[#allocation5 + $0x38] sm:$0xff] %vm3880, %v3871
        %v3889 = vld [vmem:[#allocation4 + $0x2] sm:$0xff]
        %v3890 = vld [vmem:[#allocation4 + $0x12] sm:$0xff]
        %v3891 = vld [vmem:[#allocation4 + $0x22] sm:$0xff]
        %v3892 = vld [vmem:[#allocation4 + $0x32] sm:$0xff]
        %v3893 = vld [vmem:[#allocation4 + $0x42] sm:$0xff]
        %v3894 = vld [vmem:[#allocation4 + $0x52] sm:$0xff]
        %v3895 = vld [vmem:[#allocation4 + $0x62] sm:$0xff]
        %v3896 = vld [vmem:[#allocation4 + $0x72] sm:$0xff]
        %3905 = vrot.lane.b32.xlu0 %v3889, 16
        %v3906 = vpop.permute.xlu0 %3905
        %3907 = vrot.lane.b32.xlu0 %v3890, 16
        %v3908 = vpop.permute.xlu0 %3907
        %3909 = vrot.lane.b32.xlu0 %v3891, 16
        %v3910 = vpop.permute.xlu0 %3909
        %3911 = vrot.lane.b32.xlu0 %v3892, 16
        %v3912 = vpop.permute.xlu0 %3911
        %3913 = vrot.lane.b32.xlu0 %v3893, 16
        %v3914 = vpop.permute.xlu0 %3913
        %3915 = vrot.lane.b32.xlu0 %v3894, 16
        %v3916 = vpop.permute.xlu0 %3915
        %3917 = vrot.lane.b32.xlu0 %v3895, 16
        %v3918 = vpop.permute.xlu0 %3917
        %3919 = vrot.lane.b32.xlu0 %v3896, 16
        %v3920 = vpop.permute.xlu0 %3919
        %vm3929 = vcmask 195712
        %3930 = vst.msk [vmem:[#allocation5] sm:$0xff] %vm3929, %v3906
        %3931 = vst.msk [vmem:[#allocation5 + $0x8] sm:$0xff] %vm3929, %v3908
        %3932 = vst.msk [vmem:[#allocation5 + $0x10] sm:$0xff] %vm3929, %v3910
        %3933 = vst.msk [vmem:[#allocation5 + $0x18] sm:$0xff] %vm3929, %v3912
        %3934 = vst.msk [vmem:[#allocation5 + $0x20] sm:$0xff] %vm3929, %v3914
        %3935 = vst.msk [vmem:[#allocation5 + $0x28] sm:$0xff] %vm3929, %v3916
        %3936 = vst.msk [vmem:[#allocation5 + $0x30] sm:$0xff] %vm3929, %v3918
        %3937 = vst.msk [vmem:[#allocation5 + $0x38] sm:$0xff] %vm3929, %v3920
        %v3938 = vld [vmem:[%s3815] sm:$0xff]
        %v3939 = vld [vmem:[%s3815 + $0x10] sm:$0xff]
        %v3940 = vld [vmem:[%s3815 + $0x20] sm:$0xff]
        %v3941 = vld [vmem:[%s3815 + $0x30] sm:$0xff]
        %v3942 = vld [vmem:[%s3815 + $0x40] sm:$0xff]
        %v3943 = vld [vmem:[%s3815 + $0x50] sm:$0xff]
        %v3944 = vld [vmem:[%s3815 + $0x60] sm:$0xff]
        %v3945 = vld [vmem:[%s3815 + $0x70] sm:$0xff]
        %3954 = vrot.lane.b32.xlu0 %v3938, 24
        %v3955 = vpop.permute.xlu0 %3954
        %3956 = vrot.lane.b32.xlu0 %v3939, 24
        %v3957 = vpop.permute.xlu0 %3956
        %3958 = vrot.lane.b32.xlu0 %v3940, 24
        %v3959 = vpop.permute.xlu0 %3958
        %3960 = vrot.lane.b32.xlu0 %v3941, 24
        %v3961 = vpop.permute.xlu0 %3960
        %3962 = vrot.lane.b32.xlu0 %v3942, 24
        %v3963 = vpop.permute.xlu0 %3962
        %3964 = vrot.lane.b32.xlu0 %v3943, 24
        %v3965 = vpop.permute.xlu0 %3964
        %3966 = vrot.lane.b32.xlu0 %v3944, 24
        %v3967 = vpop.permute.xlu0 %3966
        %3968 = vrot.lane.b32.xlu0 %v3945, 24
        %v3969 = vpop.permute.xlu0 %3968
        %vm3978 = vcmask 261312
        %3979 = vst.msk [vmem:[#allocation5] sm:$0xff] %vm3978, %v3955
        %3980 = vst.msk [vmem:[#allocation5 + $0x8] sm:$0xff] %vm3978, %v3957
        %3981 = vst.msk [vmem:[#allocation5 + $0x10] sm:$0xff] %vm3978, %v3959
        %3982 = vst.msk [vmem:[#allocation5 + $0x18] sm:$0xff] %vm3978, %v3961
        %3983 = vst.msk [vmem:[#allocation5 + $0x20] sm:$0xff] %vm3978, %v3963
        %3984 = vst.msk [vmem:[#allocation5 + $0x28] sm:$0xff] %vm3978, %v3965
        %3985 = vst.msk [vmem:[#allocation5 + $0x30] sm:$0xff] %vm3978, %v3967
        %3986 = vst.msk [vmem:[#allocation5 + $0x38] sm:$0xff] %vm3978, %v3969
        %v3987 = vld [vmem:[%s3815 + $0x1] sm:$0xff]
        %v3988 = vld [vmem:[%s3815 + $0x11] sm:$0xff]
        %v3989 = vld [vmem:[%s3815 + $0x21] sm:$0xff]
        %v3990 = vld [vmem:[%s3815 + $0x31] sm:$0xff]
        %v3991 = vld [vmem:[%s3815 + $0x41] sm:$0xff]
        %v3992 = vld [vmem:[%s3815 + $0x51] sm:$0xff]
        %v3993 = vld [vmem:[%s3815 + $0x61] sm:$0xff]
        %v3994 = vld [vmem:[%s3815 + $0x71] sm:$0xff]
        %4003 = vrot.lane.b32.xlu0 %v3987, 32
        %v4004 = vpop.permute.xlu0 %4003
        %4005 = vrot.lane.b32.xlu0 %v3988, 32
        %v4006 = vpop.permute.xlu0 %4005
        %4007 = vrot.lane.b32.xlu0 %v3989, 32
        %v4008 = vpop.permute.xlu0 %4007
        %4009 = vrot.lane.b32.xlu0 %v3990, 32
        %v4010 = vpop.permute.xlu0 %4009
        %4011 = vrot.lane.b32.xlu0 %v3991, 32
        %v4012 = vpop.permute.xlu0 %4011
        %4013 = vrot.lane.b32.xlu0 %v3992, 32
        %v4014 = vpop.permute.xlu0 %4013
        %4015 = vrot.lane.b32.xlu0 %v3993, 32
        %v4016 = vpop.permute.xlu0 %4015
        %4017 = vrot.lane.b32.xlu0 %v3994, 32
        %v4018 = vpop.permute.xlu0 %4017
        %vm4027 = vcmask 326912
        %4028 = vst.msk [vmem:[#allocation5] sm:$0xff] %vm4027, %v4004
        %4029 = vst.msk [vmem:[#allocation5 + $0x8] sm:$0xff] %vm4027, %v4006
        %4030 = vst.msk [vmem:[#allocation5 + $0x10] sm:$0xff] %vm4027, %v4008
        %4031 = vst.msk [vmem:[#allocation5 + $0x18] sm:$0xff] %vm4027, %v4010
        %4032 = vst.msk [vmem:[#allocation5 + $0x20] sm:$0xff] %vm4027, %v4012
        %4033 = vst.msk [vmem:[#allocation5 + $0x28] sm:$0xff] %vm4027, %v4014
        %4034 = vst.msk [vmem:[#allocation5 + $0x30] sm:$0xff] %vm4027, %v4016
        %4035 = vst.msk [vmem:[#allocation5 + $0x38] sm:$0xff] %vm4027, %v4018
        %v4036 = vld [vmem:[%s3815 + $0x2] sm:$0xff]
        %v4037 = vld [vmem:[%s3815 + $0x12] sm:$0xff]
        %v4038 = vld [vmem:[%s3815 + $0x22] sm:$0xff]
        %v4039 = vld [vmem:[%s3815 + $0x32] sm:$0xff]
        %v4040 = vld [vmem:[%s3815 + $0x42] sm:$0xff]
        %v4041 = vld [vmem:[%s3815 + $0x52] sm:$0xff]
        %v4042 = vld [vmem:[%s3815 + $0x62] sm:$0xff]
        %v4043 = vld [vmem:[%s3815 + $0x72] sm:$0xff]
        %4052 = vrot.lane.b32.xlu0 %v4036, 40
        %v4053 = vpop.permute.xlu0 %4052
        %4054 = vrot.lane.b32.xlu0 %v4037, 40
        %v4055 = vpop.permute.xlu0 %4054
        %4056 = vrot.lane.b32.xlu0 %v4038, 40
        %v4057 = vpop.permute.xlu0 %4056
        %4058 = vrot.lane.b32.xlu0 %v4039, 40
        %v4059 = vpop.permute.xlu0 %4058
        %4060 = vrot.lane.b32.xlu0 %v4040, 40
        %v4061 = vpop.permute.xlu0 %4060
        %4062 = vrot.lane.b32.xlu0 %v4041, 40
        %v4063 = vpop.permute.xlu0 %4062
        %4064 = vrot.lane.b32.xlu0 %v4042, 40
        %v4065 = vpop.permute.xlu0 %4064
        %4066 = vrot.lane.b32.xlu0 %v4043, 40
        %v4067 = vpop.permute.xlu0 %4066
        %vm4076 = vcmask 392512
        %4077 = vst.msk [vmem:[#allocation5] sm:$0xff] %vm4076, %v4053
        %4078 = vst.msk [vmem:[#allocation5 + $0x8] sm:$0xff] %vm4076, %v4055
        %4079 = vst.msk [vmem:[#allocation5 + $0x10] sm:$0xff] %vm4076, %v4057
        %4080 = vst.msk [vmem:[#allocation5 + $0x18] sm:$0xff] %vm4076, %v4059
        %4081 = vst.msk [vmem:[#allocation5 + $0x20] sm:$0xff] %vm4076, %v4061
        %4082 = vst.msk [vmem:[#allocation5 + $0x28] sm:$0xff] %vm4076, %v4063
        %4083 = vst.msk [vmem:[#allocation5 + $0x30] sm:$0xff] %vm4076, %v4065
        %4084 = vst.msk [vmem:[#allocation5 + $0x38] sm:$0xff] %vm4076, %v4067
        %s4085 = scalar_lea.vmem [#allocation4], 32
        %v4086 = vld [vmem:[%s4085] sm:$0xff]
        %v4087 = vld [vmem:[%s4085 + $0x10] sm:$0xff]
        %v4088 = vld [vmem:[%s4085 + $0x20] sm:$0xff]
        %v4089 = vld [vmem:[%s4085 + $0x30] sm:$0xff]
        %v4090 = vld [vmem:[%s4085 + $0x40] sm:$0xff]
        %v4091 = vld [vmem:[%s4085 + $0x50] sm:$0xff]
        %v4092 = vld [vmem:[%s4085 + $0x60] sm:$0xff]
        %v4093 = vld [vmem:[%s4085 + $0x70] sm:$0xff]
        %4102 = vrot.lane.b32.xlu0 %v4086, 48
        %v4103 = vpop.permute.xlu0 %4102
        %4104 = vrot.lane.b32.xlu0 %v4087, 48
        %v4105 = vpop.permute.xlu0 %4104
        %4106 = vrot.lane.b32.xlu0 %v4088, 48
        %v4107 = vpop.permute.xlu0 %4106
        %4108 = vrot.lane.b32.xlu0 %v4089, 48
        %v4109 = vpop.permute.xlu0 %4108
        %4110 = vrot.lane.b32.xlu0 %v4090, 48
        %v4111 = vpop.permute.xlu0 %4110
        %4112 = vrot.lane.b32.xlu0 %v4091, 48
        %v4113 = vpop.permute.xlu0 %4112
        %4114 = vrot.lane.b32.xlu0 %v4092, 48
        %v4115 = vpop.permute.xlu0 %4114
        %4116 = vrot.lane.b32.xlu0 %v4093, 48
        %v4117 = vpop.permute.xlu0 %4116
        %vm4126 = vcmask 458112
        %4127 = vst.msk [vmem:[#allocation5] sm:$0xff] %vm4126, %v4103
        %4128 = vst.msk [vmem:[#allocation5 + $0x8] sm:$0xff] %vm4126, %v4105
        %4129 = vst.msk [vmem:[#allocation5 + $0x10] sm:$0xff] %vm4126, %v4107
        %4130 = vst.msk [vmem:[#allocation5 + $0x18] sm:$0xff] %vm4126, %v4109
        %4131 = vst.msk [vmem:[#allocation5 + $0x20] sm:$0xff] %vm4126, %v4111
        %4132 = vst.msk [vmem:[#allocation5 + $0x28] sm:$0xff] %vm4126, %v4113
        %4133 = vst.msk [vmem:[#allocation5 + $0x30] sm:$0xff] %vm4126, %v4115
        %4134 = vst.msk [vmem:[#allocation5 + $0x38] sm:$0xff] %vm4126, %v4117
        %v4135 = vld [vmem:[%s4085 + $0x1] sm:$0xff]
        %v4136 = vld [vmem:[%s4085 + $0x11] sm:$0xff]
        %v4137 = vld [vmem:[%s4085 + $0x21] sm:$0xff]
        %v4138 = vld [vmem:[%s4085 + $0x31] sm:$0xff]
        %v4139 = vld [vmem:[%s4085 + $0x41] sm:$0xff]
        %v4140 = vld [vmem:[%s4085 + $0x51] sm:$0xff]
        %v4141 = vld [vmem:[%s4085 + $0x61] sm:$0xff]
        %v4142 = vld [vmem:[%s4085 + $0x71] sm:$0xff]
        %4151 = vrot.lane.b32.xlu0 %v4135, 56
        %v4152 = vpop.permute.xlu0 %4151
        %4153 = vrot.lane.b32.xlu0 %v4136, 56
        %v4154 = vpop.permute.xlu0 %4153
        %4155 = vrot.lane.b32.xlu0 %v4137, 56
        %v4156 = vpop.permute.xlu0 %4155
        %4157 = vrot.lane.b32.xlu0 %v4138, 56
        %v4158 = vpop.permute.xlu0 %4157
        %4159 = vrot.lane.b32.xlu0 %v4139, 56
        %v4160 = vpop.permute.xlu0 %4159
        %4161 = vrot.lane.b32.xlu0 %v4140, 56
        %v4162 = vpop.permute.xlu0 %4161
        %4163 = vrot.lane.b32.xlu0 %v4141, 56
        %v4164 = vpop.permute.xlu0 %4163
        %4165 = vrot.lane.b32.xlu0 %v4142, 56
        %v4166 = vpop.permute.xlu0 %4165
        %vm4175 = vcmask 523712
        %4176 = vst.msk [vmem:[#allocation5] sm:$0xff] %vm4175, %v4152
        %4177 = vst.msk [vmem:[#allocation5 + $0x8] sm:$0xff] %vm4175, %v4154
        %4178 = vst.msk [vmem:[#allocation5 + $0x10] sm:$0xff] %vm4175, %v4156
        %4179 = vst.msk [vmem:[#allocation5 + $0x18] sm:$0xff] %vm4175, %v4158
        %4180 = vst.msk [vmem:[#allocation5 + $0x20] sm:$0xff] %vm4175, %v4160
        %4181 = vst.msk [vmem:[#allocation5 + $0x28] sm:$0xff] %vm4175, %v4162
        %4182 = vst.msk [vmem:[#allocation5 + $0x30] sm:$0xff] %vm4175, %v4164
        %4183 = vst.msk [vmem:[#allocation5 + $0x38] sm:$0xff] %vm4175, %v4166
        %v4184 = vld [vmem:[%s4085 + $0x2] sm:$0xff]
        %v4185 = vld [vmem:[%s4085 + $0x12] sm:$0xff]
        %v4186 = vld [vmem:[%s4085 + $0x22] sm:$0xff]
        %v4187 = vld [vmem:[%s4085 + $0x32] sm:$0xff]
        %v4188 = vld [vmem:[%s4085 + $0x42] sm:$0xff]
        %v4189 = vld [vmem:[%s4085 + $0x52] sm:$0xff]
        %v4190 = vld [vmem:[%s4085 + $0x62] sm:$0xff]
        %v4191 = vld [vmem:[%s4085 + $0x72] sm:$0xff]
        %4200 = vrot.lane.b32.xlu0 %v4184, 64
        %v4201 = vpop.permute.xlu0 %4200
        %4202 = vrot.lane.b32.xlu0 %v4185, 64
        %v4203 = vpop.permute.xlu0 %4202
        %4204 = vrot.lane.b32.xlu0 %v4186, 64
        %v4205 = vpop.permute.xlu0 %4204
        %4206 = vrot.lane.b32.xlu0 %v4187, 64
        %v4207 = vpop.permute.xlu0 %4206
        %4208 = vrot.lane.b32.xlu0 %v4188, 64
        %v4209 = vpop.permute.xlu0 %4208
        %4210 = vrot.lane.b32.xlu0 %v4189, 64
        %v4211 = vpop.permute.xlu0 %4210
        %4212 = vrot.lane.b32.xlu0 %v4190, 64
        %v4213 = vpop.permute.xlu0 %4212
        %4214 = vrot.lane.b32.xlu0 %v4191, 64
        %v4215 = vpop.permute.xlu0 %4214
        %vm4224 = vcmask 589312
        %4225 = vst.msk [vmem:[#allocation5] sm:$0xff] %vm4224, %v4201
        %4226 = vst.msk [vmem:[#allocation5 + $0x8] sm:$0xff] %vm4224, %v4203
        %4227 = vst.msk [vmem:[#allocation5 + $0x10] sm:$0xff] %vm4224, %v4205
        %4228 = vst.msk [vmem:[#allocation5 + $0x18] sm:$0xff] %vm4224, %v4207
        %4229 = vst.msk [vmem:[#allocation5 + $0x20] sm:$0xff] %vm4224, %v4209
        %4230 = vst.msk [vmem:[#allocation5 + $0x28] sm:$0xff] %vm4224, %v4211
        %4231 = vst.msk [vmem:[#allocation5 + $0x30] sm:$0xff] %vm4224, %v4213
        %4232 = vst.msk [vmem:[#allocation5 + $0x38] sm:$0xff] %vm4224, %v4215
        %v4233 = vld [vmem:[#allocation5] sm:$0xff]
        %v4234 = vld [vmem:[#allocation5 + $0x8] sm:$0xff]
        %v4235 = vld [vmem:[#allocation5 + $0x10] sm:$0xff]
        %v4236 = vld [vmem:[#allocation5 + $0x18] sm:$0xff]
        %v4237 = vld [vmem:[#allocation5 + $0x20] sm:$0xff]
        %v4238 = vld [vmem:[#allocation5 + $0x28] sm:$0xff]
        %v4239 = vld [vmem:[#allocation5 + $0x30] sm:$0xff]
        %v4240 = vld [vmem:[#allocation5 + $0x38] sm:$0xff]
        %v4241 = vld [vmem:[%s3] sm:$0xff]
        %v4242 = vld [vmem:[%s3 + $0x8] sm:$0xff]
        %v4243 = vld [vmem:[%s3 + $0x10] sm:$0xff]
        %v4244 = vld [vmem:[%s3 + $0x18] sm:$0xff]
        %v4245 = vld [vmem:[%s3 + $0x20] sm:$0xff]
        %v4246 = vld [vmem:[%s3 + $0x28] sm:$0xff]
        %v4247 = vld [vmem:[%s3 + $0x30] sm:$0xff]
        %v4248 = vld [vmem:[%s3 + $0x38] sm:$0xff]
        %v4249 = vld [vmem:[%s3 + $0x40] sm:$0xff]
        %v4250 = vld [vmem:[%s4] sm:$0x1]
        %v4252 = vlaneseq
        %v4253 = vshrl.u32 %v4252, 7
        %v4254 = vsub.s32 0, %v4253
        %v4255 = vrot.slane %v4250, %v4254
        %vm4257 = vcmask 588800
        %v4259 = vsel %vm4257, %v4233, 0
        %v4262 = vsel %vm4257, %v4234, 0
        %v4265 = vsel %vm4257, %v4235, 0
        %v4268 = vsel %vm4257, %v4236, 0
        %v4271 = vsel %vm4257, %v4237, 0
        %v4274 = vsel %vm4257, %v4238, 0
        %v4277 = vsel %vm4257, %v4239, 0
        %v4280 = vsel %vm4257, %v4240, 0
        %4282 = vmatprep.subr.mxu0 0.0
        %4283 = vmatpush1.msra.mxu0 %v4241
        %4284 = vmatprep.subr.mxu0 0.0
        %4285 = vmatpush1.msra.mxu0 %v4242
        %4286 = vmatprep.subr.mxu0 0.0
        %4287 = vmatpush1.msra.mxu0 %v4243
        %4288 = vmatprep.subr.mxu0 0.0
        %4289 = vmatpush1.msra.mxu0 %v4244
        %4290 = vmatprep.subr.mxu0 0.0
        %4291 = vmatpush1.msra.mxu0 %v4245
        %4292 = vmatprep.subr.mxu0 0.0
        %4293 = vmatpush1.msra.mxu0 %v4246
        %4294 = vmatprep.subr.mxu0 0.0
        %4295 = vmatpush1.msra.mxu0 %v4247
        %4296 = vmatprep.subr.mxu0 0.0
        %4297 = vmatpush1.msra.mxu0 %v4248
        %4298 = vmatprep.subr.mxu0 0.0
        %4299 = vmatpush1.msra.mxu0 %v4249
        %4300 = vmatprep.subr.mxu0 0.0
        %4301 = vmatpush1.msra.mxu0 0.0
        %4302 = vmatprep.subr.mxu0 0.0
        %4303 = vmatpush1.msra.mxu0 0.0
        %4304 = vmatprep.subr.mxu0 0.0
        %4305 = vmatpush1.msra.mxu0 0.0
        %4306 = vmatprep.subr.mxu0 0.0
        %4307 = vmatpush1.msra.mxu0 0.0
        %4308 = vmatprep.subr.mxu0 0.0
        %4309 = vmatpush1.msra.mxu0 0.0
        %4310 = vmatprep.subr.mxu0 0.0
        %4311 = vmatpush1.msra.mxu0 0.0
        %4312 = vmatprep.subr.mxu0 0.0
        %4313 = vmatpush1.msra.mxu0 0.0
        %4314 = vmatprep.subr.mxu0 0.0
        %4315 = vmatpush1.msra.mxu0 0.0
        %4316 = vmatprep.subr.mxu0 0.0
        %4317 = vmatpush1.msra.mxu0 0.0
        %4318 = vmatprep.subr.mxu0 0.0
        %4319 = vmatpush1.msra.mxu0 0.0
        %4320 = vmatprep.subr.mxu0 0.0
        %4321 = vmatpush1.msra.mxu0 0.0
        %4322 = vmatprep.subr.mxu0 0.0
        %4323 = vmatpush1.msra.mxu0 0.0
        %4324 = vmatprep.subr.mxu0 0.0
        %4325 = vmatpush1.msra.mxu0 0.0
        %4326 = vmatprep.subr.mxu0 0.0
        %4327 = vmatpush1.msra.mxu0 0.0
        %4328 = vmatprep.subr.mxu0 0.0
        %4329 = vmatpush1.msra.mxu0 0.0
        %4330 = vmatprep.subr.mxu0 0.0
        %4331 = vmatpush1.msra.mxu0 0.0
        %4332 = vmatprep.subr.mxu0 0.0
        %4333 = vmatpush1.msra.mxu0 0.0
        %4334 = vmatprep.subr.mxu0 0.0
        %4335 = vmatpush1.msra.mxu0 0.0
        %4336 = vmatprep.subr.mxu0 0.0
        %4337 = vmatpush1.msra.mxu0 0.0
        %4338 = vmatprep.subr.mxu0 0.0
        %4339 = vmatpush1.msra.mxu0 0.0
        %4340 = vmatprep.subr.mxu0 0.0
        %4341 = vmatpush1.msra.mxu0 0.0
        %4342 = vmatprep.subr.mxu0 0.0
        %4343 = vmatpush1.msra.mxu0 0.0
        %4344 = vmatprep.subr.mxu0 0.0
        %4345 = vmatpush1.msra.mxu0 0.0
        %4346 = vmatprep.mubr.f32.mxu0 0.0
        %4347 = vmatmul.mubr.f32.gmra.mrb[0].mxu0 %v4259
        %v4348 = vpop.f32.mrb[0].mxu0
        %v4349 = vadd.f32 %v4255, %v4348
        %v4350 = vpop.f32.mrb[0].mxu0
        %4351 = vmatprep.mubr.f32.mxu0 0.0
        %4352 = vmatmul.mubr.f32.gmra.mrb[0].mxu0 %v4262
        %v4353 = vpop.f32.mrb[0].mxu0
        %v4354 = vadd.f32 %v4255, %v4353
        %v4355 = vpop.f32.mrb[0].mxu0
        %4356 = vmatprep.mubr.f32.mxu0 0.0
        %4357 = vmatmul.mubr.f32.gmra.mrb[0].mxu0 %v4265
        %v4358 = vpop.f32.mrb[0].mxu0
        %v4359 = vadd.f32 %v4255, %v4358
        %v4360 = vpop.f32.mrb[0].mxu0
        %4361 = vmatprep.mubr.f32.mxu0 0.0
        %4362 = vmatmul.mubr.f32.gmra.mrb[0].mxu0 %v4268
        %v4363 = vpop.f32.mrb[0].mxu0
        %v4364 = vadd.f32 %v4255, %v4363
        %v4365 = vpop.f32.mrb[0].mxu0
        %4366 = vmatprep.mubr.f32.mxu0 0.0
        %4367 = vmatmul.mubr.f32.gmra.mrb[0].mxu0 %v4271
        %v4368 = vpop.f32.mrb[0].mxu0
        %v4369 = vadd.f32 %v4255, %v4368
        %v4370 = vpop.f32.mrb[0].mxu0
        %4371 = vmatprep.mubr.f32.mxu0 0.0
        %4372 = vmatmul.mubr.f32.gmra.mrb[0].mxu0 %v4274
        %v4373 = vpop.f32.mrb[0].mxu0
        %v4374 = vadd.f32 %v4255, %v4373
        %v4375 = vpop.f32.mrb[0].mxu0
        %4376 = vmatprep.mubr.f32.mxu0 0.0
        %4377 = vmatmul.mubr.f32.gmra.mrb[0].mxu0 %v4277
        %v4378 = vpop.f32.mrb[0].mxu0
        %v4379 = vadd.f32 %v4255, %v4378
        %v4380 = vpop.f32.mrb[0].mxu0
        %4381 = vmatprep.mubr.f32.mxu0 0.0
        %4382 = vmatmul.mubr.f32.gmra.mrb[0].mxu0 %v4280
        %v4383 = vpop.f32.mrb[0].mxu0
        %v4384 = vadd.f32 %v4255, %v4383
        %v4385 = vpop.f32.mrb[0].mxu0
        %4386 = vdwg.mxu0
        %v4387 = vmax.f32 %v4349, 0.0
        %v4388 = vmax.f32 %v4354, 0.0
        %v4389 = vmax.f32 %v4359, 0.0
        %v4390 = vmax.f32 %v4364, 0.0
        %v4391 = vmax.f32 %v4369, 0.0
        %v4392 = vmax.f32 %v4374, 0.0
        %v4393 = vmax.f32 %v4379, 0.0
        %v4394 = vmax.f32 %v4384, 0.0
        %v4395 = vmax.f32 %v4387, %v4388
        %v4396 = vmax.f32 %v4389, %v4390
        %v4397 = vmax.f32 %v4391, %v4392
        %v4398 = vmax.f32 %v4393, %v4394
        %v4403 = vcombine.high %v4395, %v4395
        %v4405 = vunpack.c.l.s4 1983009808
        %v4406 = vunpack.c.0.s8 %v4405
        %v4407 = vlaneseq
        %v4408 = vshrl.u32 %v4407, 7
        %v4409 = vsub.s32 %v4406, %v4408
        %v4410 = vrot.slane %v4395, %v4409
        %v4412 = vunpack.c.l.s4 1983009808
        %v4413 = vunpack.c.0.s8 %v4412
        %v4414 = vlaneseq
        %v4415 = vshrl.u32 %v4414, 7
        %v4416 = vsub.s32 %v4413, %v4415
        %v4417 = vrot.slane %v4403, %v4416
        %v4418 = vcombine.high %v4410, %v4410
        %v4419 = vcombine.high %v4417, %v4417
        %v4420 = vcombine.high %v4396, %v4396
        %v4422 = vunpack.c.l.s4 1983009808
        %v4423 = vunpack.c.0.s8 %v4422
        %v4424 = vlaneseq
        %v4425 = vshrl.u32 %v4424, 7
        %v4426 = vsub.s32 %v4423, %v4425
        %v4427 = vrot.slane %v4396, %v4426
        %v4429 = vunpack.c.l.s4 1983009808
        %v4430 = vunpack.c.0.s8 %v4429
        %v4431 = vlaneseq
        %v4432 = vshrl.u32 %v4431, 7
        %v4433 = vsub.s32 %v4430, %v4432
        %v4434 = vrot.slane %v4420, %v4433
        %v4435 = vcombine.high %v4427, %v4427
        %v4436 = vcombine.high %v4434, %v4434
        %v4437 = vcombine.high %v4397, %v4397
        %v4439 = vunpack.c.l.s4 1983009808
        %v4440 = vunpack.c.0.s8 %v4439
        %v4441 = vlaneseq
        %v4442 = vshrl.u32 %v4441, 7
        %v4443 = vsub.s32 %v4440, %v4442
        %v4444 = vrot.slane %v4397, %v4443
        %v4446 = vunpack.c.l.s4 1983009808
        %v4447 = vunpack.c.0.s8 %v4446
        %v4448 = vlaneseq
        %v4449 = vshrl.u32 %v4448, 7
        %v4450 = vsub.s32 %v4447, %v4449
        %v4451 = vrot.slane %v4437, %v4450
        %v4452 = vcombine.high %v4444, %v4444
        %v4453 = vcombine.high %v4451, %v4451
        %v4454 = vcombine.high %v4398, %v4398
        %v4456 = vunpack.c.l.s4 1983009808
        %v4457 = vunpack.c.0.s8 %v4456
        %v4458 = vlaneseq
        %v4459 = vshrl.u32 %v4458, 7
        %v4460 = vsub.s32 %v4457, %v4459
        %v4461 = vrot.slane %v4398, %v4460
        %v4463 = vunpack.c.l.s4 1983009808
        %v4464 = vunpack.c.0.s8 %v4463
        %v4465 = vlaneseq
        %v4466 = vshrl.u32 %v4465, 7
        %v4467 = vsub.s32 %v4464, %v4466
        %v4468 = vrot.slane %v4454, %v4467
        %v4469 = vcombine.high %v4461, %v4461
        %v4470 = vcombine.high %v4468, %v4468
        %v4487 = vrot.slane %v4410, 7
        %v4488 = vrot.slane %v4487, 2
        %v4489 = vrot.slane %v4418, 7
        %v4490 = vrot.slane %v4489, 2
        %v4491 = vrot.slane %v4417, 7
        %v4492 = vrot.slane %v4491, 2
        %v4493 = vrot.slane %v4419, 7
        %v4494 = vrot.slane %v4493, 2
        %v4495 = vrot.slane %v4427, 7
        %v4496 = vrot.slane %v4495, 2
        %v4497 = vrot.slane %v4435, 7
        %v4498 = vrot.slane %v4497, 2
        %v4499 = vrot.slane %v4434, 7
        %v4500 = vrot.slane %v4499, 2
        %v4501 = vrot.slane %v4436, 7
        %v4502 = vrot.slane %v4501, 2
        %v4503 = vrot.slane %v4444, 7
        %v4504 = vrot.slane %v4503, 2
        %v4505 = vrot.slane %v4452, 7
        %v4506 = vrot.slane %v4505, 2
        %v4507 = vrot.slane %v4451, 7
        %v4508 = vrot.slane %v4507, 2
        %v4509 = vrot.slane %v4453, 7
        %v4510 = vrot.slane %v4509, 2
        %v4511 = vrot.slane %v4461, 7
        %v4512 = vrot.slane %v4511, 2
        %v4513 = vrot.slane %v4469, 7
        %v4514 = vrot.slane %v4513, 2
        %v4515 = vrot.slane %v4468, 7
        %v4516 = vrot.slane %v4515, 2
        %v4517 = vrot.slane %v4470, 7
        %v4518 = vrot.slane %v4517, 2
        %v4535 = vmax.f32 %v4410, %v4488
        %v4536 = vmax.f32 %v4418, %v4490
        %v4537 = vmax.f32 %v4417, %v4492
        %v4538 = vmax.f32 %v4419, %v4494
        %v4539 = vmax.f32 %v4427, %v4496
        %v4540 = vmax.f32 %v4435, %v4498
        %v4541 = vmax.f32 %v4434, %v4500
        %v4542 = vmax.f32 %v4436, %v4502
        %v4543 = vmax.f32 %v4444, %v4504
        %v4544 = vmax.f32 %v4452, %v4506
        %v4545 = vmax.f32 %v4451, %v4508
        %v4546 = vmax.f32 %v4453, %v4510
        %v4547 = vmax.f32 %v4461, %v4512
        %v4548 = vmax.f32 %v4469, %v4514
        %v4549 = vmax.f32 %v4468, %v4516
        %v4550 = vmax.f32 %v4470, %v4518
        %v4551 = vlaneseq
        %vm4552 = vcmp.ge.s32.totalorder %v4551, 0
        %vm4553 = vcmp.lt.s32.totalorder %v4551, 16
        %vm4554 = vmand %vm4552, %vm4553
        %4555 = vst.msk [vmem:[#allocation6] sm:$0x1] %vm4554, %v4535
        %v4558 = vunpack.c.l.s4 1966171168
        %v4559 = vunpack.c.0.s8 %v4558
        %v4560 = vlaneseq
        %v4561 = vshrl.u32 %v4560, 7
        %v4562 = vsub.s32 %v4559, %v4561
        %v4563 = vrot.slane %v4536, %v4562
        %4564 = vrot.lane.b32.xlu0 %v4563, 16
        %v4565 = vpop.permute.xlu0 %4564
        %vm4567 = vcmp.ge.s32.totalorder %v4551, 16
        %vm4568 = vcmp.lt.s32.totalorder %v4551, 32
        %vm4569 = vmand %vm4567, %vm4568
        %4570 = vst.msk [vmem:[#allocation6] sm:$0x1] %vm4569, %v4565
        %v4573 = vunpack.c.l.s4 1966171168
        %v4574 = vunpack.c.0.s8 %v4573
        %v4575 = vlaneseq
        %v4576 = vshrl.u32 %v4575, 7
        %v4577 = vsub.s32 %v4574, %v4576
        %v4578 = vrot.slane %v4537, %v4577
        %4579 = vrot.lane.b32.xlu0 %v4578, 32
        %v4580 = vpop.permute.xlu0 %4579
        %vm4582 = vcmp.ge.s32.totalorder %v4551, 32
        %vm4583 = vcmp.lt.s32.totalorder %v4551, 48
        %vm4584 = vmand %vm4582, %vm4583
        %4585 = vst.msk [vmem:[#allocation6] sm:$0x1] %vm4584, %v4580
        %v4588 = vunpack.c.l.s4 1966171168
        %v4589 = vunpack.c.0.s8 %v4588
        %v4590 = vlaneseq
        %v4591 = vshrl.u32 %v4590, 7
        %v4592 = vsub.s32 %v4589, %v4591
        %v4593 = vrot.slane %v4538, %v4592
        %4594 = vrot.lane.b32.xlu0 %v4593, 48
        %v4595 = vpop.permute.xlu0 %4594
        %vm4597 = vcmp.ge.s32.totalorder %v4551, 48
        %vm4598 = vcmp.lt.s32.totalorder %v4551, 64
        %vm4599 = vmand %vm4597, %vm4598
        %4600 = vst.msk [vmem:[#allocation6] sm:$0x1] %vm4599, %v4595
        %v4603 = vunpack.c.l.s4 1966171168
        %v4604 = vunpack.c.0.s8 %v4603
        %v4605 = vlaneseq
        %v4606 = vshrl.u32 %v4605, 7
        %v4607 = vsub.s32 %v4604, %v4606
        %v4608 = vrot.slane %v4539, %v4607
        %4609 = vrot.lane.b32.xlu0 %v4608, 64
        %v4610 = vpop.permute.xlu0 %4609
        %vm4612 = vcmp.ge.s32.totalorder %v4551, 64
        %vm4613 = vcmp.lt.s32.totalorder %v4551, 80
        %vm4614 = vmand %vm4612, %vm4613
        %4615 = vst.msk [vmem:[#allocation6] sm:$0x1] %vm4614, %v4610
        %v4618 = vunpack.c.l.s4 1966171168
        %v4619 = vunpack.c.0.s8 %v4618
        %v4620 = vlaneseq
        %v4621 = vshrl.u32 %v4620, 7
        %v4622 = vsub.s32 %v4619, %v4621
        %v4623 = vrot.slane %v4540, %v4622
        %4624 = vrot.lane.b32.xlu0 %v4623, 80
        %v4625 = vpop.permute.xlu0 %4624
        %vm4627 = vcmp.ge.s32.totalorder %v4551, 80
        %vm4628 = vcmp.lt.s32.totalorder %v4551, 96
        %vm4629 = vmand %vm4627, %vm4628
        %4630 = vst.msk [vmem:[#allocation6] sm:$0x1] %vm4629, %v4625
        %v4633 = vunpack.c.l.s4 1966171168
        %v4634 = vunpack.c.0.s8 %v4633
        %v4635 = vlaneseq
        %v4636 = vshrl.u32 %v4635, 7
        %v4637 = vsub.s32 %v4634, %v4636
        %v4638 = vrot.slane %v4541, %v4637
        %4639 = vrot.lane.b32.xlu0 %v4638, 96
        %v4640 = vpop.permute.xlu0 %4639
        %vm4642 = vcmp.ge.s32.totalorder %v4551, 96
        %vm4643 = vcmp.lt.s32.totalorder %v4551, 112
        %vm4644 = vmand %vm4642, %vm4643
        %4645 = vst.msk [vmem:[#allocation6] sm:$0x1] %vm4644, %v4640
        %v4648 = vunpack.c.l.s4 1966171168
        %v4649 = vunpack.c.0.s8 %v4648
        %v4650 = vlaneseq
        %v4651 = vshrl.u32 %v4650, 7
        %v4652 = vsub.s32 %v4649, %v4651
        %v4653 = vrot.slane %v4542, %v4652
        %4654 = vrot.lane.b32.xlu0 %v4653, 112
        %v4655 = vpop.permute.xlu0 %4654
        %vm4657 = vcmp.ge.s32.totalorder %v4551, 112
        %vm4658 = vcmp.lt.s32.totalorder %v4551, 128
        %vm4659 = vmand %vm4657, %vm4658
        %4660 = vst.msk [vmem:[#allocation6] sm:$0x1] %vm4659, %v4655
        %4661 = vst.msk [vmem:[#allocation6 + $0x1] sm:$0x1] %vm4554, %v4543
        %v4664 = vunpack.c.l.s4 1966171168
        %v4665 = vunpack.c.0.s8 %v4664
        %v4666 = vlaneseq
        %v4667 = vshrl.u32 %v4666, 7
        %v4668 = vsub.s32 %v4665, %v4667
        %v4669 = vrot.slane %v4544, %v4668
        %4670 = vrot.lane.b32.xlu0 %v4669, 16
        %v4671 = vpop.permute.xlu0 %4670
        %4673 = vst.msk [vmem:[#allocation6 + $0x1] sm:$0x1] %vm4569, %v4671
        %v4676 = vunpack.c.l.s4 1966171168
        %v4677 = vunpack.c.0.s8 %v4676
        %v4678 = vlaneseq
        %v4679 = vshrl.u32 %v4678, 7
        %v4680 = vsub.s32 %v4677, %v4679
        %v4681 = vrot.slane %v4545, %v4680
        %4682 = vrot.lane.b32.xlu0 %v4681, 32
        %v4683 = vpop.permute.xlu0 %4682
        %4685 = vst.msk [vmem:[#allocation6 + $0x1] sm:$0x1] %vm4584, %v4683
        %v4688 = vunpack.c.l.s4 1966171168
        %v4689 = vunpack.c.0.s8 %v4688
        %v4690 = vlaneseq
        %v4691 = vshrl.u32 %v4690, 7
        %v4692 = vsub.s32 %v4689, %v4691
        %v4693 = vrot.slane %v4546, %v4692
        %4694 = vrot.lane.b32.xlu0 %v4693, 48
        %v4695 = vpop.permute.xlu0 %4694
        %4697 = vst.msk [vmem:[#allocation6 + $0x1] sm:$0x1] %vm4599, %v4695
        %v4700 = vunpack.c.l.s4 1966171168
        %v4701 = vunpack.c.0.s8 %v4700
        %v4702 = vlaneseq
        %v4703 = vshrl.u32 %v4702, 7
        %v4704 = vsub.s32 %v4701, %v4703
        %v4705 = vrot.slane %v4547, %v4704
        %4706 = vrot.lane.b32.xlu0 %v4705, 64
        %v4707 = vpop.permute.xlu0 %4706
        %4709 = vst.msk [vmem:[#allocation6 + $0x1] sm:$0x1] %vm4614, %v4707
        %v4712 = vunpack.c.l.s4 1966171168
        %v4713 = vunpack.c.0.s8 %v4712
        %v4714 = vlaneseq
        %v4715 = vshrl.u32 %v4714, 7
        %v4716 = vsub.s32 %v4713, %v4715
        %v4717 = vrot.slane %v4548, %v4716
        %4718 = vrot.lane.b32.xlu0 %v4717, 80
        %v4719 = vpop.permute.xlu0 %4718
        %4721 = vst.msk [vmem:[#allocation6 + $0x1] sm:$0x1] %vm4629, %v4719
        %v4724 = vunpack.c.l.s4 1966171168
        %v4725 = vunpack.c.0.s8 %v4724
        %v4726 = vlaneseq
        %v4727 = vshrl.u32 %v4726, 7
        %v4728 = vsub.s32 %v4725, %v4727
        %v4729 = vrot.slane %v4549, %v4728
        %4730 = vrot.lane.b32.xlu0 %v4729, 96
        %v4731 = vpop.permute.xlu0 %4730
        %4733 = vst.msk [vmem:[#allocation6 + $0x1] sm:$0x1] %vm4644, %v4731
        %v4736 = vunpack.c.l.s4 1966171168
        %v4737 = vunpack.c.0.s8 %v4736
        %v4738 = vlaneseq
        %v4739 = vshrl.u32 %v4738, 7
        %v4740 = vsub.s32 %v4737, %v4739
        %v4741 = vrot.slane %v4550, %v4740
        %4742 = vrot.lane.b32.xlu0 %v4741, 112
        %v4743 = vpop.permute.xlu0 %4742
        %4745 = vst.msk [vmem:[#allocation6 + $0x1] sm:$0x1] %vm4659, %v4743
        %v4746 = vld [vmem:[#allocation6] sm:$0x3]
        %v4747 = vld [vmem:[%s5] sm:$0xff]
        %v4748 = vld [vmem:[%s5 + $0x8] sm:$0xff]
        %v4749 = vld [vmem:[%s5 + $0x10] sm:$0xff]
        %v4750 = vld [vmem:[%s5 + $0x18] sm:$0xff]
        %v4751 = vld [vmem:[%s5 + $0x20] sm:$0xff]
        %v4752 = vld [vmem:[%s5 + $0x28] sm:$0xff]
        %v4753 = vld [vmem:[%s5 + $0x30] sm:$0xff]
        %v4754 = vld [vmem:[%s5 + $0x38] sm:$0xff]
        %v4755 = vld [vmem:[%s5 + $0x40] sm:$0xff]
        %v4756 = vld [vmem:[%s5 + $0x48] sm:$0xff]
        %v4757 = vld [vmem:[%s5 + $0x50] sm:$0xff]
        %v4758 = vld [vmem:[%s5 + $0x58] sm:$0xff]
        %v4759 = vld [vmem:[%s5 + $0x60] sm:$0xff]
        %v4760 = vld [vmem:[%s5 + $0x68] sm:$0xff]
        %v4761 = vld [vmem:[%s5 + $0x70] sm:$0xff]
        %v4762 = vld [vmem:[%s5 + $0x78] sm:$0xff]
        %v4763 = vld [vmem:[%s5 + $0x80] sm:$0xff]
        %v4764 = vld [vmem:[%s5 + $0x88] sm:$0xff]
        %v4765 = vld [vmem:[%s5 + $0x90] sm:$0xff]
        %v4766 = vld [vmem:[%s5 + $0x98] sm:$0xff]
        %v4767 = vld [vmem:[%s5 + $0xa0] sm:$0xff]
        %v4768 = vld [vmem:[%s5 + $0xa8] sm:$0xff]
        %v4769 = vld [vmem:[%s5 + $0xb0] sm:$0xff]
        %v4770 = vld [vmem:[%s5 + $0xb8] sm:$0xff]
        %v4771 = vld [vmem:[%s5 + $0xc0] sm:$0xff]
        %v4772 = vld [vmem:[%s5 + $0xc8] sm:$0xff]
        %v4773 = vld [vmem:[%s5 + $0xd0] sm:$0xff]
        %v4774 = vld [vmem:[%s5 + $0xd8] sm:$0xff]
        %v4775 = vld [vmem:[%s5 + $0xe0] sm:$0xff]
        %v4776 = vld [vmem:[%s5 + $0xe8] sm:$0xff]
        %v4777 = vld [vmem:[%s5 + $0xf0] sm:$0xff]
        %v4778 = vld [vmem:[%s5 + $0xf8] sm:$0xff]
        %v4779 = vld [vmem:[%s6] sm:$0x1]
        %v4781 = vlaneseq
        %v4782 = vshrl.u32 %v4781, 7
        %v4783 = vsub.s32 0, %v4782
        %v4784 = vrot.slane %v4746, %v4783
        %v4785 = vlaneseq
        %v4786 = vshrl.u32 %v4785, 7
        %v4787 = vsub.s32 1, %v4786
        %v4788 = vrot.slane %v4746, %v4787
        %4791 = vmatprep.subr.mxu0 0.0
        %4792 = vmatpush1.msra.mxu0 %v4747
        %4793 = vmatprep.subr.mxu0 0.0
        %4794 = vmatpush1.msra.mxu0 %v4748
        %4795 = vmatprep.subr.mxu0 0.0
        %4796 = vmatpush1.msra.mxu0 %v4749
        %4797 = vmatprep.subr.mxu0 0.0
        %4798 = vmatpush1.msra.mxu0 %v4750
        %4799 = vmatprep.subr.mxu0 0.0
        %4800 = vmatpush1.msra.mxu0 %v4751
        %4801 = vmatprep.subr.mxu0 0.0
        %4802 = vmatpush1.msra.mxu0 %v4752
        %4803 = vmatprep.subr.mxu0 0.0
        %4804 = vmatpush1.msra.mxu0 %v4753
        %4805 = vmatprep.subr.mxu0 0.0
        %4806 = vmatpush1.msra.mxu0 %v4754
        %4807 = vmatprep.subr.mxu0 0.0
        %4808 = vmatpush1.msra.mxu0 %v4755
        %4809 = vmatprep.subr.mxu0 0.0
        %4810 = vmatpush1.msra.mxu0 %v4756
        %4811 = vmatprep.subr.mxu0 0.0
        %4812 = vmatpush1.msra.mxu0 %v4757
        %4813 = vmatprep.subr.mxu0 0.0
        %4814 = vmatpush1.msra.mxu0 %v4758
        %4815 = vmatprep.subr.mxu0 0.0
        %4816 = vmatpush1.msra.mxu0 %v4759
        %4817 = vmatprep.subr.mxu0 0.0
        %4818 = vmatpush1.msra.mxu0 %v4760
        %4819 = vmatprep.subr.mxu0 0.0
        %4820 = vmatpush1.msra.mxu0 %v4761
        %4821 = vmatprep.subr.mxu0 0.0
        %4822 = vmatpush1.msra.mxu0 %v4762
        %4823 = vmatprep.subr.mxu0 0.0
        %4824 = vmatpush1.msra.mxu0 %v4763
        %4825 = vmatprep.subr.mxu0 0.0
        %4826 = vmatpush1.msra.mxu0 %v4764
        %4827 = vmatprep.subr.mxu0 0.0
        %4828 = vmatpush1.msra.mxu0 %v4765
        %4829 = vmatprep.subr.mxu0 0.0
        %4830 = vmatpush1.msra.mxu0 %v4766
        %4831 = vmatprep.subr.mxu0 0.0
        %4832 = vmatpush1.msra.mxu0 %v4767
        %4833 = vmatprep.subr.mxu0 0.0
        %4834 = vmatpush1.msra.mxu0 %v4768
        %4835 = vmatprep.subr.mxu0 0.0
        %4836 = vmatpush1.msra.mxu0 %v4769
        %4837 = vmatprep.subr.mxu0 0.0
        %4838 = vmatpush1.msra.mxu0 %v4770
        %4839 = vmatprep.subr.mxu0 0.0
        %4840 = vmatpush1.msra.mxu0 %v4771
        %4841 = vmatprep.subr.mxu0 0.0
        %4842 = vmatpush1.msra.mxu0 %v4772
        %4843 = vmatprep.subr.mxu0 0.0
        %4844 = vmatpush1.msra.mxu0 %v4773
        %4845 = vmatprep.subr.mxu0 0.0
        %4846 = vmatpush1.msra.mxu0 %v4774
        %4847 = vmatprep.subr.mxu0 0.0
        %4848 = vmatpush1.msra.mxu0 %v4775
        %4849 = vmatprep.subr.mxu0 0.0
        %4850 = vmatpush1.msra.mxu0 %v4776
        %4851 = vmatprep.subr.mxu0 0.0
        %4852 = vmatpush1.msra.mxu0 %v4777
        %4853 = vmatprep.subr.mxu0 0.0
        %4854 = vmatpush1.msra.mxu0 %v4778
        %4855 = vmatprep.mubr.f32.mxu0 %v4788
        %4856 = vmatmul.mubr.f32.gmra.mrb[0].mxu0 %v4784
        %v4857 = vpop.f32.mrb[0].mxu0
        %v4858 = vadd.f32 %v4779, %v4857
        %v4859 = vpop.f32.mrb[0].mxu0
        %4860 = vdwg.mxu0
        %v4861 = vmax.f32 %v4858, 0.0
        %v4862 = vld [vmem:[%s7] sm:$0xff]
        %v4863 = vld [vmem:[%s7 + $0x8] sm:$0xff]
        %v4864 = vld [vmem:[%s7 + $0x10] sm:$0xff]
        %v4865 = vld [vmem:[%s7 + $0x18] sm:$0xff]
        %v4866 = vld [vmem:[%s8] sm:$0x1]
        %vm4867 = vcmask 261120
        %v4869 = vsel %vm4867, %v4861, 0
        %4871 = vmatprep.subr.mxu0 0.0
        %4872 = vmatpush1.msra.mxu0 %v4862
        %4873 = vmatprep.subr.mxu0 0.0
        %4874 = vmatpush1.msra.mxu0 %v4863
        %4875 = vmatprep.subr.mxu0 0.0
        %4876 = vmatpush1.msra.mxu0 %v4864
        %4877 = vmatprep.subr.mxu0 0.0
        %4878 = vmatpush1.msra.mxu0 %v4865
        %4879 = vmatprep.subr.mxu0 0.0
        %4880 = vmatpush1.msra.mxu0 0.0
        %4881 = vmatprep.subr.mxu0 0.0
        %4882 = vmatpush1.msra.mxu0 0.0
        %4883 = vmatprep.subr.mxu0 0.0
        %4884 = vmatpush1.msra.mxu0 0.0
        %4885 = vmatprep.subr.mxu0 0.0
        %4886 = vmatpush1.msra.mxu0 0.0
        %4887 = vmatprep.subr.mxu0 0.0
        %4888 = vmatpush1.msra.mxu0 0.0
        %4889 = vmatprep.subr.mxu0 0.0
        %4890 = vmatpush1.msra.mxu0 0.0
        %4891 = vmatprep.subr.mxu0 0.0
        %4892 = vmatpush1.msra.mxu0 0.0
        %4893 = vmatprep.subr.mxu0 0.0
        %4894 = vmatpush1.msra.mxu0 0.0
        %4895 = vmatprep.subr.mxu0 0.0
        %4896 = vmatpush1.msra.mxu0 0.0
        %4897 = vmatprep.subr.mxu0 0.0
        %4898 = vmatpush1.msra.mxu0 0.0
        %4899 = vmatprep.subr.mxu0 0.0
        %4900 = vmatpush1.msra.mxu0 0.0
        %4901 = vmatprep.subr.mxu0 0.0
        %4902 = vmatpush1.msra.mxu0 0.0
        %4903 = vmatprep.subr.mxu0 0.0
        %4904 = vmatpush1.msra.mxu0 0.0
        %4905 = vmatprep.subr.mxu0 0.0
        %4906 = vmatpush1.msra.mxu0 0.0
        %4907 = vmatprep.subr.mxu0 0.0
        %4908 = vmatpush1.msra.mxu0 0.0
        %4909 = vmatprep.subr.mxu0 0.0
        %4910 = vmatpush1.msra.mxu0 0.0
        %4911 = vmatprep.subr.mxu0 0.0
        %4912 = vmatpush1.msra.mxu0 0.0
        %4913 = vmatprep.subr.mxu0 0.0
        %4914 = vmatpush1.msra.mxu0 0.0
        %4915 = vmatprep.subr.mxu0 0.0
        %4916 = vmatpush1.msra.mxu0 0.0
        %4917 = vmatprep.subr.mxu0 0.0
        %4918 = vmatpush1.msra.mxu0 0.0
        %4919 = vmatprep.subr.mxu0 0.0
        %4920 = vmatpush1.msra.mxu0 0.0
        %4921 = vmatprep.subr.mxu0 0.0
        %4922 = vmatpush1.msra.mxu0 0.0
        %4923 = vmatprep.subr.mxu0 0.0
        %4924 = vmatpush1.msra.mxu0 0.0
        %4925 = vmatprep.subr.mxu0 0.0
        %4926 = vmatpush1.msra.mxu0 0.0
        %4927 = vmatprep.subr.mxu0 0.0
        %4928 = vmatpush1.msra.mxu0 0.0
        %4929 = vmatprep.subr.mxu0 0.0
        %4930 = vmatpush1.msra.mxu0 0.0
        %4931 = vmatprep.subr.mxu0 0.0
        %4932 = vmatpush1.msra.mxu0 0.0
        %4933 = vmatprep.subr.mxu0 0.0
        %4934 = vmatpush1.msra.mxu0 0.0
        %4935 = vmatprep.mubr.f32.mxu0 0.0
        %4936 = vmatmul.mubr.f32.gmra.mrb[0].mxu0 %v4869
        %v4937 = vpop.f32.mrb[0].mxu0
        %v4938 = vadd.f32 %v4866, %v4937
        %v4939 = vpop.f32.mrb[0].mxu0
        %4940 = vdwg.mxu0
        %vm4941 = vcmask 73728
        %4942 = vst.msk [vmem:[%s324] sm:$0x1] %vm4941, %v4938
        %s4943 = sand.u32 %s225, 1
        %s4944 = scalar_lea.sflag [#allocation8], %s4943
        %s4945 = sand.u32 %s225, 1
        %s4946 = scalar_lea.vmem [#allocation7], %s4945
        // Predicated region
        $region57: #{tpu_custom_call.1} parent=55 // pred_check
          %p4947 = pneg %p235
        $region58: #{tpu_custom_call.1} parent=55 // pred_check_branch
          %4949 = sbr.rel (%p4947) target = $region60
        $region59: #{tpu_custom_call.1} parent=55 // pred_region
          %s4951 = ssub.s32 16, 16
          %4952 = vsyncadd %s4944, %s4951
          %s4953 = smul.addr %s23, 16
          %s4954 = scalar_lea.hbm %s9, %s4953
          %s4956 = sshll.u32 %s4946, 4
          %s4957 = int_to_ptr.vmem [resolvable:$true] %s4956
          %4959 = dma.vmem_to_hbm [thread:$0]  %s4957, 16, %s4954, %s4944
        $region60: #{tpu_custom_call.1} parent=55 // pred_fallthru
          _
      $region56: #{tpu_custom_call.1} parent=5 // pred_fallthru
        _
      %p4960 = scmp.le.s32.totalorder 2, %s18
      // Predicated region
      $region61: #{tpu_custom_call.1} parent=5 // pred_check
        %p4961 = pneg %p4960
      $region62: #{tpu_custom_call.1} parent=5 // pred_check_branch
        %4963 = sbr.rel (%p4961) target = $region64
      $region63: #{tpu_custom_call.1} parent=5 // pred_region
        %s4964 = ssub.s32 %s18, 2
        // Predicated region
        $region65: #{tpu_custom_call.1} parent=63 // pred_check
          %p4965 = pneg %p241
        $region66: #{tpu_custom_call.1} parent=63 // pred_check_branch
          %4967 = sbr.rel (%p4965) target = $region68
        $region67: #{tpu_custom_call.1} parent=63 // pred_region
          %s4968 = sand.u32 %s226, 1
          %s4969 = scalar_lea.sflag [#allocation8], %s4968
          %s4970 = sand.u32 %s226, 1
          %s4971 = scalar_lea.vmem [#allocation7], %s4970
          %4972 = dma.done %s4969, 16
        $region68: #{tpu_custom_call.1} parent=63 // pred_fallthru
          _
      $region64: #{tpu_custom_call.1} parent=5 // pred_fallthru
        _
    $region6: #{tpu_custom_call.1} parent=1 // loop_footer
      %s22 = sadd.s32 1, %s18
    $region7: #{tpu_custom_call.1} parent=1 // loop_footer_branch
      %17 = sbr.rel target = $region3
    $region8: #{tpu_custom_call.1} parent=1 // loop_exit
      _
    %4973 = vsyncpa [#allocation8], 1
    %s4974 = scalar_lea.sflag [#allocation8], 1
    %4975 = vsyncpa %s4974, 1

</llo_original>
